<compile_context>
chip_gen: v5e
topology: v5e:2x2
jax: 0.10.0
libtpu: 0.0.40
codegen_flags: <defaults>
</compile_context>

<pallas_src>
import functools

import jax
import jax.numpy as jnp
from jax.experimental import pallas as pl
from jax.experimental.pallas import tpu as pltpu


def _gated_attn_kernel(x_ref, wab_ref, bab_ref, wc_ref, bc_ref, out_ref, *,
                       D, n_classes, compute_dtype, act_dtype):
    # Per-tile cast of x to the MXU dtype: avoids a separate HBM cast pass.
    x = x_ref[...].astype(compute_dtype)                 # (tile_n, L)
    # Fused gate projection: one (L, 2D) matmul, f32 accumulation on the MXU.
    ab = jnp.dot(x, wab_ref[...], preferred_element_type=jnp.float32)
    ab = (ab + bab_ref[...]).astype(act_dtype)           # f32 bias, act dtype
    a = jnp.tanh(ab[:, :D])                              # attention_a (EUP)
    b = jax.nn.sigmoid(ab[:, D:])                        # attention_b (EUP)
    gated = (a * b).astype(compute_dtype)                # gate, cast for MXU
    # attention_c at full 128-lane MXU width (zero-padded Wc), f32 accumulate.
    out = jnp.dot(gated, wc_ref[...], preferred_element_type=jnp.float32)
    out = out + bc_ref[...]
    # Store only the real n_classes columns (narrow, un-padded output array).
    out_ref[...] = out[:, :n_classes].astype(out_ref.dtype)


def prepare_attn_params(wa, ba, wb, bb, wc, bc, *, compute_dtype=jnp.bfloat16):
    """One-time weight preparation (hoisted out of the per-forward path).

    Weights are stored pre-transposed vs. PyTorch nn.Linear: wa, wb are [L, D]
    and wc is [D, n_classes], so the kernel does row-major x @ W matmuls.
    """
    L, D = wa.shape
    if D % 128 != 0:
        raise ValueError(
            f"D={D} must be a multiple of 128 (CLAM uses 256/384) so the fused "
            "a|b split lands on vreg lane boundaries.")
    n_classes = wc.shape[1]
    # Fuse the two gate projections into a single (L, 2D) matmul.
    wab = jnp.concatenate([wa, wb], axis=1).astype(compute_dtype)      # (L, 2D)
    bab = jnp.concatenate([ba, bb], axis=0).reshape(1, 2 * D).astype(jnp.float32)
    # Pad n_classes up to a full 128-lane MXU width for the second matmul; the
    # kernel only stores the first n_classes columns.
    nc_pad = max(128, pl.cdiv(n_classes, 128) * 128)
    wc_p = jnp.zeros((D, nc_pad), compute_dtype).at[:, :n_classes].set(
        wc.astype(compute_dtype))
    bc_p = jnp.zeros((1, nc_pad), jnp.float32).at[:, :n_classes].set(
        bc.reshape(1, n_classes).astype(jnp.float32))
    return dict(wab=wab, bab=bab, wc_p=wc_p, bc_p=bc_p, L=L, D=D,
                n_classes=n_classes, nc_pad=nc_pad, compute_dtype=compute_dtype)


def attn_net_gated(x, params, *, tile_n_max=1024, min_grid_steps=4,
                   act_dtype=None, vmem_limit_bytes=32 * 1024 * 1024):
    """Returns (A, x) matching Attn_Net_Gated.forward (dropout=False)."""
    N, L = x.shape
    assert L == params["L"], (L, params["L"])
    D = params["D"]
    n_classes = params["n_classes"]
    nc_pad = params["nc_pad"]
    compute_dtype = params["compute_dtype"]
    if act_dtype is None:
        # bf16 activations ~halve EUP/VPU time on v6e/v7x.
        # On v5e (no bf16 EUP/VPU) pass act_dtype=jnp.float32.
        act_dtype = compute_dtype

    def _round_up(a, b):
        return ((a + b - 1) // b) * b

    # --- tile sizing ---------------------------------------------------------
    # Keep >= min_grid_steps grid iterations (v7x 2-TC sharding + DMA/compute
    # pipelining), rows a multiple of 8 (sublane), and the double-buffered x
    # tiles inside roughly half the VMEM budget (weights/output take the rest).
    tile_n = min(int(tile_n_max), _round_up(pl.cdiv(N, min_grid_steps), 8))
    x_row_bytes = L * x.dtype.itemsize
    vmem_cap = ((vmem_limit_bytes // 2) // (2 * x_row_bytes)) // 8 * 8
    tile_n = max(8, min(tile_n, max(8, vmem_cap)))
    grid = (pl.cdiv(N, tile_n),)      # partial trailing block handled by Pallas

    out_dtype = x.dtype
    bytes_accessed = (N * L * x.dtype.itemsize                     # x stream
                      + params["wab"].size * params["wab"].dtype.itemsize
                      + params["bab"].size * 4
                      + params["wc_p"].size * params["wc_p"].dtype.itemsize
                      + params["bc_p"].size * 4
                      + N * n_classes * jnp.dtype(out_dtype).itemsize)
    cost = pl.CostEstimate(
        flops=2 * N * L * (2 * D) + 2 * N * D * nc_pad,
        transcendentals=2 * N * D,
        bytes_accessed=int(bytes_accessed))

    kernel = functools.partial(_gated_attn_kernel, D=D, n_classes=n_classes,
                               compute_dtype=compute_dtype, act_dtype=act_dtype)

    invariant = pl.Buffered(1)   # weights are grid-invariant: single-buffer

    A = pl.pallas_call(
        kernel,
        out_shape=jax.ShapeDtypeStruct((N, n_classes), out_dtype),
        grid_spec=pltpu.PrefetchScalarGridSpec(
            num_scalar_prefetch=0,
            grid=grid,
            in_specs=[
                pl.BlockSpec((tile_n, L), lambda i: (i, 0)),            # x tile
                pl.BlockSpec((L, 2 * D), lambda i: (0, 0),
                             pipeline_mode=invariant),                  # Wa|Wb
                pl.BlockSpec((1, 2 * D), lambda i: (0, 0),
                             pipeline_mode=invariant),                  # ba|bb
                pl.BlockSpec((D, nc_pad), lambda i: (0, 0),
                             pipeline_mode=invariant),                  # Wc pad
                pl.BlockSpec((1, nc_pad), lambda i: (0, 0),
                             pipeline_mode=invariant),                  # bc pad
            ],
            out_specs=pl.BlockSpec((tile_n, n_classes), lambda i: (i, 0)),
        ),
        compiler_params=pltpu.CompilerParams(
            dimension_semantics=("parallel",),      # v7x: shard across 2 TCs
            vmem_limit_bytes=vmem_limit_bytes),
        cost_estimate=cost,
    )(x, params["wab"], params["bab"], params["wc_p"], params["bc_p"])

    return A, x


def _init_params(key, L, D, n_classes, dtype=jnp.float32):
    """Deterministic synthetic parameter init (shapes match nn.Linear)."""
    k1, k2, k3, k4, k5, k6 = jax.random.split(key, 6)
    # Stored already transposed to [in, out] for row-major x @ W.
    wa = jax.random.normal(k1, (L, D), dtype) * (1.0 / jnp.sqrt(L))
    ba = jax.random.normal(k2, (D,), dtype) * 0.01
    wb = jax.random.normal(k3, (L, D), dtype) * (1.0 / jnp.sqrt(L))
    bb = jax.random.normal(k4, (D,), dtype) * 0.01
    wc = jax.random.normal(k5, (D, n_classes), dtype) * (1.0 / jnp.sqrt(D))
    bc = jax.random.normal(k6, (n_classes,), dtype) * 0.01
    return wa, ba, wb, bb, wc, bc


if __name__ == "__main__":
    # Module defaults L=1024, D=256, n_classes=1; small bag of N instances.
    # N deliberately NOT a multiple of the tile so the partial-trailing-block
    # path (no explicit padding) is exercised.
    N, L, D, n_classes = 333, 1024, 256, 1
    key = jax.random.PRNGKey(0)
    kx, kp = jax.random.split(key)
    x = jax.random.normal(kx, (N, L), jnp.float32)
    wa, ba, wb, bb, wc, bc = _init_params(kp, L, D, n_classes)

    # Pure-JAX reference of the hot path.
    a_ref = jnp.tanh(x @ wa + ba)
    b_ref = jax.nn.sigmoid(x @ wb + bb)
    A_ref = (a_ref * b_ref) @ wc + bc

    # f32 compute path: tight numerical check.
    params32 = prepare_attn_params(wa, ba, wb, bb, wc, bc,
                                   compute_dtype=jnp.float32)
    A32, x_out = attn_net_gated(x, params32)
    A32 = jax.block_until_ready(A32)
    x_out = jax.block_until_ready(x_out)
    assert A32.shape == (N, n_classes)
    assert x_out.shape == (N, L)
    assert jnp.allclose(A32, A_ref, atol=1e-4, rtol=1e-4)

    # bf16 production path (defaults target v6e/v7x; on v5e pass
    # act_dtype=jnp.float32 to keep transcendentals in f32).
    params16 = prepare_attn_params(wa, ba, wb, bb, wc, bc)
    A16, _ = attn_net_gated(x, params16)
    A16 = jax.block_until_ready(A16)
    assert A16.shape == (N, n_classes)
    assert jnp.allclose(A16, A_ref, atol=5e-2, rtol=5e-2)

    print("KERNEL_OK")
</pallas_src>

<mosaic_0001>
module attributes {stable_mosaic.version = 11 : i64} {
  func.func @_gated_attn_kernel(%arg0: i32, %arg1: memref<88x1024xf32, #tpu.memory_space<vmem>>, %arg2: memref<1024x512xf32, #tpu.memory_space<vmem>>, %arg3: memref<1x512xf32, #tpu.memory_space<vmem>>, %arg4: memref<256x128xf32, #tpu.memory_space<vmem>>, %arg5: memref<1x128xf32, #tpu.memory_space<vmem>>, %arg6: memref<88x1xf32, #tpu.memory_space<vmem>>) attributes {dimension_semantics = [#tpu.dimension_semantics<parallel>], iteration_bounds = array<i64: 4>, scalar_prefetch = 0 : i64, scratch_operands = 0 : i64, tpu.core_type = #tpu.core_type<tc>, window_params = [{transform_indices = @transform_0, window_bounds = array<i64: 88, 1024>}, {pipeline_mode = #tpu.pipeline_mode<synchronous>, transform_indices = @transform_1, window_bounds = array<i64: 1024, 512>}, {pipeline_mode = #tpu.pipeline_mode<synchronous>, transform_indices = @transform_2, window_bounds = array<i64: 1, 512>}, {pipeline_mode = #tpu.pipeline_mode<synchronous>, transform_indices = @transform_3, window_bounds = array<i64: 256, 128>}, {pipeline_mode = #tpu.pipeline_mode<synchronous>, transform_indices = @transform_4, window_bounds = array<i64: 1, 128>}, {transform_indices = @transform_5, window_bounds = array<i64: 88, 1>}]} {
    %c0 = arith.constant 0 : index
    %c0_0 = arith.constant 0 : index
    %0 = vector.load %arg1[%c0, %c0_0] : memref<88x1024xf32, #tpu.memory_space<vmem>>, vector<88x1024xf32>
    %c0_1 = arith.constant 0 : index
    %c0_2 = arith.constant 0 : index
    %1 = vector.load %arg2[%c0_1, %c0_2] : memref<1024x512xf32, #tpu.memory_space<vmem>>, vector<1024x512xf32>
    %cst = arith.constant dense<0.000000e+00> : vector<88x512xf32>
    %2 = tpu.matmul %0, %1, %cst {dimension_numbers = #tpu.dot_dimension_numbers<[1], [0], [0], [1], [0, 0, 1, 1], [], []>} : vector<88x1024xf32>, vector<1024x512xf32>, vector<88x512xf32> -> vector<88x512xf32>
    %c0_3 = arith.constant 0 : index
    %c0_4 = arith.constant 0 : index
    %3 = vector.load %arg3[%c0_3, %c0_4] : memref<1x512xf32, #tpu.memory_space<vmem>>, vector<1x512xf32>
    %4 = vector.broadcast %3 : vector<1x512xf32> to vector<88x512xf32>
    %5 = arith.addf %2, %4 : vector<88x512xf32>
    %6 = vector.extract_strided_slice %5 {offsets = [0, 0], sizes = [88, 256], strides = [1, 1]} : vector<88x512xf32> to vector<88x256xf32>
    %7 = math.tanh %6 : vector<88x256xf32>
    %8 = vector.extract_strided_slice %5 {offsets = [0, 256], sizes = [88, 256], strides = [1, 1]} : vector<88x512xf32> to vector<88x256xf32>
    %9 = arith.negf %8 : vector<88x256xf32>
    %10 = math.exp %9 : vector<88x256xf32>
    %cst_5 = arith.constant 1.000000e+00 : f32
    %11 = vector.broadcast %cst_5 : f32 to vector<88x256xf32>
    %12 = arith.addf %11, %10 : vector<88x256xf32>
    %13 = arith.divf %11, %12 : vector<88x256xf32>
    %14 = arith.mulf %7, %13 : vector<88x256xf32>
    %c0_6 = arith.constant 0 : index
    %c0_7 = arith.constant 0 : index
    %15 = vector.load %arg4[%c0_6, %c0_7] : memref<256x128xf32, #tpu.memory_space<vmem>>, vector<256x128xf32>
    %cst_8 = arith.constant dense<0.000000e+00> : vector<88x128xf32>
    %16 = tpu.matmul %14, %15, %cst_8 {dimension_numbers = #tpu.dot_dimension_numbers<[1], [0], [0], [1], [0, 0, 1, 1], [], []>} : vector<88x256xf32>, vector<256x128xf32>, vector<88x128xf32> -> vector<88x128xf32>
    %c0_9 = arith.constant 0 : index
    %c0_10 = arith.constant 0 : index
    %17 = vector.load %arg5[%c0_9, %c0_10] : memref<1x128xf32, #tpu.memory_space<vmem>>, vector<1x128xf32>
    %18 = vector.broadcast %17 : vector<1x128xf32> to vector<88x128xf32>
    %19 = arith.addf %16, %18 : vector<88x128xf32>
    %20 = vector.extract_strided_slice %19 {offsets = [0, 0], sizes = [88, 1], strides = [1, 1]} : vector<88x128xf32> to vector<88x1xf32>
    %c0_11 = arith.constant 0 : index
    %c0_12 = arith.constant 0 : index
    %21 = vector.load %arg6[%c0_11, %c0_12] : memref<88x1xf32, #tpu.memory_space<vmem>>, vector<88x1xf32>
    tpu.vector_store %arg6[%c0_11, %c0_12], %20 {strides = array<i32>} : memref<88x1xf32, #tpu.memory_space<vmem>>, vector<88x1xf32>,
    return
  }
  func.func @transform_0(%arg0: i32) -> (i32, i32) {
    %c0_i32 = arith.constant 0 : i32
    %c0_i32_0 = arith.constant 0 : i32
    return %arg0, %c0_i32 : i32, i32
  }
  func.func @transform_1(%arg0: i32) -> (i32, i32) {
    %c0_i32 = arith.constant 0 : i32
    %c0_i32_0 = arith.constant 0 : i32
    %c0_i32_1 = arith.constant 0 : i32
    return %c0_i32, %c0_i32_0 : i32, i32
  }
  func.func @transform_2(%arg0: i32) -> (i32, i32) {
    %c0_i32 = arith.constant 0 : i32
    %c0_i32_0 = arith.constant 0 : i32
    %c0_i32_1 = arith.constant 0 : i32
    return %c0_i32, %c0_i32_0 : i32, i32
  }
  func.func @transform_3(%arg0: i32) -> (i32, i32) {
    %c0_i32 = arith.constant 0 : i32
    %c0_i32_0 = arith.constant 0 : i32
    %c0_i32_1 = arith.constant 0 : i32
    return %c0_i32, %c0_i32_0 : i32, i32
  }
  func.func @transform_4(%arg0: i32) -> (i32, i32) {
    %c0_i32 = arith.constant 0 : i32
    %c0_i32_0 = arith.constant 0 : i32
    %c0_i32_1 = arith.constant 0 : i32
    return %c0_i32, %c0_i32_0 : i32, i32
  }
  func.func @transform_5(%arg0: i32) -> (i32, i32) {
    %c0_i32 = arith.constant 0 : i32
    %c0_i32_0 = arith.constant 0 : i32
    return %arg0, %c0_i32 : i32, i32
  }
}

</mosaic_0001>

<llo_original>
// kernel: tpu_custom_call.1
$region0: #{tpu_custom_call.1}
  #allocation0 [shape = 'u32[]', space=smem, size = 0x4, offset = 0x4, fixed_abs, tag = 'smem constant byte address 0x4 - core index']
  #allocation1 [shape = 'u32[72,128]{1,0:T(1,128)}', space=vmem, size = 0x9000, scoped, tag = 'internal scratch']
  %s0 = inlined_call_operand.hbm [shape: f32[333,1024], index: 0, kind: input, shape index: {}]
  %s1 = inlined_call_operand.hbm [shape: f32[1024,512], index: 1, kind: input, shape index: {}]
  %s2 = inlined_call_operand.hbm [shape: f32[1,512], index: 2, kind: input, shape index: {}]
  %s3 = inlined_call_operand.hbm [shape: f32[256,128], index: 3, kind: input, shape index: {}]
  %s4 = inlined_call_operand.hbm [shape: f32[1,128], index: 4, kind: input, shape index: {}]
  %s5 = inlined_call_operand.vmem [shape: f32[333,1], index: 5, kind: output, shape index: {}]
  %s6 = sld [smem:[#allocation0]]
  $region121: #{tpu_custom_call.1} parent=0
    _
  %s8 = ssub.s32 1, %s6
  %s9 = scalar_select 0, %s8, %s6
  $region1: #{tpu_custom_call.1} parent=0
    #allocation2 [shape = 'u8[720896]{0}', space=vmem, size = 0xb0000, scoped, tag = 'input window, operand 0']
    #allocation3 [shape = 's32[2]{0}', space=sflag, size = 0x8, scoped, tag = 'scoped memory for tpu_custom_call.1']
    #allocation4 [shape = 'u8[2097152]{0}', space=vmem, size = 0x200000, scoped, tag = 'input window, operand 1, single buffered']
    #allocation5 [shape = 's32[1]{0}', space=sflag, size = 0x4, scoped, tag = 'scoped memory for tpu_custom_call.1']
    #allocation6 [shape = 'u8[2048]{0}', space=vmem, size = 0x800, scoped, tag = 'input window, operand 2, single buffered']
    #allocation7 [shape = 'u8[131072]{0}', space=vmem, size = 0x20000, scoped, tag = 'input window, operand 3, single buffered']
    #allocation8 [shape = 's32[1]{0}', space=sflag, size = 0x4, scoped, tag = 'scoped memory for tpu_custom_call.1']
    #allocation9 [shape = 'u8[512]{0}', space=vmem, size = 0x400, scoped, tag = 'input window, operand 4, single buffered']
    #allocation10 [shape = 'u8[90112]{0}', space=vmem, size = 0x16000, scoped, tag = 'output window, operand 0']
    %10 = vsyncpa [#allocation3], 0
    %s11 = scalar_lea.sflag [#allocation3], 1
    %12 = vsyncpa %s11, 0
    %13 = vsyncpa [#allocation5], 0
    %14 = vsyncpa [#allocation8], 0
    loop: start=0, step=1, limit=6
    $region2: #{tpu_custom_call.1} parent=1 // loop_pre_header
      _
    $region3: #{tpu_custom_call.1} parent=1 // loop_header
      %s16 = sphi 0, %s20
      %p17 = scmp.ge.s32.totalorder %s16, 6
      %s26 = sphi 0, %s28
      %s29 = sphi 0, %s26
      %s30 = sphi 0, %s29
      %s46 = sphi 0, %s30
      %s50 = sphi 0, %s50
      %s52 = sphi 0, %s50
      %s53 = sphi 0, %s52
      %s67 = sphi 0, %s53
      %s71 = sphi 0, %s71
      %s73 = sphi 0, %s71
      %s74 = sphi 0, %s73
      %s88 = sphi 0, %s74
      %s92 = sphi 0, %s92
      %s94 = sphi 0, %s92
      %s95 = sphi 0, %s94
      %s109 = sphi 0, %s95
      %s113 = sphi 0, %s113
      %s115 = sphi 0, %s113
      %s116 = sphi 0, %s115
      %s130 = sphi 0, %s116
      %s136 = sphi 0, %s138
      %s139 = sphi 0, %s136
      %s140 = sphi 0, %s139
      %s156 = sphi 0, %s140
    $region4: #{tpu_custom_call.1} parent=1 // loop_header_branch
      %19 = sbr.rel (%p17) target = $region8
    $region5: #{tpu_custom_call.1} parent=1 // loop_body
      %s21 = ssub.s32 %s16, 1
      %s22 = ssub.s32 %s16, 2
      %s23 = sadd.s32 %s16, 1
      %s24 = ssub.s32 %s16, %s23
      %p25 = scmp.eq.s32.totalorder %s24, 0
      %s27 = sadd.s32 %s26, 1
      %s28 = scalar_select %p25, %s26, %s27
      %p31 = pneg %p25
      %p32 = scmp.eq.s32.totalorder %s16, 3
      %p33 = por %p31, %p32
      %p34 = scmp.ne.s32.totalorder %s26, %s29
      %p35 = scmp.eq.s32.totalorder %s16, 0
      %p36 = por %p34, %p35
      %p37 = scmp.ne.s32.totalorder %s26, %s29
      %p38 = scmp.eq.s32.totalorder %s21, 3
      %p39 = por %p37, %p38
      %p40 = scmp.ne.s32.totalorder %s29, %s30
      %p41 = scmp.eq.s32.totalorder %s21, 0
      %p42 = por %p40, %p41
      %p43 = scmp.ne.s32.totalorder %s29, %s30
      %p44 = scmp.eq.s32.totalorder %s22, 3
      %p45 = por %p43, %p44
      %p47 = scmp.ne.s32.totalorder %s30, %s46
      %p48 = scmp.eq.s32.totalorder %s22, 0
      %p49 = por %p47, %p48
      %s51 = sadd.s32 %s50, 1
      %p54 = scmp.eq.s32.totalorder %s16, 3
      %p55 = scmp.ne.s32.totalorder %s50, %s52
      %p56 = scmp.eq.s32.totalorder %s16, 0
      %p57 = por %p55, %p56
      %p58 = scmp.ne.s32.totalorder %s50, %s52
      %p59 = scmp.eq.s32.totalorder %s21, 3
      %p60 = por %p58, %p59
      %p61 = scmp.ne.s32.totalorder %s52, %s53
      %p62 = scmp.eq.s32.totalorder %s21, 0
      %p63 = por %p61, %p62
      %p64 = scmp.ne.s32.totalorder %s52, %s53
      %p65 = scmp.eq.s32.totalorder %s22, 3
      %p66 = por %p64, %p65
      %p68 = scmp.ne.s32.totalorder %s53, %s67
      %p69 = scmp.eq.s32.totalorder %s22, 0
      %p70 = por %p68, %p69
      %s72 = sadd.s32 %s71, 1
      %p75 = scmp.eq.s32.totalorder %s16, 3
      %p76 = scmp.ne.s32.totalorder %s71, %s73
      %p77 = scmp.eq.s32.totalorder %s16, 0
      %p78 = por %p76, %p77
      %p79 = scmp.ne.s32.totalorder %s71, %s73
      %p80 = scmp.eq.s32.totalorder %s21, 3
      %p81 = por %p79, %p80
      %p82 = scmp.ne.s32.totalorder %s73, %s74
      %p83 = scmp.eq.s32.totalorder %s21, 0
      %p84 = por %p82, %p83
      %p85 = scmp.ne.s32.totalorder %s73, %s74
      %p86 = scmp.eq.s32.totalorder %s22, 3
      %p87 = por %p85, %p86
      %p89 = scmp.ne.s32.totalorder %s74, %s88
      %p90 = scmp.eq.s32.totalorder %s22, 0
      %p91 = por %p89, %p90
      %s93 = sadd.s32 %s92, 1
      %p96 = scmp.eq.s32.totalorder %s16, 3
      %p97 = scmp.ne.s32.totalorder %s92, %s94
      %p98 = scmp.eq.s32.totalorder %s16, 0
      %p99 = por %p97, %p98
      %p100 = scmp.ne.s32.totalorder %s92, %s94
      %p101 = scmp.eq.s32.totalorder %s21, 3
      %p102 = por %p100, %p101
      %p103 = scmp.ne.s32.totalorder %s94, %s95
      %p104 = scmp.eq.s32.totalorder %s21, 0
      %p105 = por %p103, %p104
      %p106 = scmp.ne.s32.totalorder %s94, %s95
      %p107 = scmp.eq.s32.totalorder %s22, 3
      %p108 = por %p106, %p107
      %p110 = scmp.ne.s32.totalorder %s95, %s109
      %p111 = scmp.eq.s32.totalorder %s22, 0
      %p112 = por %p110, %p111
      %s114 = sadd.s32 %s113, 1
      %p117 = scmp.eq.s32.totalorder %s16, 3
      %p118 = scmp.ne.s32.totalorder %s113, %s115
      %p119 = scmp.eq.s32.totalorder %s16, 0
      %p120 = por %p118, %p119
      %p121 = scmp.ne.s32.totalorder %s113, %s115
      %p122 = scmp.eq.s32.totalorder %s21, 3
      %p123 = por %p121, %p122
      %p124 = scmp.ne.s32.totalorder %s115, %s116
      %p125 = scmp.eq.s32.totalorder %s21, 0
      %p126 = por %p124, %p125
      %p127 = scmp.ne.s32.totalorder %s115, %s116
      %p128 = scmp.eq.s32.totalorder %s22, 3
      %p129 = por %p127, %p128
      %p131 = scmp.ne.s32.totalorder %s116, %s130
      %p132 = scmp.eq.s32.totalorder %s22, 0
      %p133 = por %p131, %p132
      %s134 = ssub.s32 %s16, %s23
      %p135 = scmp.eq.s32.totalorder %s134, 0
      %s137 = sadd.s32 %s136, 1
      %s138 = scalar_select %p135, %s136, %s137
      %p141 = pneg %p135
      %p142 = scmp.eq.s32.totalorder %s16, 3
      %p143 = por %p141, %p142
      %p144 = scmp.ne.s32.totalorder %s136, %s139
      %p145 = scmp.eq.s32.totalorder %s16, 0
      %p146 = por %p144, %p145
      %p147 = scmp.ne.s32.totalorder %s136, %s139
      %p148 = scmp.eq.s32.totalorder %s21, 3
      %p149 = por %p147, %p148
      %p150 = scmp.ne.s32.totalorder %s139, %s140
      %p151 = scmp.eq.s32.totalorder %s21, 0
      %p152 = por %p150, %p151
      %p153 = scmp.ne.s32.totalorder %s139, %s140
      %p154 = scmp.eq.s32.totalorder %s22, 3
      %p155 = por %p153, %p154
      %p157 = scmp.ne.s32.totalorder %s140, %s156
      %p158 = scmp.eq.s32.totalorder %s22, 0
      %p159 = por %p157, %p158
      %p160 = scmp.le.s32.totalorder 1, %s16
      %p161 = scmp.lt.s32.totalorder %s16, 5
      %p162 = pnand %p160, %p161
      %p163 = pneg %p162
      // Predicated region
      $region9: #{tpu_custom_call.1} parent=5 // pred_check
        _
      $region10: #{tpu_custom_call.1} parent=5 // pred_check_branch
        %165 = sbr.rel (%p162) target = $region12
      $region11: #{tpu_custom_call.1} parent=5 // pred_region
        %s166 = ssub.s32 %s16, 1
        // Predicated region
        $region13: #{tpu_custom_call.1} parent=11 // pred_check
          %p167 = pneg %p63
        $region14: #{tpu_custom_call.1} parent=11 // pred_check_branch
          %169 = sbr.rel (%p167) target = $region16
        $region15: #{tpu_custom_call.1} parent=11 // pred_region
          %171 = vsyncadd [#allocation5], 0
          %s172 = sshll.u32 %s1, 4
          %s173 = int_to_ptr.hbm [resolvable:$true] %s172
          %s174 = sshll.u32 [#allocation4], 4
          %s175 = int_to_ptr.vmem [resolvable:$true] %s174
          %180 = dma.hbm_to_vmem [thread:$0]  %s173, 65536, %s175, [#allocation5], 512, 512, 32
        $region16: #{tpu_custom_call.1} parent=11 // pred_fallthru
          _
        // Predicated region
        $region17: #{tpu_custom_call.1} parent=11 // pred_check
          %p181 = pneg %p84
        $region18: #{tpu_custom_call.1} parent=11 // pred_check_branch
          %183 = sbr.rel (%p181) target = $region20
        $region19: #{tpu_custom_call.1} parent=11 // pred_region
          %185 = vsyncadd [#allocation5], 0
          %s187 = sshll.u32 %s2, 4
          %s188 = int_to_ptr.hbm [resolvable:$true] %s187
          %s189 = sshll.u32 [#allocation6], 4
          %s190 = int_to_ptr.vmem [resolvable:$true] %s189
          %192 = dma.hbm_to_vmem [thread:$0]  %s188, 64, %s190, [#allocation5]
        $region20: #{tpu_custom_call.1} parent=11 // pred_fallthru
          _
        // Predicated region
        $region21: #{tpu_custom_call.1} parent=11 // pred_check
          %p193 = pneg %p105
        $region22: #{tpu_custom_call.1} parent=11 // pred_check_branch
          %195 = sbr.rel (%p193) target = $region24
        $region23: #{tpu_custom_call.1} parent=11 // pred_region
          %197 = vsyncadd [#allocation8], 0
          %s198 = sshll.u32 %s3, 4
          %s199 = int_to_ptr.hbm [resolvable:$true] %s198
          %s200 = sshll.u32 [#allocation7], 4
          %s201 = int_to_ptr.vmem [resolvable:$true] %s200
          %206 = dma.hbm_to_vmem [thread:$0]  %s199, 4096, %s201, [#allocation8], 128, 128, 8
        $region24: #{tpu_custom_call.1} parent=11 // pred_fallthru
          _
        // Predicated region
        $region25: #{tpu_custom_call.1} parent=11 // pred_check
          %p207 = pneg %p126
        $region26: #{tpu_custom_call.1} parent=11 // pred_check_branch
          %209 = sbr.rel (%p207) target = $region28
        $region27: #{tpu_custom_call.1} parent=11 // pred_region
          %211 = vsyncadd [#allocation8], 0
          %s213 = sshll.u32 %s4, 4
          %s214 = int_to_ptr.hbm [resolvable:$true] %s213
          %s215 = sshll.u32 [#allocation9], 4
          %s216 = int_to_ptr.vmem [resolvable:$true] %s215
          %218 = dma.hbm_to_vmem [thread:$0]  %s214, 16, %s216, [#allocation8]
        $region28: #{tpu_custom_call.1} parent=11 // pred_fallthru
          _
      $region12: #{tpu_custom_call.1} parent=5 // pred_fallthru
        _
      %p219 = scmp.lt.s32.totalorder %s16, 4
      // Predicated region
      $region29: #{tpu_custom_call.1} parent=5 // pred_check
        %p220 = pneg %p219
      $region30: #{tpu_custom_call.1} parent=5 // pred_check_branch
        %222 = sbr.rel (%p220) target = $region32
      $region31: #{tpu_custom_call.1} parent=5 // pred_region
        // Predicated region
        $region33: #{tpu_custom_call.1} parent=31 // pred_check
          %p223 = pneg %p36
        $region34: #{tpu_custom_call.1} parent=31 // pred_check_branch
          %225 = sbr.rel (%p223) target = $region36
        $region35: #{tpu_custom_call.1} parent=31 // pred_region
          %s226 = sand.u32 %s26, 1
          %s227 = scalar_lea.sflag [#allocation3], %s226
          %s228 = sand.u32 %s26, 1
          %s229 = smul.addr %s228, 704
          %s230 = scalar_lea.vmem [#allocation2], %s229
          %s231 = smul.u32 11, %s16
          %s232 = ssub.s32 42, %s231
          %p233 = scmp.lt.s32.totalorder %s232, 11
          %s234 = scalar_select %p233, %s232, 11
          %s235 = smul.u32 8, %s234
          %s236 = smul.u32 %s235, 8
          %s237 = ssub.s32 704, %s236
          %s238 = sshll.u32 %s237, 4
          %239 = vsyncadd %s227, %s238
          %p240 = scmp.ne.s32.totalorder 0, %s236
          %s241 = smul.addr %s231, 8
          %s242 = smul.addr %s241, 8
          %s243 = scalar_lea.hbm %s0, %s242
          %s244 = smul.u32 64, %s234
          %s245 = sshll.u32 %s243, 4
          %s246 = int_to_ptr.hbm [resolvable:$true] %s245
          %s247 = sshll.u32 %s230, 4
          %s248 = int_to_ptr.vmem [resolvable:$true] %s247
          %s249 = sshll.u32 %s244, 4
          %253 = dma.hbm_to_vmem [thread:$0]  (%p240), %s246, %s249, %s248, %s227, 1024, 1024, 64
        $region36: #{tpu_custom_call.1} parent=31 // pred_fallthru
          _
      $region32: #{tpu_custom_call.1} parent=5 // pred_fallthru
        _
      %p254 = scmp.le.s32.totalorder 1, %s16
      %p255 = scmp.lt.s32.totalorder %s16, 5
      %p256 = pnand %p254, %p255
      %p257 = pneg %p256
      // Predicated region
      $region37: #{tpu_custom_call.1} parent=5 // pred_check
        _
      $region38: #{tpu_custom_call.1} parent=5 // pred_check_branch
        %259 = sbr.rel (%p256) target = $region40
      $region39: #{tpu_custom_call.1} parent=5 // pred_region
        %s260 = ssub.s32 %s16, 1
        %s261 = sand.u32 %s29, 1
        %s262 = scalar_lea.sflag [#allocation3], %s261
        %s263 = sand.u32 %s29, 1
        %s264 = smul.addr %s263, 704
        %s265 = scalar_lea.vmem [#allocation2], %s264
        // Predicated region
        $region41: #{tpu_custom_call.1} parent=39 // pred_check
          %p266 = pneg %p42
        $region42: #{tpu_custom_call.1} parent=39 // pred_check_branch
          %268 = sbr.rel (%p266) target = $region44
        $region43: #{tpu_custom_call.1} parent=39 // pred_region
          %270 = dma.done %s262, 11264
        $region44: #{tpu_custom_call.1} parent=39 // pred_fallthru
          _
        // Predicated region
        $region45: #{tpu_custom_call.1} parent=39 // pred_check
          %p271 = pneg %p63
        $region46: #{tpu_custom_call.1} parent=39 // pred_check_branch
          %273 = sbr.rel (%p271) target = $region48
        $region47: #{tpu_custom_call.1} parent=39 // pred_region
          %275 = dma.done [#allocation5], 65536
        $region48: #{tpu_custom_call.1} parent=39 // pred_fallthru
          _
        // Predicated region
        $region49: #{tpu_custom_call.1} parent=39 // pred_check
          %p276 = pneg %p84
        $region50: #{tpu_custom_call.1} parent=39 // pred_check_branch
          %278 = sbr.rel (%p276) target = $region52
        $region51: #{tpu_custom_call.1} parent=39 // pred_region
          %280 = dma.done [#allocation5], 64
        $region52: #{tpu_custom_call.1} parent=39 // pred_fallthru
          _
        // Predicated region
        $region53: #{tpu_custom_call.1} parent=39 // pred_check
          %p281 = pneg %p105
        $region54: #{tpu_custom_call.1} parent=39 // pred_check_branch
          %283 = sbr.rel (%p281) target = $region56
        $region55: #{tpu_custom_call.1} parent=39 // pred_region
          %285 = dma.done [#allocation8], 4096
        $region56: #{tpu_custom_call.1} parent=39 // pred_fallthru
          _
        // Predicated region
        $region57: #{tpu_custom_call.1} parent=39 // pred_check
          %p286 = pneg %p126
        $region58: #{tpu_custom_call.1} parent=39 // pred_check_branch
          %288 = sbr.rel (%p286) target = $region60
        $region59: #{tpu_custom_call.1} parent=39 // pred_region
          %290 = dma.done [#allocation8], 16
        $region60: #{tpu_custom_call.1} parent=39 // pred_fallthru
          _
        %s291 = sand.u32 %s29, 1
        %s292 = scalar_lea.sflag [#allocation3], %s291
        %s293 = sand.u32 %s29, 1
        %s294 = smul.addr %s293, 704
        %s295 = scalar_lea.vmem [#allocation2], %s294
        %p296 = pneg %p42
        %p297 = pneg %p39
        %p298 = pneg %p63
        %p299 = pneg %p60
        %p300 = pneg %p84
        %p301 = pneg %p81
        %p302 = pneg %p105
        %p303 = pneg %p102
        %p304 = pneg %p126
        %p305 = pneg %p123
        %p306 = pneg %p152
        %p307 = pneg %p149
        %s308 = sand.u32 %s139, 1
        %s309 = sand.u32 %s139, 1
        %s310 = smul.addr %s309, 88
        %s311 = scalar_lea.vmem [#allocation10], %s310
        %s312 = smul.u32 11, %s21
        %s313 = ssub.s32 42, %s312
        %p314 = scmp.lt.s32.totalorder %s313, 11
        %s315 = scalar_select %p314, %s313, 11
        %s316 = smul.u32 8, %s315
        %s317 = smul.u32 %s316, 8
        %s318 = smul.u32 11, %s21
        %s319 = ssub.s32 42, %s318
        %p320 = scmp.lt.s32.totalorder %s319, 11
        %s321 = scalar_select %p320, %s319, 11
        %s322 = smul.u32 8, %s321
        %v323 = vld [vmem:[%s265] sm:$0xff]
        %v324 = vld [vmem:[%s265 + $0x8] sm:$0xff]
        %v325 = vld [vmem:[%s265 + $0x10] sm:$0xff]
        %v326 = vld [vmem:[%s265 + $0x18] sm:$0xff]
        %v327 = vld [vmem:[%s265 + $0x20] sm:$0xff]
        %v328 = vld [vmem:[%s265 + $0x28] sm:$0xff]
        %v329 = vld [vmem:[%s265 + $0x30] sm:$0xff]
        %v330 = vld [vmem:[%s265 + $0x38] sm:$0xff]
        %v331 = vld [vmem:[%s265 + $0x40] sm:$0xff]
        %v332 = vld [vmem:[%s265 + $0x48] sm:$0xff]
        %v333 = vld [vmem:[%s265 + $0x50] sm:$0xff]
        %v334 = vld [vmem:[%s265 + $0x58] sm:$0xff]
        %v335 = vld [vmem:[%s265 + $0x60] sm:$0xff]
        %v336 = vld [vmem:[%s265 + $0x68] sm:$0xff]
        %v337 = vld [vmem:[%s265 + $0x70] sm:$0xff]
        %v338 = vld [vmem:[%s265 + $0x78] sm:$0xff]
        %v339 = vld [vmem:[%s265 + $0x80] sm:$0xff]
        %v340 = vld [vmem:[%s265 + $0x88] sm:$0xff]
        %v341 = vld [vmem:[%s265 + $0x90] sm:$0xff]
        %v342 = vld [vmem:[%s265 + $0x98] sm:$0xff]
        %v343 = vld [vmem:[%s265 + $0xa0] sm:$0xff]
        %v344 = vld [vmem:[%s265 + $0xa8] sm:$0xff]
        %v345 = vld [vmem:[%s265 + $0xb0] sm:$0xff]
        %v346 = vld [vmem:[%s265 + $0xb8] sm:$0xff]
        %v347 = vld [vmem:[%s265 + $0xc0] sm:$0xff]
        %v348 = vld [vmem:[%s265 + $0xc8] sm:$0xff]
        %v349 = vld [vmem:[%s265 + $0xd0] sm:$0xff]
        %v350 = vld [vmem:[%s265 + $0xd8] sm:$0xff]
        %v351 = vld [vmem:[%s265 + $0xe0] sm:$0xff]
        %v352 = vld [vmem:[%s265 + $0xe8] sm:$0xff]
        %v353 = vld [vmem:[%s265 + $0xf0] sm:$0xff]
        %v354 = vld [vmem:[%s265 + $0xf8] sm:$0xff]
        %v355 = vld [vmem:[%s265 + $0x100] sm:$0xff]
        %v356 = vld [vmem:[%s265 + $0x108] sm:$0xff]
        %v357 = vld [vmem:[%s265 + $0x110] sm:$0xff]
        %v358 = vld [vmem:[%s265 + $0x118] sm:$0xff]
        %v359 = vld [vmem:[%s265 + $0x120] sm:$0xff]
        %v360 = vld [vmem:[%s265 + $0x128] sm:$0xff]
        %v361 = vld [vmem:[%s265 + $0x130] sm:$0xff]
        %v362 = vld [vmem:[%s265 + $0x138] sm:$0xff]
        %v363 = vld [vmem:[%s265 + $0x140] sm:$0xff]
        %v364 = vld [vmem:[%s265 + $0x148] sm:$0xff]
        %v365 = vld [vmem:[%s265 + $0x150] sm:$0xff]
        %v366 = vld [vmem:[%s265 + $0x158] sm:$0xff]
        %v367 = vld [vmem:[%s265 + $0x160] sm:$0xff]
        %v368 = vld [vmem:[%s265 + $0x168] sm:$0xff]
        %v369 = vld [vmem:[%s265 + $0x170] sm:$0xff]
        %v370 = vld [vmem:[%s265 + $0x178] sm:$0xff]
        %v371 = vld [vmem:[%s265 + $0x180] sm:$0xff]
        %v372 = vld [vmem:[%s265 + $0x188] sm:$0xff]
        %v373 = vld [vmem:[%s265 + $0x190] sm:$0xff]
        %v374 = vld [vmem:[%s265 + $0x198] sm:$0xff]
        %v375 = vld [vmem:[%s265 + $0x1a0] sm:$0xff]
        %v376 = vld [vmem:[%s265 + $0x1a8] sm:$0xff]
        %v377 = vld [vmem:[%s265 + $0x1b0] sm:$0xff]
        %v378 = vld [vmem:[%s265 + $0x1b8] sm:$0xff]
        %v379 = vld [vmem:[%s265 + $0x1c0] sm:$0xff]
        %v380 = vld [vmem:[%s265 + $0x1c8] sm:$0xff]
        %v381 = vld [vmem:[%s265 + $0x1d0] sm:$0xff]
        %v382 = vld [vmem:[%s265 + $0x1d8] sm:$0xff]
        %v383 = vld [vmem:[%s265 + $0x1e0] sm:$0xff]
        %v384 = vld [vmem:[%s265 + $0x1e8] sm:$0xff]
        %v385 = vld [vmem:[%s265 + $0x1f0] sm:$0xff]
        %v386 = vld [vmem:[%s265 + $0x1f8] sm:$0xff]
        %v387 = vld [vmem:[%s265 + $0x200] sm:$0xff]
        %v388 = vld [vmem:[%s265 + $0x208] sm:$0xff]
        %v389 = vld [vmem:[%s265 + $0x210] sm:$0xff]
        %v390 = vld [vmem:[%s265 + $0x218] sm:$0xff]
        %v391 = vld [vmem:[%s265 + $0x220] sm:$0xff]
        %v392 = vld [vmem:[%s265 + $0x228] sm:$0xff]
        %v393 = vld [vmem:[%s265 + $0x230] sm:$0xff]
        %v394 = vld [vmem:[%s265 + $0x238] sm:$0xff]
        %v395 = vld [vmem:[%s265 + $0x240] sm:$0xff]
        %v396 = vld [vmem:[%s265 + $0x248] sm:$0xff]
        %v397 = vld [vmem:[%s265 + $0x250] sm:$0xff]
        %v398 = vld [vmem:[%s265 + $0x258] sm:$0xff]
        %v399 = vld [vmem:[%s265 + $0x260] sm:$0xff]
        %v400 = vld [vmem:[%s265 + $0x268] sm:$0xff]
        %v401 = vld [vmem:[%s265 + $0x270] sm:$0xff]
        %v402 = vld [vmem:[%s265 + $0x278] sm:$0xff]
        %v403 = vld [vmem:[%s265 + $0x280] sm:$0xff]
        %v404 = vld [vmem:[%s265 + $0x288] sm:$0xff]
        %v405 = vld [vmem:[%s265 + $0x290] sm:$0xff]
        %v406 = vld [vmem:[%s265 + $0x298] sm:$0xff]
        %v407 = vld [vmem:[%s265 + $0x2a0] sm:$0xff]
        %v408 = vld [vmem:[%s265 + $0x2a8] sm:$0xff]
        %v409 = vld [vmem:[%s265 + $0x2b0] sm:$0xff]
        %v410 = vld [vmem:[%s265 + $0x2b8] sm:$0xff]
        %v411 = vld [vmem:[#allocation4] sm:$0xff]
        %v412 = vld [vmem:[#allocation4 + $0x8] sm:$0xff]
        %v413 = vld [vmem:[#allocation4 + $0x10] sm:$0xff]
        %v414 = vld [vmem:[#allocation4 + $0x18] sm:$0xff]
        %v415 = vld [vmem:[#allocation4 + $0x20] sm:$0xff]
        %v416 = vld [vmem:[#allocation4 + $0x28] sm:$0xff]
        %v417 = vld [vmem:[#allocation4 + $0x30] sm:$0xff]
        %v418 = vld [vmem:[#allocation4 + $0x38] sm:$0xff]
        %v419 = vld [vmem:[#allocation4 + $0x40] sm:$0xff]
        %v420 = vld [vmem:[#allocation4 + $0x48] sm:$0xff]
        %v421 = vld [vmem:[#allocation4 + $0x50] sm:$0xff]
        %v422 = vld [vmem:[#allocation4 + $0x58] sm:$0xff]
        %v423 = vld [vmem:[#allocation4 + $0x60] sm:$0xff]
        %v424 = vld [vmem:[#allocation4 + $0x68] sm:$0xff]
        %v425 = vld [vmem:[#allocation4 + $0x70] sm:$0xff]
        %v426 = vld [vmem:[#allocation4 + $0x78] sm:$0xff]
        %v427 = vld [vmem:[#allocation4 + $0x80] sm:$0xff]
        %v428 = vld [vmem:[#allocation4 + $0x88] sm:$0xff]
        %v429 = vld [vmem:[#allocation4 + $0x90] sm:$0xff]
        %v430 = vld [vmem:[#allocation4 + $0x98] sm:$0xff]
        %v431 = vld [vmem:[#allocation4 + $0xa0] sm:$0xff]
        %v432 = vld [vmem:[#allocation4 + $0xa8] sm:$0xff]
        %v433 = vld [vmem:[#allocation4 + $0xb0] sm:$0xff]
        %v434 = vld [vmem:[#allocation4 + $0xb8] sm:$0xff]
        %v435 = vld [vmem:[#allocation4 + $0xc0] sm:$0xff]
        %v436 = vld [vmem:[#allocation4 + $0xc8] sm:$0xff]
        %v437 = vld [vmem:[#allocation4 + $0xd0] sm:$0xff]
        %v438 = vld [vmem:[#allocation4 + $0xd8] sm:$0xff]
        %v439 = vld [vmem:[#allocation4 + $0xe0] sm:$0xff]
        %v440 = vld [vmem:[#allocation4 + $0xe8] sm:$0xff]
        %v441 = vld [vmem:[#allocation4 + $0xf0] sm:$0xff]
        %v442 = vld [vmem:[#allocation4 + $0xf8] sm:$0xff]
        %v443 = vld [vmem:[#allocation4 + $0x100] sm:$0xff]
        %v444 = vld [vmem:[#allocation4 + $0x108] sm:$0xff]
        %v445 = vld [vmem:[#allocation4 + $0x110] sm:$0xff]
        %v446 = vld [vmem:[#allocation4 + $0x118] sm:$0xff]
        %v447 = vld [vmem:[#allocation4 + $0x120] sm:$0xff]
        %v448 = vld [vmem:[#allocation4 + $0x128] sm:$0xff]
        %v449 = vld [vmem:[#allocation4 + $0x130] sm:$0xff]
        %v450 = vld [vmem:[#allocation4 + $0x138] sm:$0xff]
        %v451 = vld [vmem:[#allocation4 + $0x140] sm:$0xff]
        %v452 = vld [vmem:[#allocation4 + $0x148] sm:$0xff]
        %v453 = vld [vmem:[#allocation4 + $0x150] sm:$0xff]
        %v454 = vld [vmem:[#allocation4 + $0x158] sm:$0xff]
        %v455 = vld [vmem:[#allocation4 + $0x160] sm:$0xff]
        %v456 = vld [vmem:[#allocation4 + $0x168] sm:$0xff]
        %v457 = vld [vmem:[#allocation4 + $0x170] sm:$0xff]
        %v458 = vld [vmem:[#allocation4 + $0x178] sm:$0xff]
        %v459 = vld [vmem:[#allocation4 + $0x180] sm:$0xff]
        %v460 = vld [vmem:[#allocation4 + $0x188] sm:$0xff]
        %v461 = vld [vmem:[#allocation4 + $0x190] sm:$0xff]
        %v462 = vld [vmem:[#allocation4 + $0x198] sm:$0xff]
        %v463 = vld [vmem:[#allocation4 + $0x1a0] sm:$0xff]
        %v464 = vld [vmem:[#allocation4 + $0x1a8] sm:$0xff]
        %v465 = vld [vmem:[#allocation4 + $0x1b0] sm:$0xff]
        %v466 = vld [vmem:[#allocation4 + $0x1b8] sm:$0xff]
        %v467 = vld [vmem:[#allocation4 + $0x1c0] sm:$0xff]
        %v468 = vld [vmem:[#allocation4 + $0x1c8] sm:$0xff]
        %v469 = vld [vmem:[#allocation4 + $0x1d0] sm:$0xff]
        %v470 = vld [vmem:[#allocation4 + $0x1d8] sm:$0xff]
        %v471 = vld [vmem:[#allocation4 + $0x1e0] sm:$0xff]
        %v472 = vld [vmem:[#allocation4 + $0x1e8] sm:$0xff]
        %v473 = vld [vmem:[#allocation4 + $0x1f0] sm:$0xff]
        %v474 = vld [vmem:[#allocation4 + $0x1f8] sm:$0xff]
        %v475 = vld [vmem:[#allocation4 + $0x200] sm:$0xff]
        %v476 = vld [vmem:[#allocation4 + $0x208] sm:$0xff]
        %v477 = vld [vmem:[#allocation4 + $0x210] sm:$0xff]
        %v478 = vld [vmem:[#allocation4 + $0x218] sm:$0xff]
        %v479 = vld [vmem:[#allocation4 + $0x220] sm:$0xff]
        %v480 = vld [vmem:[#allocation4 + $0x228] sm:$0xff]
        %v481 = vld [vmem:[#allocation4 + $0x230] sm:$0xff]
        %v482 = vld [vmem:[#allocation4 + $0x238] sm:$0xff]
        %v483 = vld [vmem:[#allocation4 + $0x240] sm:$0xff]
        %v484 = vld [vmem:[#allocation4 + $0x248] sm:$0xff]
        %v485 = vld [vmem:[#allocation4 + $0x250] sm:$0xff]
        %v486 = vld [vmem:[#allocation4 + $0x258] sm:$0xff]
        %v487 = vld [vmem:[#allocation4 + $0x260] sm:$0xff]
        %v488 = vld [vmem:[#allocation4 + $0x268] sm:$0xff]
        %v489 = vld [vmem:[#allocation4 + $0x270] sm:$0xff]
        %v490 = vld [vmem:[#allocation4 + $0x278] sm:$0xff]
        %v491 = vld [vmem:[#allocation4 + $0x280] sm:$0xff]
        %v492 = vld [vmem:[#allocation4 + $0x288] sm:$0xff]
        %v493 = vld [vmem:[#allocation4 + $0x290] sm:$0xff]
        %v494 = vld [vmem:[#allocation4 + $0x298] sm:$0xff]
        %v495 = vld [vmem:[#allocation4 + $0x2a0] sm:$0xff]
        %v496 = vld [vmem:[#allocation4 + $0x2a8] sm:$0xff]
        %v497 = vld [vmem:[#allocation4 + $0x2b0] sm:$0xff]
        %v498 = vld [vmem:[#allocation4 + $0x2b8] sm:$0xff]
        %v499 = vld [vmem:[#allocation4 + $0x2c0] sm:$0xff]
        %v500 = vld [vmem:[#allocation4 + $0x2c8] sm:$0xff]
        %v501 = vld [vmem:[#allocation4 + $0x2d0] sm:$0xff]
        %v502 = vld [vmem:[#allocation4 + $0x2d8] sm:$0xff]
        %v503 = vld [vmem:[#allocation4 + $0x2e0] sm:$0xff]
        %v504 = vld [vmem:[#allocation4 + $0x2e8] sm:$0xff]
        %v505 = vld [vmem:[#allocation4 + $0x2f0] sm:$0xff]
        %v506 = vld [vmem:[#allocation4 + $0x2f8] sm:$0xff]
        %v507 = vld [vmem:[#allocation4 + $0x300] sm:$0xff]
        %v508 = vld [vmem:[#allocation4 + $0x308] sm:$0xff]
        %v509 = vld [vmem:[#allocation4 + $0x310] sm:$0xff]
        %v510 = vld [vmem:[#allocation4 + $0x318] sm:$0xff]
        %v511 = vld [vmem:[#allocation4 + $0x320] sm:$0xff]
        %v512 = vld [vmem:[#allocation4 + $0x328] sm:$0xff]
        %v513 = vld [vmem:[#allocation4 + $0x330] sm:$0xff]
        %v514 = vld [vmem:[#allocation4 + $0x338] sm:$0xff]
        %v515 = vld [vmem:[#allocation4 + $0x340] sm:$0xff]
        %v516 = vld [vmem:[#allocation4 + $0x348] sm:$0xff]
        %v517 = vld [vmem:[#allocation4 + $0x350] sm:$0xff]
        %v518 = vld [vmem:[#allocation4 + $0x358] sm:$0xff]
        %v519 = vld [vmem:[#allocation4 + $0x360] sm:$0xff]
        %v520 = vld [vmem:[#allocation4 + $0x368] sm:$0xff]
        %v521 = vld [vmem:[#allocation4 + $0x370] sm:$0xff]
        %v522 = vld [vmem:[#allocation4 + $0x378] sm:$0xff]
        %v523 = vld [vmem:[#allocation4 + $0x380] sm:$0xff]
        %v524 = vld [vmem:[#allocation4 + $0x388] sm:$0xff]
        %v525 = vld [vmem:[#allocation4 + $0x390] sm:$0xff]
        %v526 = vld [vmem:[#allocation4 + $0x398] sm:$0xff]
        %v527 = vld [vmem:[#allocation4 + $0x3a0] sm:$0xff]
        %v528 = vld [vmem:[#allocation4 + $0x3a8] sm:$0xff]
        %v529 = vld [vmem:[#allocation4 + $0x3b0] sm:$0xff]
        %v530 = vld [vmem:[#allocation4 + $0x3b8] sm:$0xff]
        %v531 = vld [vmem:[#allocation4 + $0x3c0] sm:$0xff]
        %v532 = vld [vmem:[#allocation4 + $0x3c8] sm:$0xff]
        %v533 = vld [vmem:[#allocation4 + $0x3d0] sm:$0xff]
        %v534 = vld [vmem:[#allocation4 + $0x3d8] sm:$0xff]
        %v535 = vld [vmem:[#allocation4 + $0x3e0] sm:$0xff]
        %v536 = vld [vmem:[#allocation4 + $0x3e8] sm:$0xff]
        %v537 = vld [vmem:[#allocation4 + $0x3f0] sm:$0xff]
        %v538 = vld [vmem:[#allocation4 + $0x3f8] sm:$0xff]
        %v539 = vld [vmem:[#allocation4 + $0x400] sm:$0xff]
        %v540 = vld [vmem:[#allocation4 + $0x408] sm:$0xff]
        %v541 = vld [vmem:[#allocation4 + $0x410] sm:$0xff]
        %v542 = vld [vmem:[#allocation4 + $0x418] sm:$0xff]
        %v543 = vld [vmem:[#allocation4 + $0x420] sm:$0xff]
        %v544 = vld [vmem:[#allocation4 + $0x428] sm:$0xff]
        %v545 = vld [vmem:[#allocation4 + $0x430] sm:$0xff]
        %v546 = vld [vmem:[#allocation4 + $0x438] sm:$0xff]
        %v547 = vld [vmem:[#allocation4 + $0x440] sm:$0xff]
        %v548 = vld [vmem:[#allocation4 + $0x448] sm:$0xff]
        %v549 = vld [vmem:[#allocation4 + $0x450] sm:$0xff]
        %v550 = vld [vmem:[#allocation4 + $0x458] sm:$0xff]
        %v551 = vld [vmem:[#allocation4 + $0x460] sm:$0xff]
        %v552 = vld [vmem:[#allocation4 + $0x468] sm:$0xff]
        %v553 = vld [vmem:[#allocation4 + $0x470] sm:$0xff]
        %v554 = vld [vmem:[#allocation4 + $0x478] sm:$0xff]
        %v555 = vld [vmem:[#allocation4 + $0x480] sm:$0xff]
        %v556 = vld [vmem:[#allocation4 + $0x488] sm:$0xff]
        %v557 = vld [vmem:[#allocation4 + $0x490] sm:$0xff]
        %v558 = vld [vmem:[#allocation4 + $0x498] sm:$0xff]
        %v559 = vld [vmem:[#allocation4 + $0x4a0] sm:$0xff]
        %v560 = vld [vmem:[#allocation4 + $0x4a8] sm:$0xff]
        %v561 = vld [vmem:[#allocation4 + $0x4b0] sm:$0xff]
        %v562 = vld [vmem:[#allocation4 + $0x4b8] sm:$0xff]
        %v563 = vld [vmem:[#allocation4 + $0x4c0] sm:$0xff]
        %v564 = vld [vmem:[#allocation4 + $0x4c8] sm:$0xff]
        %v565 = vld [vmem:[#allocation4 + $0x4d0] sm:$0xff]
        %v566 = vld [vmem:[#allocation4 + $0x4d8] sm:$0xff]
        %v567 = vld [vmem:[#allocation4 + $0x4e0] sm:$0xff]
        %v568 = vld [vmem:[#allocation4 + $0x4e8] sm:$0xff]
        %v569 = vld [vmem:[#allocation4 + $0x4f0] sm:$0xff]
        %v570 = vld [vmem:[#allocation4 + $0x4f8] sm:$0xff]
        %v571 = vld [vmem:[#allocation4 + $0x500] sm:$0xff]
        %v572 = vld [vmem:[#allocation4 + $0x508] sm:$0xff]
        %v573 = vld [vmem:[#allocation4 + $0x510] sm:$0xff]
        %v574 = vld [vmem:[#allocation4 + $0x518] sm:$0xff]
        %v575 = vld [vmem:[#allocation4 + $0x520] sm:$0xff]
        %v576 = vld [vmem:[#allocation4 + $0x528] sm:$0xff]
        %v577 = vld [vmem:[#allocation4 + $0x530] sm:$0xff]
        %v578 = vld [vmem:[#allocation4 + $0x538] sm:$0xff]
        %v579 = vld [vmem:[#allocation4 + $0x540] sm:$0xff]
        %v580 = vld [vmem:[#allocation4 + $0x548] sm:$0xff]
        %v581 = vld [vmem:[#allocation4 + $0x550] sm:$0xff]
        %v582 = vld [vmem:[#allocation4 + $0x558] sm:$0xff]
        %v583 = vld [vmem:[#allocation4 + $0x560] sm:$0xff]
        %v584 = vld [vmem:[#allocation4 + $0x568] sm:$0xff]
        %v585 = vld [vmem:[#allocation4 + $0x570] sm:$0xff]
        %v586 = vld [vmem:[#allocation4 + $0x578] sm:$0xff]
        %v587 = vld [vmem:[#allocation4 + $0x580] sm:$0xff]
        %v588 = vld [vmem:[#allocation4 + $0x588] sm:$0xff]
        %v589 = vld [vmem:[#allocation4 + $0x590] sm:$0xff]
        %v590 = vld [vmem:[#allocation4 + $0x598] sm:$0xff]
        %v591 = vld [vmem:[#allocation4 + $0x5a0] sm:$0xff]
        %v592 = vld [vmem:[#allocation4 + $0x5a8] sm:$0xff]
        %v593 = vld [vmem:[#allocation4 + $0x5b0] sm:$0xff]
        %v594 = vld [vmem:[#allocation4 + $0x5b8] sm:$0xff]
        %v595 = vld [vmem:[#allocation4 + $0x5c0] sm:$0xff]
        %v596 = vld [vmem:[#allocation4 + $0x5c8] sm:$0xff]
        %v597 = vld [vmem:[#allocation4 + $0x5d0] sm:$0xff]
        %v598 = vld [vmem:[#allocation4 + $0x5d8] sm:$0xff]
        %v599 = vld [vmem:[#allocation4 + $0x5e0] sm:$0xff]
        %v600 = vld [vmem:[#allocation4 + $0x5e8] sm:$0xff]
        %v601 = vld [vmem:[#allocation4 + $0x5f0] sm:$0xff]
        %v602 = vld [vmem:[#allocation4 + $0x5f8] sm:$0xff]
        %v603 = vld [vmem:[#allocation4 + $0x600] sm:$0xff]
        %v604 = vld [vmem:[#allocation4 + $0x608] sm:$0xff]
        %v605 = vld [vmem:[#allocation4 + $0x610] sm:$0xff]
        %v606 = vld [vmem:[#allocation4 + $0x618] sm:$0xff]
        %v607 = vld [vmem:[#allocation4 + $0x620] sm:$0xff]
        %v608 = vld [vmem:[#allocation4 + $0x628] sm:$0xff]
        %v609 = vld [vmem:[#allocation4 + $0x630] sm:$0xff]
        %v610 = vld [vmem:[#allocation4 + $0x638] sm:$0xff]
        %v611 = vld [vmem:[#allocation4 + $0x640] sm:$0xff]
        %v612 = vld [vmem:[#allocation4 + $0x648] sm:$0xff]
        %v613 = vld [vmem:[#allocation4 + $0x650] sm:$0xff]
        %v614 = vld [vmem:[#allocation4 + $0x658] sm:$0xff]
        %v615 = vld [vmem:[#allocation4 + $0x660] sm:$0xff]
        %v616 = vld [vmem:[#allocation4 + $0x668] sm:$0xff]
        %v617 = vld [vmem:[#allocation4 + $0x670] sm:$0xff]
        %v618 = vld [vmem:[#allocation4 + $0x678] sm:$0xff]
        %v619 = vld [vmem:[#allocation4 + $0x680] sm:$0xff]
        %v620 = vld [vmem:[#allocation4 + $0x688] sm:$0xff]
        %v621 = vld [vmem:[#allocation4 + $0x690] sm:$0xff]
        %v622 = vld [vmem:[#allocation4 + $0x698] sm:$0xff]
        %v623 = vld [vmem:[#allocation4 + $0x6a0] sm:$0xff]
        %v624 = vld [vmem:[#allocation4 + $0x6a8] sm:$0xff]
        %v625 = vld [vmem:[#allocation4 + $0x6b0] sm:$0xff]
        %v626 = vld [vmem:[#allocation4 + $0x6b8] sm:$0xff]
        %v627 = vld [vmem:[#allocation4 + $0x6c0] sm:$0xff]
        %v628 = vld [vmem:[#allocation4 + $0x6c8] sm:$0xff]
        %v629 = vld [vmem:[#allocation4 + $0x6d0] sm:$0xff]
        %v630 = vld [vmem:[#allocation4 + $0x6d8] sm:$0xff]
        %v631 = vld [vmem:[#allocation4 + $0x6e0] sm:$0xff]
        %v632 = vld [vmem:[#allocation4 + $0x6e8] sm:$0xff]
        %v633 = vld [vmem:[#allocation4 + $0x6f0] sm:$0xff]
        %v634 = vld [vmem:[#allocation4 + $0x6f8] sm:$0xff]
        %v635 = vld [vmem:[#allocation4 + $0x700] sm:$0xff]
        %v636 = vld [vmem:[#allocation4 + $0x708] sm:$0xff]
        %v637 = vld [vmem:[#allocation4 + $0x710] sm:$0xff]
        %v638 = vld [vmem:[#allocation4 + $0x718] sm:$0xff]
        %v639 = vld [vmem:[#allocation4 + $0x720] sm:$0xff]
        %v640 = vld [vmem:[#allocation4 + $0x728] sm:$0xff]
        %v641 = vld [vmem:[#allocation4 + $0x730] sm:$0xff]
        %v642 = vld [vmem:[#allocation4 + $0x738] sm:$0xff]
        %v643 = vld [vmem:[#allocation4 + $0x740] sm:$0xff]
        %v644 = vld [vmem:[#allocation4 + $0x748] sm:$0xff]
        %v645 = vld [vmem:[#allocation4 + $0x750] sm:$0xff]
        %v646 = vld [vmem:[#allocation4 + $0x758] sm:$0xff]
        %v647 = vld [vmem:[#allocation4 + $0x760] sm:$0xff]
        %v648 = vld [vmem:[#allocation4 + $0x768] sm:$0xff]
        %v649 = vld [vmem:[#allocation4 + $0x770] sm:$0xff]
        %v650 = vld [vmem:[#allocation4 + $0x778] sm:$0xff]
        %v651 = vld [vmem:[#allocation4 + $0x780] sm:$0xff]
        %v652 = vld [vmem:[#allocation4 + $0x788] sm:$0xff]
        %v653 = vld [vmem:[#allocation4 + $0x790] sm:$0xff]
        %v654 = vld [vmem:[#allocation4 + $0x798] sm:$0xff]
        %v655 = vld [vmem:[#allocation4 + $0x7a0] sm:$0xff]
        %v656 = vld [vmem:[#allocation4 + $0x7a8] sm:$0xff]
        %v657 = vld [vmem:[#allocation4 + $0x7b0] sm:$0xff]
        %v658 = vld [vmem:[#allocation4 + $0x7b8] sm:$0xff]
        %v659 = vld [vmem:[#allocation4 + $0x7c0] sm:$0xff]
        %v660 = vld [vmem:[#allocation4 + $0x7c8] sm:$0xff]
        %v661 = vld [vmem:[#allocation4 + $0x7d0] sm:$0xff]
        %v662 = vld [vmem:[#allocation4 + $0x7d8] sm:$0xff]
        %v663 = vld [vmem:[#allocation4 + $0x7e0] sm:$0xff]
        %v664 = vld [vmem:[#allocation4 + $0x7e8] sm:$0xff]
        %v665 = vld [vmem:[#allocation4 + $0x7f0] sm:$0xff]
        %v666 = vld [vmem:[#allocation4 + $0x7f8] sm:$0xff]
        %v667 = vld [vmem:[#allocation4 + $0x800] sm:$0xff]
        %v668 = vld [vmem:[#allocation4 + $0x808] sm:$0xff]
        %v669 = vld [vmem:[#allocation4 + $0x810] sm:$0xff]
        %v670 = vld [vmem:[#allocation4 + $0x818] sm:$0xff]
        %v671 = vld [vmem:[#allocation4 + $0x820] sm:$0xff]
        %v672 = vld [vmem:[#allocation4 + $0x828] sm:$0xff]
        %v673 = vld [vmem:[#allocation4 + $0x830] sm:$0xff]
        %v674 = vld [vmem:[#allocation4 + $0x838] sm:$0xff]
        %v675 = vld [vmem:[#allocation4 + $0x840] sm:$0xff]
        %v676 = vld [vmem:[#allocation4 + $0x848] sm:$0xff]
        %v677 = vld [vmem:[#allocation4 + $0x850] sm:$0xff]
        %v678 = vld [vmem:[#allocation4 + $0x858] sm:$0xff]
        %v679 = vld [vmem:[#allocation4 + $0x860] sm:$0xff]
        %v680 = vld [vmem:[#allocation4 + $0x868] sm:$0xff]
        %v681 = vld [vmem:[#allocation4 + $0x870] sm:$0xff]
        %v682 = vld [vmem:[#allocation4 + $0x878] sm:$0xff]
        %v683 = vld [vmem:[#allocation4 + $0x880] sm:$0xff]
        %v684 = vld [vmem:[#allocation4 + $0x888] sm:$0xff]
        %v685 = vld [vmem:[#allocation4 + $0x890] sm:$0xff]
        %v686 = vld [vmem:[#allocation4 + $0x898] sm:$0xff]
        %v687 = vld [vmem:[#allocation4 + $0x8a0] sm:$0xff]
        %v688 = vld [vmem:[#allocation4 + $0x8a8] sm:$0xff]
        %v689 = vld [vmem:[#allocation4 + $0x8b0] sm:$0xff]
        %v690 = vld [vmem:[#allocation4 + $0x8b8] sm:$0xff]
        %v691 = vld [vmem:[#allocation4 + $0x8c0] sm:$0xff]
        %v692 = vld [vmem:[#allocation4 + $0x8c8] sm:$0xff]
        %v693 = vld [vmem:[#allocation4 + $0x8d0] sm:$0xff]
        %v694 = vld [vmem:[#allocation4 + $0x8d8] sm:$0xff]
        %v695 = vld [vmem:[#allocation4 + $0x8e0] sm:$0xff]
        %v696 = vld [vmem:[#allocation4 + $0x8e8] sm:$0xff]
        %v697 = vld [vmem:[#allocation4 + $0x8f0] sm:$0xff]
        %v698 = vld [vmem:[#allocation4 + $0x8f8] sm:$0xff]
        %v699 = vld [vmem:[#allocation4 + $0x900] sm:$0xff]
        %v700 = vld [vmem:[#allocation4 + $0x908] sm:$0xff]
        %v701 = vld [vmem:[#allocation4 + $0x910] sm:$0xff]
        %v702 = vld [vmem:[#allocation4 + $0x918] sm:$0xff]
        %v703 = vld [vmem:[#allocation4 + $0x920] sm:$0xff]
        %v704 = vld [vmem:[#allocation4 + $0x928] sm:$0xff]
        %v705 = vld [vmem:[#allocation4 + $0x930] sm:$0xff]
        %v706 = vld [vmem:[#allocation4 + $0x938] sm:$0xff]
        %v707 = vld [vmem:[#allocation4 + $0x940] sm:$0xff]
        %v708 = vld [vmem:[#allocation4 + $0x948] sm:$0xff]
        %v709 = vld [vmem:[#allocation4 + $0x950] sm:$0xff]
        %v710 = vld [vmem:[#allocation4 + $0x958] sm:$0xff]
        %v711 = vld [vmem:[#allocation4 + $0x960] sm:$0xff]
        %v712 = vld [vmem:[#allocation4 + $0x968] sm:$0xff]
        %v713 = vld [vmem:[#allocation4 + $0x970] sm:$0xff]
        %v714 = vld [vmem:[#allocation4 + $0x978] sm:$0xff]
        %v715 = vld [vmem:[#allocation4 + $0x980] sm:$0xff]
        %v716 = vld [vmem:[#allocation4 + $0x988] sm:$0xff]
        %v717 = vld [vmem:[#allocation4 + $0x990] sm:$0xff]
        %v718 = vld [vmem:[#allocation4 + $0x998] sm:$0xff]
        %v719 = vld [vmem:[#allocation4 + $0x9a0] sm:$0xff]
        %v720 = vld [vmem:[#allocation4 + $0x9a8] sm:$0xff]
        %v721 = vld [vmem:[#allocation4 + $0x9b0] sm:$0xff]
        %v722 = vld [vmem:[#allocation4 + $0x9b8] sm:$0xff]
        %v723 = vld [vmem:[#allocation4 + $0x9c0] sm:$0xff]
        %v724 = vld [vmem:[#allocation4 + $0x9c8] sm:$0xff]
        %v725 = vld [vmem:[#allocation4 + $0x9d0] sm:$0xff]
        %v726 = vld [vmem:[#allocation4 + $0x9d8] sm:$0xff]
        %v727 = vld [vmem:[#allocation4 + $0x9e0] sm:$0xff]
        %v728 = vld [vmem:[#allocation4 + $0x9e8] sm:$0xff]
        %v729 = vld [vmem:[#allocation4 + $0x9f0] sm:$0xff]
        %v730 = vld [vmem:[#allocation4 + $0x9f8] sm:$0xff]
        %v731 = vld [vmem:[#allocation4 + $0xa00] sm:$0xff]
        %v732 = vld [vmem:[#allocation4 + $0xa08] sm:$0xff]
        %v733 = vld [vmem:[#allocation4 + $0xa10] sm:$0xff]
        %v734 = vld [vmem:[#allocation4 + $0xa18] sm:$0xff]
        %v735 = vld [vmem:[#allocation4 + $0xa20] sm:$0xff]
        %v736 = vld [vmem:[#allocation4 + $0xa28] sm:$0xff]
        %v737 = vld [vmem:[#allocation4 + $0xa30] sm:$0xff]
        %v738 = vld [vmem:[#allocation4 + $0xa38] sm:$0xff]
        %v739 = vld [vmem:[#allocation4 + $0xa40] sm:$0xff]
        %v740 = vld [vmem:[#allocation4 + $0xa48] sm:$0xff]
        %v741 = vld [vmem:[#allocation4 + $0xa50] sm:$0xff]
        %v742 = vld [vmem:[#allocation4 + $0xa58] sm:$0xff]
        %v743 = vld [vmem:[#allocation4 + $0xa60] sm:$0xff]
        %v744 = vld [vmem:[#allocation4 + $0xa68] sm:$0xff]
        %v745 = vld [vmem:[#allocation4 + $0xa70] sm:$0xff]
        %v746 = vld [vmem:[#allocation4 + $0xa78] sm:$0xff]
        %v747 = vld [vmem:[#allocation4 + $0xa80] sm:$0xff]
        %v748 = vld [vmem:[#allocation4 + $0xa88] sm:$0xff]
        %v749 = vld [vmem:[#allocation4 + $0xa90] sm:$0xff]
        %v750 = vld [vmem:[#allocation4 + $0xa98] sm:$0xff]
        %v751 = vld [vmem:[#allocation4 + $0xaa0] sm:$0xff]
        %v752 = vld [vmem:[#allocation4 + $0xaa8] sm:$0xff]
        %v753 = vld [vmem:[#allocation4 + $0xab0] sm:$0xff]
        %v754 = vld [vmem:[#allocation4 + $0xab8] sm:$0xff]
        %v755 = vld [vmem:[#allocation4 + $0xac0] sm:$0xff]
        %v756 = vld [vmem:[#allocation4 + $0xac8] sm:$0xff]
        %v757 = vld [vmem:[#allocation4 + $0xad0] sm:$0xff]
        %v758 = vld [vmem:[#allocation4 + $0xad8] sm:$0xff]
        %v759 = vld [vmem:[#allocation4 + $0xae0] sm:$0xff]
        %v760 = vld [vmem:[#allocation4 + $0xae8] sm:$0xff]
        %v761 = vld [vmem:[#allocation4 + $0xaf0] sm:$0xff]
        %v762 = vld [vmem:[#allocation4 + $0xaf8] sm:$0xff]
        %v763 = vld [vmem:[#allocation4 + $0xb00] sm:$0xff]
        %v764 = vld [vmem:[#allocation4 + $0xb08] sm:$0xff]
        %v765 = vld [vmem:[#allocation4 + $0xb10] sm:$0xff]
        %v766 = vld [vmem:[#allocation4 + $0xb18] sm:$0xff]
        %v767 = vld [vmem:[#allocation4 + $0xb20] sm:$0xff]
        %v768 = vld [vmem:[#allocation4 + $0xb28] sm:$0xff]
        %v769 = vld [vmem:[#allocation4 + $0xb30] sm:$0xff]
        %v770 = vld [vmem:[#allocation4 + $0xb38] sm:$0xff]
        %v771 = vld [vmem:[#allocation4 + $0xb40] sm:$0xff]
        %v772 = vld [vmem:[#allocation4 + $0xb48] sm:$0xff]
        %v773 = vld [vmem:[#allocation4 + $0xb50] sm:$0xff]
        %v774 = vld [vmem:[#allocation4 + $0xb58] sm:$0xff]
        %v775 = vld [vmem:[#allocation4 + $0xb60] sm:$0xff]
        %v776 = vld [vmem:[#allocation4 + $0xb68] sm:$0xff]
        %v777 = vld [vmem:[#allocation4 + $0xb70] sm:$0xff]
        %v778 = vld [vmem:[#allocation4 + $0xb78] sm:$0xff]
        %v779 = vld [vmem:[#allocation4 + $0xb80] sm:$0xff]
        %v780 = vld [vmem:[#allocation4 + $0xb88] sm:$0xff]
        %v781 = vld [vmem:[#allocation4 + $0xb90] sm:$0xff]
        %v782 = vld [vmem:[#allocation4 + $0xb98] sm:$0xff]
        %v783 = vld [vmem:[#allocation4 + $0xba0] sm:$0xff]
        %v784 = vld [vmem:[#allocation4 + $0xba8] sm:$0xff]
        %v785 = vld [vmem:[#allocation4 + $0xbb0] sm:$0xff]
        %v786 = vld [vmem:[#allocation4 + $0xbb8] sm:$0xff]
        %v787 = vld [vmem:[#allocation4 + $0xbc0] sm:$0xff]
        %v788 = vld [vmem:[#allocation4 + $0xbc8] sm:$0xff]
        %v789 = vld [vmem:[#allocation4 + $0xbd0] sm:$0xff]
        %v790 = vld [vmem:[#allocation4 + $0xbd8] sm:$0xff]
        %v791 = vld [vmem:[#allocation4 + $0xbe0] sm:$0xff]
        %v792 = vld [vmem:[#allocation4 + $0xbe8] sm:$0xff]
        %v793 = vld [vmem:[#allocation4 + $0xbf0] sm:$0xff]
        %v794 = vld [vmem:[#allocation4 + $0xbf8] sm:$0xff]
        %v795 = vld [vmem:[#allocation4 + $0xc00] sm:$0xff]
        %v796 = vld [vmem:[#allocation4 + $0xc08] sm:$0xff]
        %v797 = vld [vmem:[#allocation4 + $0xc10] sm:$0xff]
        %v798 = vld [vmem:[#allocation4 + $0xc18] sm:$0xff]
        %v799 = vld [vmem:[#allocation4 + $0xc20] sm:$0xff]
        %v800 = vld [vmem:[#allocation4 + $0xc28] sm:$0xff]
        %v801 = vld [vmem:[#allocation4 + $0xc30] sm:$0xff]
        %v802 = vld [vmem:[#allocation4 + $0xc38] sm:$0xff]
        %v803 = vld [vmem:[#allocation4 + $0xc40] sm:$0xff]
        %v804 = vld [vmem:[#allocation4 + $0xc48] sm:$0xff]
        %v805 = vld [vmem:[#allocation4 + $0xc50] sm:$0xff]
        %v806 = vld [vmem:[#allocation4 + $0xc58] sm:$0xff]
        %v807 = vld [vmem:[#allocation4 + $0xc60] sm:$0xff]
        %v808 = vld [vmem:[#allocation4 + $0xc68] sm:$0xff]
        %v809 = vld [vmem:[#allocation4 + $0xc70] sm:$0xff]
        %v810 = vld [vmem:[#allocation4 + $0xc78] sm:$0xff]
        %v811 = vld [vmem:[#allocation4 + $0xc80] sm:$0xff]
        %v812 = vld [vmem:[#allocation4 + $0xc88] sm:$0xff]
        %v813 = vld [vmem:[#allocation4 + $0xc90] sm:$0xff]
        %v814 = vld [vmem:[#allocation4 + $0xc98] sm:$0xff]
        %v815 = vld [vmem:[#allocation4 + $0xca0] sm:$0xff]
        %v816 = vld [vmem:[#allocation4 + $0xca8] sm:$0xff]
        %v817 = vld [vmem:[#allocation4 + $0xcb0] sm:$0xff]
        %v818 = vld [vmem:[#allocation4 + $0xcb8] sm:$0xff]
        %v819 = vld [vmem:[#allocation4 + $0xcc0] sm:$0xff]
        %v820 = vld [vmem:[#allocation4 + $0xcc8] sm:$0xff]
        %v821 = vld [vmem:[#allocation4 + $0xcd0] sm:$0xff]
        %v822 = vld [vmem:[#allocation4 + $0xcd8] sm:$0xff]
        %v823 = vld [vmem:[#allocation4 + $0xce0] sm:$0xff]
        %v824 = vld [vmem:[#allocation4 + $0xce8] sm:$0xff]
        %v825 = vld [vmem:[#allocation4 + $0xcf0] sm:$0xff]
        %v826 = vld [vmem:[#allocation4 + $0xcf8] sm:$0xff]
        %v827 = vld [vmem:[#allocation4 + $0xd00] sm:$0xff]
        %v828 = vld [vmem:[#allocation4 + $0xd08] sm:$0xff]
        %v829 = vld [vmem:[#allocation4 + $0xd10] sm:$0xff]
        %v830 = vld [vmem:[#allocation4 + $0xd18] sm:$0xff]
        %v831 = vld [vmem:[#allocation4 + $0xd20] sm:$0xff]
        %v832 = vld [vmem:[#allocation4 + $0xd28] sm:$0xff]
        %v833 = vld [vmem:[#allocation4 + $0xd30] sm:$0xff]
        %v834 = vld [vmem:[#allocation4 + $0xd38] sm:$0xff]
        %v835 = vld [vmem:[#allocation4 + $0xd40] sm:$0xff]
        %v836 = vld [vmem:[#allocation4 + $0xd48] sm:$0xff]
        %v837 = vld [vmem:[#allocation4 + $0xd50] sm:$0xff]
        %v838 = vld [vmem:[#allocation4 + $0xd58] sm:$0xff]
        %v839 = vld [vmem:[#allocation4 + $0xd60] sm:$0xff]
        %v840 = vld [vmem:[#allocation4 + $0xd68] sm:$0xff]
        %v841 = vld [vmem:[#allocation4 + $0xd70] sm:$0xff]
        %v842 = vld [vmem:[#allocation4 + $0xd78] sm:$0xff]
        %v843 = vld [vmem:[#allocation4 + $0xd80] sm:$0xff]
        %v844 = vld [vmem:[#allocation4 + $0xd88] sm:$0xff]
        %v845 = vld [vmem:[#allocation4 + $0xd90] sm:$0xff]
        %v846 = vld [vmem:[#allocation4 + $0xd98] sm:$0xff]
        %v847 = vld [vmem:[#allocation4 + $0xda0] sm:$0xff]
        %v848 = vld [vmem:[#allocation4 + $0xda8] sm:$0xff]
        %v849 = vld [vmem:[#allocation4 + $0xdb0] sm:$0xff]
        %v850 = vld [vmem:[#allocation4 + $0xdb8] sm:$0xff]
        %v851 = vld [vmem:[#allocation4 + $0xdc0] sm:$0xff]
        %v852 = vld [vmem:[#allocation4 + $0xdc8] sm:$0xff]
        %v853 = vld [vmem:[#allocation4 + $0xdd0] sm:$0xff]
        %v854 = vld [vmem:[#allocation4 + $0xdd8] sm:$0xff]
        %v855 = vld [vmem:[#allocation4 + $0xde0] sm:$0xff]
        %v856 = vld [vmem:[#allocation4 + $0xde8] sm:$0xff]
        %v857 = vld [vmem:[#allocation4 + $0xdf0] sm:$0xff]
        %v858 = vld [vmem:[#allocation4 + $0xdf8] sm:$0xff]
        %v859 = vld [vmem:[#allocation4 + $0xe00] sm:$0xff]
        %v860 = vld [vmem:[#allocation4 + $0xe08] sm:$0xff]
        %v861 = vld [vmem:[#allocation4 + $0xe10] sm:$0xff]
        %v862 = vld [vmem:[#allocation4 + $0xe18] sm:$0xff]
        %v863 = vld [vmem:[#allocation4 + $0xe20] sm:$0xff]
        %v864 = vld [vmem:[#allocation4 + $0xe28] sm:$0xff]
        %v865 = vld [vmem:[#allocation4 + $0xe30] sm:$0xff]
        %v866 = vld [vmem:[#allocation4 + $0xe38] sm:$0xff]
        %v867 = vld [vmem:[#allocation4 + $0xe40] sm:$0xff]
        %v868 = vld [vmem:[#allocation4 + $0xe48] sm:$0xff]
        %v869 = vld [vmem:[#allocation4 + $0xe50] sm:$0xff]
        %v870 = vld [vmem:[#allocation4 + $0xe58] sm:$0xff]
        %v871 = vld [vmem:[#allocation4 + $0xe60] sm:$0xff]
        %v872 = vld [vmem:[#allocation4 + $0xe68] sm:$0xff]
        %v873 = vld [vmem:[#allocation4 + $0xe70] sm:$0xff]
        %v874 = vld [vmem:[#allocation4 + $0xe78] sm:$0xff]
        %v875 = vld [vmem:[#allocation4 + $0xe80] sm:$0xff]
        %v876 = vld [vmem:[#allocation4 + $0xe88] sm:$0xff]
        %v877 = vld [vmem:[#allocation4 + $0xe90] sm:$0xff]
        %v878 = vld [vmem:[#allocation4 + $0xe98] sm:$0xff]
        %v879 = vld [vmem:[#allocation4 + $0xea0] sm:$0xff]
        %v880 = vld [vmem:[#allocation4 + $0xea8] sm:$0xff]
        %v881 = vld [vmem:[#allocation4 + $0xeb0] sm:$0xff]
        %v882 = vld [vmem:[#allocation4 + $0xeb8] sm:$0xff]
        %v883 = vld [vmem:[#allocation4 + $0xec0] sm:$0xff]
        %v884 = vld [vmem:[#allocation4 + $0xec8] sm:$0xff]
        %v885 = vld [vmem:[#allocation4 + $0xed0] sm:$0xff]
        %v886 = vld [vmem:[#allocation4 + $0xed8] sm:$0xff]
        %v887 = vld [vmem:[#allocation4 + $0xee0] sm:$0xff]
        %v888 = vld [vmem:[#allocation4 + $0xee8] sm:$0xff]
        %v889 = vld [vmem:[#allocation4 + $0xef0] sm:$0xff]
        %v890 = vld [vmem:[#allocation4 + $0xef8] sm:$0xff]
        %v891 = vld [vmem:[#allocation4 + $0xf00] sm:$0xff]
        %v892 = vld [vmem:[#allocation4 + $0xf08] sm:$0xff]
        %v893 = vld [vmem:[#allocation4 + $0xf10] sm:$0xff]
        %v894 = vld [vmem:[#allocation4 + $0xf18] sm:$0xff]
        %v895 = vld [vmem:[#allocation4 + $0xf20] sm:$0xff]
        %v896 = vld [vmem:[#allocation4 + $0xf28] sm:$0xff]
        %v897 = vld [vmem:[#allocation4 + $0xf30] sm:$0xff]
        %v898 = vld [vmem:[#allocation4 + $0xf38] sm:$0xff]
        %v899 = vld [vmem:[#allocation4 + $0xf40] sm:$0xff]
        %v900 = vld [vmem:[#allocation4 + $0xf48] sm:$0xff]
        %v901 = vld [vmem:[#allocation4 + $0xf50] sm:$0xff]
        %v902 = vld [vmem:[#allocation4 + $0xf58] sm:$0xff]
        %v903 = vld [vmem:[#allocation4 + $0xf60] sm:$0xff]
        %v904 = vld [vmem:[#allocation4 + $0xf68] sm:$0xff]
        %v905 = vld [vmem:[#allocation4 + $0xf70] sm:$0xff]
        %v906 = vld [vmem:[#allocation4 + $0xf78] sm:$0xff]
        %v907 = vld [vmem:[#allocation4 + $0xf80] sm:$0xff]
        %v908 = vld [vmem:[#allocation4 + $0xf88] sm:$0xff]
        %v909 = vld [vmem:[#allocation4 + $0xf90] sm:$0xff]
        %v910 = vld [vmem:[#allocation4 + $0xf98] sm:$0xff]
        %v911 = vld [vmem:[#allocation4 + $0xfa0] sm:$0xff]
        %v912 = vld [vmem:[#allocation4 + $0xfa8] sm:$0xff]
        %v913 = vld [vmem:[#allocation4 + $0xfb0] sm:$0xff]
        %v914 = vld [vmem:[#allocation4 + $0xfb8] sm:$0xff]
        %v915 = vld [vmem:[#allocation4 + $0xfc0] sm:$0xff]
        %v916 = vld [vmem:[#allocation4 + $0xfc8] sm:$0xff]
        %v917 = vld [vmem:[#allocation4 + $0xfd0] sm:$0xff]
        %v918 = vld [vmem:[#allocation4 + $0xfd8] sm:$0xff]
        %v919 = vld [vmem:[#allocation4 + $0xfe0] sm:$0xff]
        %v920 = vld [vmem:[#allocation4 + $0xfe8] sm:$0xff]
        %v921 = vld [vmem:[#allocation4 + $0xff0] sm:$0xff]
        %v922 = vld [vmem:[#allocation4 + $0xff8] sm:$0xff]
        %v923 = vld [vmem:[#allocation6] sm:$0xf]
        %v925 = vperm.slane %v923, 0
        %v926 = vperm.slane %v923, 1
        %v927 = vperm.slane %v923, 2
        %v928 = vperm.slane %v923, 3
        %933 = vmatpush.msra.mxu0 %v471
        %934 = vmatpush.msra.mxu0 %v467
        %935 = vmatpush.msra.mxu0 %v463
        %936 = vmatpush.msra.mxu0 %v459
        %937 = vmatpush.msra.mxu0 %v455
        %938 = vmatpush.msra.mxu0 %v451
        %939 = vmatpush.msra.mxu0 %v447
        %940 = vmatpush.msra.mxu0 %v443
        %941 = vmatpush.msra.mxu0 %v439
        %942 = vmatpush.msra.mxu0 %v435
        %943 = vmatpush.msra.mxu0 %v431
        %944 = vmatpush.msra.mxu0 %v427
        %945 = vmatpush.msra.mxu0 %v423
        %946 = vmatpush.msra.mxu0 %v419
        %947 = vmatpush.msra.mxu0 %v415
        %948 = vmatpush.msra.mxu0 %v411
        %949 = vmatmul.f32.gmra.mxu0 %v323
        %v950 = vpop.f32.mrf.mxu0
        %v951 = vadd.f32 %v925, %v950
        %952 = vmatmul.f32.gmra.mxu0 %v331
        %v953 = vpop.f32.mrf.mxu0
        %v954 = vadd.f32 %v925, %v953
        %955 = vmatmul.f32.gmra.mxu0 %v339
        %v956 = vpop.f32.mrf.mxu0
        %v957 = vadd.f32 %v925, %v956
        %958 = vmatmul.f32.gmra.mxu0 %v347
        %v959 = vpop.f32.mrf.mxu0
        %v960 = vadd.f32 %v925, %v959
        %961 = vmatmul.f32.gmra.mxu0 %v355
        %v962 = vpop.f32.mrf.mxu0
        %v963 = vadd.f32 %v925, %v962
        %964 = vmatmul.f32.gmra.mxu0 %v363
        %v965 = vpop.f32.mrf.mxu0
        %v966 = vadd.f32 %v925, %v965
        %967 = vmatmul.f32.gmra.mxu0 %v371
        %v968 = vpop.f32.mrf.mxu0
        %v969 = vadd.f32 %v925, %v968
        %970 = vmatmul.f32.gmra.mxu0 %v379
        %v971 = vpop.f32.mrf.mxu0
        %v972 = vadd.f32 %v925, %v971
        %973 = vmatmul.f32.gmra.mxu0 %v387
        %v974 = vpop.f32.mrf.mxu0
        %v975 = vadd.f32 %v925, %v974
        %976 = vmatmul.f32.gmra.mxu0 %v395
        %v977 = vpop.f32.mrf.mxu0
        %v978 = vadd.f32 %v925, %v977
        %979 = vmatmul.f32.gmra.mxu0 %v403
        %v980 = vpop.f32.mrf.mxu0
        %v981 = vadd.f32 %v925, %v980
        %982 = vdwg.mxu0
        %983 = vmatpush.msra.mxu0 %v535
        %984 = vmatpush.msra.mxu0 %v531
        %985 = vmatpush.msra.mxu0 %v527
        %986 = vmatpush.msra.mxu0 %v523
        %987 = vmatpush.msra.mxu0 %v519
        %988 = vmatpush.msra.mxu0 %v515
        %989 = vmatpush.msra.mxu0 %v511
        %990 = vmatpush.msra.mxu0 %v507
        %991 = vmatpush.msra.mxu0 %v503
        %992 = vmatpush.msra.mxu0 %v499
        %993 = vmatpush.msra.mxu0 %v495
        %994 = vmatpush.msra.mxu0 %v491
        %995 = vmatpush.msra.mxu0 %v487
        %996 = vmatpush.msra.mxu0 %v483
        %997 = vmatpush.msra.mxu0 %v479
        %998 = vmatpush.msra.mxu0 %v475
        %999 = vmatmul.f32.gmra.mxu0 %v324
        %v1000 = vpop.f32.mrf.mxu0
        %v1001 = vadd.f32 %v951, %v1000
        %1002 = vmatmul.f32.gmra.mxu0 %v332
        %v1003 = vpop.f32.mrf.mxu0
        %v1004 = vadd.f32 %v954, %v1003
        %1005 = vmatmul.f32.gmra.mxu0 %v340
        %v1006 = vpop.f32.mrf.mxu0
        %v1007 = vadd.f32 %v957, %v1006
        %1008 = vmatmul.f32.gmra.mxu0 %v348
        %v1009 = vpop.f32.mrf.mxu0
        %v1010 = vadd.f32 %v960, %v1009
        %1011 = vmatmul.f32.gmra.mxu0 %v356
        %v1012 = vpop.f32.mrf.mxu0
        %v1013 = vadd.f32 %v963, %v1012
        %1014 = vmatmul.f32.gmra.mxu0 %v364
        %v1015 = vpop.f32.mrf.mxu0
        %v1016 = vadd.f32 %v966, %v1015
        %1017 = vmatmul.f32.gmra.mxu0 %v372
        %v1018 = vpop.f32.mrf.mxu0
        %v1019 = vadd.f32 %v969, %v1018
        %1020 = vmatmul.f32.gmra.mxu0 %v380
        %v1021 = vpop.f32.mrf.mxu0
        %v1022 = vadd.f32 %v972, %v1021
        %1023 = vmatmul.f32.gmra.mxu0 %v388
        %v1024 = vpop.f32.mrf.mxu0
        %v1025 = vadd.f32 %v975, %v1024
        %1026 = vmatmul.f32.gmra.mxu0 %v396
        %v1027 = vpop.f32.mrf.mxu0
        %v1028 = vadd.f32 %v978, %v1027
        %1029 = vmatmul.f32.gmra.mxu0 %v404
        %v1030 = vpop.f32.mrf.mxu0
        %v1031 = vadd.f32 %v981, %v1030
        %1032 = vdwg.mxu0
        %1033 = vmatpush.msra.mxu0 %v599
        %1034 = vmatpush.msra.mxu0 %v595
        %1035 = vmatpush.msra.mxu0 %v591
        %1036 = vmatpush.msra.mxu0 %v587
        %1037 = vmatpush.msra.mxu0 %v583
        %1038 = vmatpush.msra.mxu0 %v579
        %1039 = vmatpush.msra.mxu0 %v575
        %1040 = vmatpush.msra.mxu0 %v571
        %1041 = vmatpush.msra.mxu0 %v567
        %1042 = vmatpush.msra.mxu0 %v563
        %1043 = vmatpush.msra.mxu0 %v559
        %1044 = vmatpush.msra.mxu0 %v555
        %1045 = vmatpush.msra.mxu0 %v551
        %1046 = vmatpush.msra.mxu0 %v547
        %1047 = vmatpush.msra.mxu0 %v543
        %1048 = vmatpush.msra.mxu0 %v539
        %1049 = vmatmul.f32.gmra.mxu0 %v325
        %v1050 = vpop.f32.mrf.mxu0
        %v1051 = vadd.f32 %v1001, %v1050
        %1052 = vmatmul.f32.gmra.mxu0 %v333
        %v1053 = vpop.f32.mrf.mxu0
        %v1054 = vadd.f32 %v1004, %v1053
        %1055 = vmatmul.f32.gmra.mxu0 %v341
        %v1056 = vpop.f32.mrf.mxu0
        %v1057 = vadd.f32 %v1007, %v1056
        %1058 = vmatmul.f32.gmra.mxu0 %v349
        %v1059 = vpop.f32.mrf.mxu0
        %v1060 = vadd.f32 %v1010, %v1059
        %1061 = vmatmul.f32.gmra.mxu0 %v357
        %v1062 = vpop.f32.mrf.mxu0
        %v1063 = vadd.f32 %v1013, %v1062
        %1064 = vmatmul.f32.gmra.mxu0 %v365
        %v1065 = vpop.f32.mrf.mxu0
        %v1066 = vadd.f32 %v1016, %v1065
        %1067 = vmatmul.f32.gmra.mxu0 %v373
        %v1068 = vpop.f32.mrf.mxu0
        %v1069 = vadd.f32 %v1019, %v1068
        %1070 = vmatmul.f32.gmra.mxu0 %v381
        %v1071 = vpop.f32.mrf.mxu0
        %v1072 = vadd.f32 %v1022, %v1071
        %1073 = vmatmul.f32.gmra.mxu0 %v389
        %v1074 = vpop.f32.mrf.mxu0
        %v1075 = vadd.f32 %v1025, %v1074
        %1076 = vmatmul.f32.gmra.mxu0 %v397
        %v1077 = vpop.f32.mrf.mxu0
        %v1078 = vadd.f32 %v1028, %v1077
        %1079 = vmatmul.f32.gmra.mxu0 %v405
        %v1080 = vpop.f32.mrf.mxu0
        %v1081 = vadd.f32 %v1031, %v1080
        %1082 = vdwg.mxu0
        %1083 = vmatpush.msra.mxu0 %v663
        %1084 = vmatpush.msra.mxu0 %v659
        %1085 = vmatpush.msra.mxu0 %v655
        %1086 = vmatpush.msra.mxu0 %v651
        %1087 = vmatpush.msra.mxu0 %v647
        %1088 = vmatpush.msra.mxu0 %v643
        %1089 = vmatpush.msra.mxu0 %v639
        %1090 = vmatpush.msra.mxu0 %v635
        %1091 = vmatpush.msra.mxu0 %v631
        %1092 = vmatpush.msra.mxu0 %v627
        %1093 = vmatpush.msra.mxu0 %v623
        %1094 = vmatpush.msra.mxu0 %v619
        %1095 = vmatpush.msra.mxu0 %v615
        %1096 = vmatpush.msra.mxu0 %v611
        %1097 = vmatpush.msra.mxu0 %v607
        %1098 = vmatpush.msra.mxu0 %v603
        %1099 = vmatmul.f32.gmra.mxu0 %v326
        %v1100 = vpop.f32.mrf.mxu0
        %v1101 = vadd.f32 %v1051, %v1100
        %1102 = vmatmul.f32.gmra.mxu0 %v334
        %v1103 = vpop.f32.mrf.mxu0
        %v1104 = vadd.f32 %v1054, %v1103
        %1105 = vmatmul.f32.gmra.mxu0 %v342
        %v1106 = vpop.f32.mrf.mxu0
        %v1107 = vadd.f32 %v1057, %v1106
        %1108 = vmatmul.f32.gmra.mxu0 %v350
        %v1109 = vpop.f32.mrf.mxu0
        %v1110 = vadd.f32 %v1060, %v1109
        %1111 = vmatmul.f32.gmra.mxu0 %v358
        %v1112 = vpop.f32.mrf.mxu0
        %v1113 = vadd.f32 %v1063, %v1112
        %1114 = vmatmul.f32.gmra.mxu0 %v366
        %v1115 = vpop.f32.mrf.mxu0
        %v1116 = vadd.f32 %v1066, %v1115
        %1117 = vmatmul.f32.gmra.mxu0 %v374
        %v1118 = vpop.f32.mrf.mxu0
        %v1119 = vadd.f32 %v1069, %v1118
        %1120 = vmatmul.f32.gmra.mxu0 %v382
        %v1121 = vpop.f32.mrf.mxu0
        %v1122 = vadd.f32 %v1072, %v1121
        %1123 = vmatmul.f32.gmra.mxu0 %v390
        %v1124 = vpop.f32.mrf.mxu0
        %v1125 = vadd.f32 %v1075, %v1124
        %1126 = vmatmul.f32.gmra.mxu0 %v398
        %v1127 = vpop.f32.mrf.mxu0
        %v1128 = vadd.f32 %v1078, %v1127
        %1129 = vmatmul.f32.gmra.mxu0 %v406
        %v1130 = vpop.f32.mrf.mxu0
        %v1131 = vadd.f32 %v1081, %v1130
        %1132 = vdwg.mxu0
        %1133 = vmatpush.msra.mxu0 %v727
        %1134 = vmatpush.msra.mxu0 %v723
        %1135 = vmatpush.msra.mxu0 %v719
        %1136 = vmatpush.msra.mxu0 %v715
        %1137 = vmatpush.msra.mxu0 %v711
        %1138 = vmatpush.msra.mxu0 %v707
        %1139 = vmatpush.msra.mxu0 %v703
        %1140 = vmatpush.msra.mxu0 %v699
        %1141 = vmatpush.msra.mxu0 %v695
        %1142 = vmatpush.msra.mxu0 %v691
        %1143 = vmatpush.msra.mxu0 %v687
        %1144 = vmatpush.msra.mxu0 %v683
        %1145 = vmatpush.msra.mxu0 %v679
        %1146 = vmatpush.msra.mxu0 %v675
        %1147 = vmatpush.msra.mxu0 %v671
        %1148 = vmatpush.msra.mxu0 %v667
        %1149 = vmatmul.f32.gmra.mxu0 %v327
        %v1150 = vpop.f32.mrf.mxu0
        %v1151 = vadd.f32 %v1101, %v1150
        %1152 = vmatmul.f32.gmra.mxu0 %v335
        %v1153 = vpop.f32.mrf.mxu0
        %v1154 = vadd.f32 %v1104, %v1153
        %1155 = vmatmul.f32.gmra.mxu0 %v343
        %v1156 = vpop.f32.mrf.mxu0
        %v1157 = vadd.f32 %v1107, %v1156
        %1158 = vmatmul.f32.gmra.mxu0 %v351
        %v1159 = vpop.f32.mrf.mxu0
        %v1160 = vadd.f32 %v1110, %v1159
        %1161 = vmatmul.f32.gmra.mxu0 %v359
        %v1162 = vpop.f32.mrf.mxu0
        %v1163 = vadd.f32 %v1113, %v1162
        %1164 = vmatmul.f32.gmra.mxu0 %v367
        %v1165 = vpop.f32.mrf.mxu0
        %v1166 = vadd.f32 %v1116, %v1165
        %1167 = vmatmul.f32.gmra.mxu0 %v375
        %v1168 = vpop.f32.mrf.mxu0
        %v1169 = vadd.f32 %v1119, %v1168
        %1170 = vmatmul.f32.gmra.mxu0 %v383
        %v1171 = vpop.f32.mrf.mxu0
        %v1172 = vadd.f32 %v1122, %v1171
        %1173 = vmatmul.f32.gmra.mxu0 %v391
        %v1174 = vpop.f32.mrf.mxu0
        %v1175 = vadd.f32 %v1125, %v1174
        %1176 = vmatmul.f32.gmra.mxu0 %v399
        %v1177 = vpop.f32.mrf.mxu0
        %v1178 = vadd.f32 %v1128, %v1177
        %1179 = vmatmul.f32.gmra.mxu0 %v407
        %v1180 = vpop.f32.mrf.mxu0
        %v1181 = vadd.f32 %v1131, %v1180
        %1182 = vdwg.mxu0
        %1183 = vmatpush.msra.mxu0 %v791
        %1184 = vmatpush.msra.mxu0 %v787
        %1185 = vmatpush.msra.mxu0 %v783
        %1186 = vmatpush.msra.mxu0 %v779
        %1187 = vmatpush.msra.mxu0 %v775
        %1188 = vmatpush.msra.mxu0 %v771
        %1189 = vmatpush.msra.mxu0 %v767
        %1190 = vmatpush.msra.mxu0 %v763
        %1191 = vmatpush.msra.mxu0 %v759
        %1192 = vmatpush.msra.mxu0 %v755
        %1193 = vmatpush.msra.mxu0 %v751
        %1194 = vmatpush.msra.mxu0 %v747
        %1195 = vmatpush.msra.mxu0 %v743
        %1196 = vmatpush.msra.mxu0 %v739
        %1197 = vmatpush.msra.mxu0 %v735
        %1198 = vmatpush.msra.mxu0 %v731
        %1199 = vmatmul.f32.gmra.mxu0 %v328
        %v1200 = vpop.f32.mrf.mxu0
        %v1201 = vadd.f32 %v1151, %v1200
        %1202 = vmatmul.f32.gmra.mxu0 %v336
        %v1203 = vpop.f32.mrf.mxu0
        %v1204 = vadd.f32 %v1154, %v1203
        %1205 = vmatmul.f32.gmra.mxu0 %v344
        %v1206 = vpop.f32.mrf.mxu0
        %v1207 = vadd.f32 %v1157, %v1206
        %1208 = vmatmul.f32.gmra.mxu0 %v352
        %v1209 = vpop.f32.mrf.mxu0
        %v1210 = vadd.f32 %v1160, %v1209
        %1211 = vmatmul.f32.gmra.mxu0 %v360
        %v1212 = vpop.f32.mrf.mxu0
        %v1213 = vadd.f32 %v1163, %v1212
        %1214 = vmatmul.f32.gmra.mxu0 %v368
        %v1215 = vpop.f32.mrf.mxu0
        %v1216 = vadd.f32 %v1166, %v1215
        %1217 = vmatmul.f32.gmra.mxu0 %v376
        %v1218 = vpop.f32.mrf.mxu0
        %v1219 = vadd.f32 %v1169, %v1218
        %1220 = vmatmul.f32.gmra.mxu0 %v384
        %v1221 = vpop.f32.mrf.mxu0
        %v1222 = vadd.f32 %v1172, %v1221
        %1223 = vmatmul.f32.gmra.mxu0 %v392
        %v1224 = vpop.f32.mrf.mxu0
        %v1225 = vadd.f32 %v1175, %v1224
        %1226 = vmatmul.f32.gmra.mxu0 %v400
        %v1227 = vpop.f32.mrf.mxu0
        %v1228 = vadd.f32 %v1178, %v1227
        %1229 = vmatmul.f32.gmra.mxu0 %v408
        %v1230 = vpop.f32.mrf.mxu0
        %v1231 = vadd.f32 %v1181, %v1230
        %1232 = vdwg.mxu0
        %1233 = vmatpush.msra.mxu0 %v855
        %1234 = vmatpush.msra.mxu0 %v851
        %1235 = vmatpush.msra.mxu0 %v847
        %1236 = vmatpush.msra.mxu0 %v843
        %1237 = vmatpush.msra.mxu0 %v839
        %1238 = vmatpush.msra.mxu0 %v835
        %1239 = vmatpush.msra.mxu0 %v831
        %1240 = vmatpush.msra.mxu0 %v827
        %1241 = vmatpush.msra.mxu0 %v823
        %1242 = vmatpush.msra.mxu0 %v819
        %1243 = vmatpush.msra.mxu0 %v815
        %1244 = vmatpush.msra.mxu0 %v811
        %1245 = vmatpush.msra.mxu0 %v807
        %1246 = vmatpush.msra.mxu0 %v803
        %1247 = vmatpush.msra.mxu0 %v799
        %1248 = vmatpush.msra.mxu0 %v795
        %1249 = vmatmul.f32.gmra.mxu0 %v329
        %v1250 = vpop.f32.mrf.mxu0
        %v1251 = vadd.f32 %v1201, %v1250
        %1252 = vmatmul.f32.gmra.mxu0 %v337
        %v1253 = vpop.f32.mrf.mxu0
        %v1254 = vadd.f32 %v1204, %v1253
        %1255 = vmatmul.f32.gmra.mxu0 %v345
        %v1256 = vpop.f32.mrf.mxu0
        %v1257 = vadd.f32 %v1207, %v1256
        %1258 = vmatmul.f32.gmra.mxu0 %v353
        %v1259 = vpop.f32.mrf.mxu0
        %v1260 = vadd.f32 %v1210, %v1259
        %1261 = vmatmul.f32.gmra.mxu0 %v361
        %v1262 = vpop.f32.mrf.mxu0
        %v1263 = vadd.f32 %v1213, %v1262
        %1264 = vmatmul.f32.gmra.mxu0 %v369
        %v1265 = vpop.f32.mrf.mxu0
        %v1266 = vadd.f32 %v1216, %v1265
        %1267 = vmatmul.f32.gmra.mxu0 %v377
        %v1268 = vpop.f32.mrf.mxu0
        %v1269 = vadd.f32 %v1219, %v1268
        %1270 = vmatmul.f32.gmra.mxu0 %v385
        %v1271 = vpop.f32.mrf.mxu0
        %v1272 = vadd.f32 %v1222, %v1271
        %1273 = vmatmul.f32.gmra.mxu0 %v393
        %v1274 = vpop.f32.mrf.mxu0
        %v1275 = vadd.f32 %v1225, %v1274
        %1276 = vmatmul.f32.gmra.mxu0 %v401
        %v1277 = vpop.f32.mrf.mxu0
        %v1278 = vadd.f32 %v1228, %v1277
        %1279 = vmatmul.f32.gmra.mxu0 %v409
        %v1280 = vpop.f32.mrf.mxu0
        %v1281 = vadd.f32 %v1231, %v1280
        %1282 = vdwg.mxu0
        %1283 = vmatpush.msra.mxu0 %v919
        %1284 = vmatpush.msra.mxu0 %v915
        %1285 = vmatpush.msra.mxu0 %v911
        %1286 = vmatpush.msra.mxu0 %v907
        %1287 = vmatpush.msra.mxu0 %v903
        %1288 = vmatpush.msra.mxu0 %v899
        %1289 = vmatpush.msra.mxu0 %v895
        %1290 = vmatpush.msra.mxu0 %v891
        %1291 = vmatpush.msra.mxu0 %v887
        %1292 = vmatpush.msra.mxu0 %v883
        %1293 = vmatpush.msra.mxu0 %v879
        %1294 = vmatpush.msra.mxu0 %v875
        %1295 = vmatpush.msra.mxu0 %v871
        %1296 = vmatpush.msra.mxu0 %v867
        %1297 = vmatpush.msra.mxu0 %v863
        %1298 = vmatpush.msra.mxu0 %v859
        %1299 = vmatmul.f32.gmra.mxu0 %v330
        %v1300 = vpop.f32.mrf.mxu0
        %v1301 = vadd.f32 %v1251, %v1300
        %1302 = vmatmul.f32.gmra.mxu0 %v338
        %v1303 = vpop.f32.mrf.mxu0
        %v1304 = vadd.f32 %v1254, %v1303
        %1305 = vmatmul.f32.gmra.mxu0 %v346
        %v1306 = vpop.f32.mrf.mxu0
        %v1307 = vadd.f32 %v1257, %v1306
        %1308 = vmatmul.f32.gmra.mxu0 %v354
        %v1309 = vpop.f32.mrf.mxu0
        %v1310 = vadd.f32 %v1260, %v1309
        %1311 = vmatmul.f32.gmra.mxu0 %v362
        %v1312 = vpop.f32.mrf.mxu0
        %v1313 = vadd.f32 %v1263, %v1312
        %1314 = vmatmul.f32.gmra.mxu0 %v370
        %v1315 = vpop.f32.mrf.mxu0
        %v1316 = vadd.f32 %v1266, %v1315
        %1317 = vmatmul.f32.gmra.mxu0 %v378
        %v1318 = vpop.f32.mrf.mxu0
        %v1319 = vadd.f32 %v1269, %v1318
        %1320 = vmatmul.f32.gmra.mxu0 %v386
        %v1321 = vpop.f32.mrf.mxu0
        %v1322 = vadd.f32 %v1272, %v1321
        %1323 = vmatmul.f32.gmra.mxu0 %v394
        %v1324 = vpop.f32.mrf.mxu0
        %v1325 = vadd.f32 %v1275, %v1324
        %1326 = vmatmul.f32.gmra.mxu0 %v402
        %v1327 = vpop.f32.mrf.mxu0
        %v1328 = vadd.f32 %v1278, %v1327
        %1329 = vmatmul.f32.gmra.mxu0 %v410
        %v1330 = vpop.f32.mrf.mxu0
        %v1331 = vadd.f32 %v1281, %v1330
        %1332 = vdwg.mxu0
        %1333 = vmatpush.msra.mxu0 %v472
        %1334 = vmatpush.msra.mxu0 %v468
        %1335 = vmatpush.msra.mxu0 %v464
        %1336 = vmatpush.msra.mxu0 %v460
        %1337 = vmatpush.msra.mxu0 %v456
        %1338 = vmatpush.msra.mxu0 %v452
        %1339 = vmatpush.msra.mxu0 %v448
        %1340 = vmatpush.msra.mxu0 %v444
        %1341 = vmatpush.msra.mxu0 %v440
        %1342 = vmatpush.msra.mxu0 %v436
        %1343 = vmatpush.msra.mxu0 %v432
        %1344 = vmatpush.msra.mxu0 %v428
        %1345 = vmatpush.msra.mxu0 %v424
        %1346 = vmatpush.msra.mxu0 %v420
        %1347 = vmatpush.msra.mxu0 %v416
        %1348 = vmatpush.msra.mxu0 %v412
        %1349 = vmatmul.f32.gmra.mxu0 %v323
        %v1350 = vpop.f32.mrf.mxu0
        %v1351 = vadd.f32 %v926, %v1350
        %1352 = vmatmul.f32.gmra.mxu0 %v331
        %v1353 = vpop.f32.mrf.mxu0
        %v1354 = vadd.f32 %v926, %v1353
        %1355 = vmatmul.f32.gmra.mxu0 %v339
        %v1356 = vpop.f32.mrf.mxu0
        %v1357 = vadd.f32 %v926, %v1356
        %1358 = vmatmul.f32.gmra.mxu0 %v347
        %v1359 = vpop.f32.mrf.mxu0
        %v1360 = vadd.f32 %v926, %v1359
        %1361 = vmatmul.f32.gmra.mxu0 %v355
        %v1362 = vpop.f32.mrf.mxu0
        %v1363 = vadd.f32 %v926, %v1362
        %1364 = vmatmul.f32.gmra.mxu0 %v363
        %v1365 = vpop.f32.mrf.mxu0
        %v1366 = vadd.f32 %v926, %v1365
        %1367 = vmatmul.f32.gmra.mxu0 %v371
        %v1368 = vpop.f32.mrf.mxu0
        %v1369 = vadd.f32 %v926, %v1368
        %1370 = vmatmul.f32.gmra.mxu0 %v379
        %v1371 = vpop.f32.mrf.mxu0
        %v1372 = vadd.f32 %v926, %v1371
        %1373 = vmatmul.f32.gmra.mxu0 %v387
        %v1374 = vpop.f32.mrf.mxu0
        %v1375 = vadd.f32 %v926, %v1374
        %1376 = vmatmul.f32.gmra.mxu0 %v395
        %v1377 = vpop.f32.mrf.mxu0
        %v1378 = vadd.f32 %v926, %v1377
        %1379 = vmatmul.f32.gmra.mxu0 %v403
        %v1380 = vpop.f32.mrf.mxu0
        %v1381 = vadd.f32 %v926, %v1380
        %1382 = vdwg.mxu0
        %1383 = vmatpush.msra.mxu0 %v536
        %1384 = vmatpush.msra.mxu0 %v532
        %1385 = vmatpush.msra.mxu0 %v528
        %1386 = vmatpush.msra.mxu0 %v524
        %1387 = vmatpush.msra.mxu0 %v520
        %1388 = vmatpush.msra.mxu0 %v516
        %1389 = vmatpush.msra.mxu0 %v512
        %1390 = vmatpush.msra.mxu0 %v508
        %1391 = vmatpush.msra.mxu0 %v504
        %1392 = vmatpush.msra.mxu0 %v500
        %1393 = vmatpush.msra.mxu0 %v496
        %1394 = vmatpush.msra.mxu0 %v492
        %1395 = vmatpush.msra.mxu0 %v488
        %1396 = vmatpush.msra.mxu0 %v484
        %1397 = vmatpush.msra.mxu0 %v480
        %1398 = vmatpush.msra.mxu0 %v476
        %1399 = vmatmul.f32.gmra.mxu0 %v324
        %v1400 = vpop.f32.mrf.mxu0
        %v1401 = vadd.f32 %v1351, %v1400
        %1402 = vmatmul.f32.gmra.mxu0 %v332
        %v1403 = vpop.f32.mrf.mxu0
        %v1404 = vadd.f32 %v1354, %v1403
        %1405 = vmatmul.f32.gmra.mxu0 %v340
        %v1406 = vpop.f32.mrf.mxu0
        %v1407 = vadd.f32 %v1357, %v1406
        %1408 = vmatmul.f32.gmra.mxu0 %v348
        %v1409 = vpop.f32.mrf.mxu0
        %v1410 = vadd.f32 %v1360, %v1409
        %1411 = vmatmul.f32.gmra.mxu0 %v356
        %v1412 = vpop.f32.mrf.mxu0
        %v1413 = vadd.f32 %v1363, %v1412
        %1414 = vmatmul.f32.gmra.mxu0 %v364
        %v1415 = vpop.f32.mrf.mxu0
        %v1416 = vadd.f32 %v1366, %v1415
        %1417 = vmatmul.f32.gmra.mxu0 %v372
        %v1418 = vpop.f32.mrf.mxu0
        %v1419 = vadd.f32 %v1369, %v1418
        %1420 = vmatmul.f32.gmra.mxu0 %v380
        %v1421 = vpop.f32.mrf.mxu0
        %v1422 = vadd.f32 %v1372, %v1421
        %1423 = vmatmul.f32.gmra.mxu0 %v388
        %v1424 = vpop.f32.mrf.mxu0
        %v1425 = vadd.f32 %v1375, %v1424
        %1426 = vmatmul.f32.gmra.mxu0 %v396
        %v1427 = vpop.f32.mrf.mxu0
        %v1428 = vadd.f32 %v1378, %v1427
        %1429 = vmatmul.f32.gmra.mxu0 %v404
        %v1430 = vpop.f32.mrf.mxu0
        %v1431 = vadd.f32 %v1381, %v1430
        %1432 = vdwg.mxu0
        %1433 = vmatpush.msra.mxu0 %v600
        %1434 = vmatpush.msra.mxu0 %v596
        %1435 = vmatpush.msra.mxu0 %v592
        %1436 = vmatpush.msra.mxu0 %v588
        %1437 = vmatpush.msra.mxu0 %v584
        %1438 = vmatpush.msra.mxu0 %v580
        %1439 = vmatpush.msra.mxu0 %v576
        %1440 = vmatpush.msra.mxu0 %v572
        %1441 = vmatpush.msra.mxu0 %v568
        %1442 = vmatpush.msra.mxu0 %v564
        %1443 = vmatpush.msra.mxu0 %v560
        %1444 = vmatpush.msra.mxu0 %v556
        %1445 = vmatpush.msra.mxu0 %v552
        %1446 = vmatpush.msra.mxu0 %v548
        %1447 = vmatpush.msra.mxu0 %v544
        %1448 = vmatpush.msra.mxu0 %v540
        %1449 = vmatmul.f32.gmra.mxu0 %v325
        %v1450 = vpop.f32.mrf.mxu0
        %v1451 = vadd.f32 %v1401, %v1450
        %1452 = vmatmul.f32.gmra.mxu0 %v333
        %v1453 = vpop.f32.mrf.mxu0
        %v1454 = vadd.f32 %v1404, %v1453
        %1455 = vmatmul.f32.gmra.mxu0 %v341
        %v1456 = vpop.f32.mrf.mxu0
        %v1457 = vadd.f32 %v1407, %v1456
        %1458 = vmatmul.f32.gmra.mxu0 %v349
        %v1459 = vpop.f32.mrf.mxu0
        %v1460 = vadd.f32 %v1410, %v1459
        %1461 = vmatmul.f32.gmra.mxu0 %v357
        %v1462 = vpop.f32.mrf.mxu0
        %v1463 = vadd.f32 %v1413, %v1462
        %1464 = vmatmul.f32.gmra.mxu0 %v365
        %v1465 = vpop.f32.mrf.mxu0
        %v1466 = vadd.f32 %v1416, %v1465
        %1467 = vmatmul.f32.gmra.mxu0 %v373
        %v1468 = vpop.f32.mrf.mxu0
        %v1469 = vadd.f32 %v1419, %v1468
        %1470 = vmatmul.f32.gmra.mxu0 %v381
        %v1471 = vpop.f32.mrf.mxu0
        %v1472 = vadd.f32 %v1422, %v1471
        %1473 = vmatmul.f32.gmra.mxu0 %v389
        %v1474 = vpop.f32.mrf.mxu0
        %v1475 = vadd.f32 %v1425, %v1474
        %1476 = vmatmul.f32.gmra.mxu0 %v397
        %v1477 = vpop.f32.mrf.mxu0
        %v1478 = vadd.f32 %v1428, %v1477
        %1479 = vmatmul.f32.gmra.mxu0 %v405
        %v1480 = vpop.f32.mrf.mxu0
        %v1481 = vadd.f32 %v1431, %v1480
        %1482 = vdwg.mxu0
        %1483 = vmatpush.msra.mxu0 %v664
        %1484 = vmatpush.msra.mxu0 %v660
        %1485 = vmatpush.msra.mxu0 %v656
        %1486 = vmatpush.msra.mxu0 %v652
        %1487 = vmatpush.msra.mxu0 %v648
        %1488 = vmatpush.msra.mxu0 %v644
        %1489 = vmatpush.msra.mxu0 %v640
        %1490 = vmatpush.msra.mxu0 %v636
        %1491 = vmatpush.msra.mxu0 %v632
        %1492 = vmatpush.msra.mxu0 %v628
        %1493 = vmatpush.msra.mxu0 %v624
        %1494 = vmatpush.msra.mxu0 %v620
        %1495 = vmatpush.msra.mxu0 %v616
        %1496 = vmatpush.msra.mxu0 %v612
        %1497 = vmatpush.msra.mxu0 %v608
        %1498 = vmatpush.msra.mxu0 %v604
        %1499 = vmatmul.f32.gmra.mxu0 %v326
        %v1500 = vpop.f32.mrf.mxu0
        %v1501 = vadd.f32 %v1451, %v1500
        %1502 = vmatmul.f32.gmra.mxu0 %v334
        %v1503 = vpop.f32.mrf.mxu0
        %v1504 = vadd.f32 %v1454, %v1503
        %1505 = vmatmul.f32.gmra.mxu0 %v342
        %v1506 = vpop.f32.mrf.mxu0
        %v1507 = vadd.f32 %v1457, %v1506
        %1508 = vmatmul.f32.gmra.mxu0 %v350
        %v1509 = vpop.f32.mrf.mxu0
        %v1510 = vadd.f32 %v1460, %v1509
        %1511 = vmatmul.f32.gmra.mxu0 %v358
        %v1512 = vpop.f32.mrf.mxu0
        %v1513 = vadd.f32 %v1463, %v1512
        %1514 = vmatmul.f32.gmra.mxu0 %v366
        %v1515 = vpop.f32.mrf.mxu0
        %v1516 = vadd.f32 %v1466, %v1515
        %1517 = vmatmul.f32.gmra.mxu0 %v374
        %v1518 = vpop.f32.mrf.mxu0
        %v1519 = vadd.f32 %v1469, %v1518
        %1520 = vmatmul.f32.gmra.mxu0 %v382
        %v1521 = vpop.f32.mrf.mxu0
        %v1522 = vadd.f32 %v1472, %v1521
        %1523 = vmatmul.f32.gmra.mxu0 %v390
        %v1524 = vpop.f32.mrf.mxu0
        %v1525 = vadd.f32 %v1475, %v1524
        %1526 = vmatmul.f32.gmra.mxu0 %v398
        %v1527 = vpop.f32.mrf.mxu0
        %v1528 = vadd.f32 %v1478, %v1527
        %1529 = vmatmul.f32.gmra.mxu0 %v406
        %v1530 = vpop.f32.mrf.mxu0
        %v1531 = vadd.f32 %v1481, %v1530
        %1532 = vdwg.mxu0
        %1533 = vmatpush.msra.mxu0 %v728
        %1534 = vmatpush.msra.mxu0 %v724
        %1535 = vmatpush.msra.mxu0 %v720
        %1536 = vmatpush.msra.mxu0 %v716
        %1537 = vmatpush.msra.mxu0 %v712
        %1538 = vmatpush.msra.mxu0 %v708
        %1539 = vmatpush.msra.mxu0 %v704
        %1540 = vmatpush.msra.mxu0 %v700
        %1541 = vmatpush.msra.mxu0 %v696
        %1542 = vmatpush.msra.mxu0 %v692
        %1543 = vmatpush.msra.mxu0 %v688
        %1544 = vmatpush.msra.mxu0 %v684
        %1545 = vmatpush.msra.mxu0 %v680
        %1546 = vmatpush.msra.mxu0 %v676
        %1547 = vmatpush.msra.mxu0 %v672
        %1548 = vmatpush.msra.mxu0 %v668
        %1549 = vmatmul.f32.gmra.mxu0 %v327
        %v1550 = vpop.f32.mrf.mxu0
        %v1551 = vadd.f32 %v1501, %v1550
        %1552 = vmatmul.f32.gmra.mxu0 %v335
        %v1553 = vpop.f32.mrf.mxu0
        %v1554 = vadd.f32 %v1504, %v1553
        %1555 = vmatmul.f32.gmra.mxu0 %v343
        %v1556 = vpop.f32.mrf.mxu0
        %v1557 = vadd.f32 %v1507, %v1556
        %1558 = vmatmul.f32.gmra.mxu0 %v351
        %v1559 = vpop.f32.mrf.mxu0
        %v1560 = vadd.f32 %v1510, %v1559
        %1561 = vmatmul.f32.gmra.mxu0 %v359
        %v1562 = vpop.f32.mrf.mxu0
        %v1563 = vadd.f32 %v1513, %v1562
        %1564 = vmatmul.f32.gmra.mxu0 %v367
        %v1565 = vpop.f32.mrf.mxu0
        %v1566 = vadd.f32 %v1516, %v1565
        %1567 = vmatmul.f32.gmra.mxu0 %v375
        %v1568 = vpop.f32.mrf.mxu0
        %v1569 = vadd.f32 %v1519, %v1568
        %1570 = vmatmul.f32.gmra.mxu0 %v383
        %v1571 = vpop.f32.mrf.mxu0
        %v1572 = vadd.f32 %v1522, %v1571
        %1573 = vmatmul.f32.gmra.mxu0 %v391
        %v1574 = vpop.f32.mrf.mxu0
        %v1575 = vadd.f32 %v1525, %v1574
        %1576 = vmatmul.f32.gmra.mxu0 %v399
        %v1577 = vpop.f32.mrf.mxu0
        %v1578 = vadd.f32 %v1528, %v1577
        %1579 = vmatmul.f32.gmra.mxu0 %v407
        %v1580 = vpop.f32.mrf.mxu0
        %v1581 = vadd.f32 %v1531, %v1580
        %1582 = vdwg.mxu0
        %1583 = vmatpush.msra.mxu0 %v792
        %1584 = vmatpush.msra.mxu0 %v788
        %1585 = vmatpush.msra.mxu0 %v784
        %1586 = vmatpush.msra.mxu0 %v780
        %1587 = vmatpush.msra.mxu0 %v776
        %1588 = vmatpush.msra.mxu0 %v772
        %1589 = vmatpush.msra.mxu0 %v768
        %1590 = vmatpush.msra.mxu0 %v764
        %1591 = vmatpush.msra.mxu0 %v760
        %1592 = vmatpush.msra.mxu0 %v756
        %1593 = vmatpush.msra.mxu0 %v752
        %1594 = vmatpush.msra.mxu0 %v748
        %1595 = vmatpush.msra.mxu0 %v744
        %1596 = vmatpush.msra.mxu0 %v740
        %1597 = vmatpush.msra.mxu0 %v736
        %1598 = vmatpush.msra.mxu0 %v732
        %1599 = vmatmul.f32.gmra.mxu0 %v328
        %v1600 = vpop.f32.mrf.mxu0
        %v1601 = vadd.f32 %v1551, %v1600
        %1602 = vmatmul.f32.gmra.mxu0 %v336
        %v1603 = vpop.f32.mrf.mxu0
        %v1604 = vadd.f32 %v1554, %v1603
        %1605 = vmatmul.f32.gmra.mxu0 %v344
        %v1606 = vpop.f32.mrf.mxu0
        %v1607 = vadd.f32 %v1557, %v1606
        %1608 = vmatmul.f32.gmra.mxu0 %v352
        %v1609 = vpop.f32.mrf.mxu0
        %v1610 = vadd.f32 %v1560, %v1609
        %1611 = vmatmul.f32.gmra.mxu0 %v360
        %v1612 = vpop.f32.mrf.mxu0
        %v1613 = vadd.f32 %v1563, %v1612
        %1614 = vmatmul.f32.gmra.mxu0 %v368
        %v1615 = vpop.f32.mrf.mxu0
        %v1616 = vadd.f32 %v1566, %v1615
        %1617 = vmatmul.f32.gmra.mxu0 %v376
        %v1618 = vpop.f32.mrf.mxu0
        %v1619 = vadd.f32 %v1569, %v1618
        %1620 = vmatmul.f32.gmra.mxu0 %v384
        %v1621 = vpop.f32.mrf.mxu0
        %v1622 = vadd.f32 %v1572, %v1621
        %1623 = vmatmul.f32.gmra.mxu0 %v392
        %v1624 = vpop.f32.mrf.mxu0
        %v1625 = vadd.f32 %v1575, %v1624
        %1626 = vmatmul.f32.gmra.mxu0 %v400
        %v1627 = vpop.f32.mrf.mxu0
        %v1628 = vadd.f32 %v1578, %v1627
        %1629 = vmatmul.f32.gmra.mxu0 %v408
        %v1630 = vpop.f32.mrf.mxu0
        %v1631 = vadd.f32 %v1581, %v1630
        %1632 = vdwg.mxu0
        %1633 = vmatpush.msra.mxu0 %v856
        %1634 = vmatpush.msra.mxu0 %v852
        %1635 = vmatpush.msra.mxu0 %v848
        %1636 = vmatpush.msra.mxu0 %v844
        %1637 = vmatpush.msra.mxu0 %v840
        %1638 = vmatpush.msra.mxu0 %v836
        %1639 = vmatpush.msra.mxu0 %v832
        %1640 = vmatpush.msra.mxu0 %v828
        %1641 = vmatpush.msra.mxu0 %v824
        %1642 = vmatpush.msra.mxu0 %v820
        %1643 = vmatpush.msra.mxu0 %v816
        %1644 = vmatpush.msra.mxu0 %v812
        %1645 = vmatpush.msra.mxu0 %v808
        %1646 = vmatpush.msra.mxu0 %v804
        %1647 = vmatpush.msra.mxu0 %v800
        %1648 = vmatpush.msra.mxu0 %v796
        %1649 = vmatmul.f32.gmra.mxu0 %v329
        %v1650 = vpop.f32.mrf.mxu0
        %v1651 = vadd.f32 %v1601, %v1650
        %1652 = vmatmul.f32.gmra.mxu0 %v337
        %v1653 = vpop.f32.mrf.mxu0
        %v1654 = vadd.f32 %v1604, %v1653
        %1655 = vmatmul.f32.gmra.mxu0 %v345
        %v1656 = vpop.f32.mrf.mxu0
        %v1657 = vadd.f32 %v1607, %v1656
        %1658 = vmatmul.f32.gmra.mxu0 %v353
        %v1659 = vpop.f32.mrf.mxu0
        %v1660 = vadd.f32 %v1610, %v1659
        %1661 = vmatmul.f32.gmra.mxu0 %v361
        %v1662 = vpop.f32.mrf.mxu0
        %v1663 = vadd.f32 %v1613, %v1662
        %1664 = vmatmul.f32.gmra.mxu0 %v369
        %v1665 = vpop.f32.mrf.mxu0
        %v1666 = vadd.f32 %v1616, %v1665
        %1667 = vmatmul.f32.gmra.mxu0 %v377
        %v1668 = vpop.f32.mrf.mxu0
        %v1669 = vadd.f32 %v1619, %v1668
        %1670 = vmatmul.f32.gmra.mxu0 %v385
        %v1671 = vpop.f32.mrf.mxu0
        %v1672 = vadd.f32 %v1622, %v1671
        %1673 = vmatmul.f32.gmra.mxu0 %v393
        %v1674 = vpop.f32.mrf.mxu0
        %v1675 = vadd.f32 %v1625, %v1674
        %1676 = vmatmul.f32.gmra.mxu0 %v401
        %v1677 = vpop.f32.mrf.mxu0
        %v1678 = vadd.f32 %v1628, %v1677
        %1679 = vmatmul.f32.gmra.mxu0 %v409
        %v1680 = vpop.f32.mrf.mxu0
        %v1681 = vadd.f32 %v1631, %v1680
        %1682 = vdwg.mxu0
        %1683 = vmatpush.msra.mxu0 %v920
        %1684 = vmatpush.msra.mxu0 %v916
        %1685 = vmatpush.msra.mxu0 %v912
        %1686 = vmatpush.msra.mxu0 %v908
        %1687 = vmatpush.msra.mxu0 %v904
        %1688 = vmatpush.msra.mxu0 %v900
        %1689 = vmatpush.msra.mxu0 %v896
        %1690 = vmatpush.msra.mxu0 %v892
        %1691 = vmatpush.msra.mxu0 %v888
        %1692 = vmatpush.msra.mxu0 %v884
        %1693 = vmatpush.msra.mxu0 %v880
        %1694 = vmatpush.msra.mxu0 %v876
        %1695 = vmatpush.msra.mxu0 %v872
        %1696 = vmatpush.msra.mxu0 %v868
        %1697 = vmatpush.msra.mxu0 %v864
        %1698 = vmatpush.msra.mxu0 %v860
        %1699 = vmatmul.f32.gmra.mxu0 %v330
        %v1700 = vpop.f32.mrf.mxu0
        %v1701 = vadd.f32 %v1651, %v1700
        %1702 = vmatmul.f32.gmra.mxu0 %v338
        %v1703 = vpop.f32.mrf.mxu0
        %v1704 = vadd.f32 %v1654, %v1703
        %1705 = vmatmul.f32.gmra.mxu0 %v346
        %v1706 = vpop.f32.mrf.mxu0
        %v1707 = vadd.f32 %v1657, %v1706
        %1708 = vmatmul.f32.gmra.mxu0 %v354
        %v1709 = vpop.f32.mrf.mxu0
        %v1710 = vadd.f32 %v1660, %v1709
        %1711 = vmatmul.f32.gmra.mxu0 %v362
        %v1712 = vpop.f32.mrf.mxu0
        %v1713 = vadd.f32 %v1663, %v1712
        %1714 = vmatmul.f32.gmra.mxu0 %v370
        %v1715 = vpop.f32.mrf.mxu0
        %v1716 = vadd.f32 %v1666, %v1715
        %1717 = vmatmul.f32.gmra.mxu0 %v378
        %v1718 = vpop.f32.mrf.mxu0
        %v1719 = vadd.f32 %v1669, %v1718
        %1720 = vmatmul.f32.gmra.mxu0 %v386
        %v1721 = vpop.f32.mrf.mxu0
        %v1722 = vadd.f32 %v1672, %v1721
        %1723 = vmatmul.f32.gmra.mxu0 %v394
        %v1724 = vpop.f32.mrf.mxu0
        %v1725 = vadd.f32 %v1675, %v1724
        %1726 = vmatmul.f32.gmra.mxu0 %v402
        %v1727 = vpop.f32.mrf.mxu0
        %v1728 = vadd.f32 %v1678, %v1727
        %1729 = vmatmul.f32.gmra.mxu0 %v410
        %v1730 = vpop.f32.mrf.mxu0
        %v1731 = vadd.f32 %v1681, %v1730
        %1732 = vdwg.mxu0
        %1733 = vmatpush.msra.mxu0 %v473
        %1734 = vmatpush.msra.mxu0 %v469
        %1735 = vmatpush.msra.mxu0 %v465
        %1736 = vmatpush.msra.mxu0 %v461
        %1737 = vmatpush.msra.mxu0 %v457
        %1738 = vmatpush.msra.mxu0 %v453
        %1739 = vmatpush.msra.mxu0 %v449
        %1740 = vmatpush.msra.mxu0 %v445
        %1741 = vmatpush.msra.mxu0 %v441
        %1742 = vmatpush.msra.mxu0 %v437
        %1743 = vmatpush.msra.mxu0 %v433
        %1744 = vmatpush.msra.mxu0 %v429
        %1745 = vmatpush.msra.mxu0 %v425
        %1746 = vmatpush.msra.mxu0 %v421
        %1747 = vmatpush.msra.mxu0 %v417
        %1748 = vmatpush.msra.mxu0 %v413
        %1749 = vmatmul.f32.gmra.mxu0 %v323
        %v1750 = vpop.f32.mrf.mxu0
        %v1751 = vadd.f32 %v927, %v1750
        %1752 = vmatmul.f32.gmra.mxu0 %v331
        %v1753 = vpop.f32.mrf.mxu0
        %v1754 = vadd.f32 %v927, %v1753
        %1755 = vmatmul.f32.gmra.mxu0 %v339
        %v1756 = vpop.f32.mrf.mxu0
        %v1757 = vadd.f32 %v927, %v1756
        %1758 = vmatmul.f32.gmra.mxu0 %v347
        %v1759 = vpop.f32.mrf.mxu0
        %v1760 = vadd.f32 %v927, %v1759
        %1761 = vmatmul.f32.gmra.mxu0 %v355
        %v1762 = vpop.f32.mrf.mxu0
        %v1763 = vadd.f32 %v927, %v1762
        %1764 = vmatmul.f32.gmra.mxu0 %v363
        %v1765 = vpop.f32.mrf.mxu0
        %v1766 = vadd.f32 %v927, %v1765
        %1767 = vmatmul.f32.gmra.mxu0 %v371
        %v1768 = vpop.f32.mrf.mxu0
        %v1769 = vadd.f32 %v927, %v1768
        %1770 = vmatmul.f32.gmra.mxu0 %v379
        %v1771 = vpop.f32.mrf.mxu0
        %v1772 = vadd.f32 %v927, %v1771
        %1773 = vmatmul.f32.gmra.mxu0 %v387
        %v1774 = vpop.f32.mrf.mxu0
        %v1775 = vadd.f32 %v927, %v1774
        %1776 = vmatmul.f32.gmra.mxu0 %v395
        %v1777 = vpop.f32.mrf.mxu0
        %v1778 = vadd.f32 %v927, %v1777
        %1779 = vmatmul.f32.gmra.mxu0 %v403
        %v1780 = vpop.f32.mrf.mxu0
        %v1781 = vadd.f32 %v927, %v1780
        %1782 = vdwg.mxu0
        %1783 = vmatpush.msra.mxu0 %v537
        %1784 = vmatpush.msra.mxu0 %v533
        %1785 = vmatpush.msra.mxu0 %v529
        %1786 = vmatpush.msra.mxu0 %v525
        %1787 = vmatpush.msra.mxu0 %v521
        %1788 = vmatpush.msra.mxu0 %v517
        %1789 = vmatpush.msra.mxu0 %v513
        %1790 = vmatpush.msra.mxu0 %v509
        %1791 = vmatpush.msra.mxu0 %v505
        %1792 = vmatpush.msra.mxu0 %v501
        %1793 = vmatpush.msra.mxu0 %v497
        %1794 = vmatpush.msra.mxu0 %v493
        %1795 = vmatpush.msra.mxu0 %v489
        %1796 = vmatpush.msra.mxu0 %v485
        %1797 = vmatpush.msra.mxu0 %v481
        %1798 = vmatpush.msra.mxu0 %v477
        %1799 = vmatmul.f32.gmra.mxu0 %v324
        %v1800 = vpop.f32.mrf.mxu0
        %v1801 = vadd.f32 %v1751, %v1800
        %1802 = vmatmul.f32.gmra.mxu0 %v332
        %v1803 = vpop.f32.mrf.mxu0
        %v1804 = vadd.f32 %v1754, %v1803
        %1805 = vmatmul.f32.gmra.mxu0 %v340
        %v1806 = vpop.f32.mrf.mxu0
        %v1807 = vadd.f32 %v1757, %v1806
        %1808 = vmatmul.f32.gmra.mxu0 %v348
        %v1809 = vpop.f32.mrf.mxu0
        %v1810 = vadd.f32 %v1760, %v1809
        %1811 = vmatmul.f32.gmra.mxu0 %v356
        %v1812 = vpop.f32.mrf.mxu0
        %v1813 = vadd.f32 %v1763, %v1812
        %1814 = vmatmul.f32.gmra.mxu0 %v364
        %v1815 = vpop.f32.mrf.mxu0
        %v1816 = vadd.f32 %v1766, %v1815
        %1817 = vmatmul.f32.gmra.mxu0 %v372
        %v1818 = vpop.f32.mrf.mxu0
        %v1819 = vadd.f32 %v1769, %v1818
        %1820 = vmatmul.f32.gmra.mxu0 %v380
        %v1821 = vpop.f32.mrf.mxu0
        %v1822 = vadd.f32 %v1772, %v1821
        %1823 = vmatmul.f32.gmra.mxu0 %v388
        %v1824 = vpop.f32.mrf.mxu0
        %v1825 = vadd.f32 %v1775, %v1824
        %1826 = vmatmul.f32.gmra.mxu0 %v396
        %v1827 = vpop.f32.mrf.mxu0
        %v1828 = vadd.f32 %v1778, %v1827
        %1829 = vmatmul.f32.gmra.mxu0 %v404
        %v1830 = vpop.f32.mrf.mxu0
        %v1831 = vadd.f32 %v1781, %v1830
        %1832 = vdwg.mxu0
        %1833 = vmatpush.msra.mxu0 %v601
        %1834 = vmatpush.msra.mxu0 %v597
        %1835 = vmatpush.msra.mxu0 %v593
        %1836 = vmatpush.msra.mxu0 %v589
        %1837 = vmatpush.msra.mxu0 %v585
        %1838 = vmatpush.msra.mxu0 %v581
        %1839 = vmatpush.msra.mxu0 %v577
        %1840 = vmatpush.msra.mxu0 %v573
        %1841 = vmatpush.msra.mxu0 %v569
        %1842 = vmatpush.msra.mxu0 %v565
        %1843 = vmatpush.msra.mxu0 %v561
        %1844 = vmatpush.msra.mxu0 %v557
        %1845 = vmatpush.msra.mxu0 %v553
        %1846 = vmatpush.msra.mxu0 %v549
        %1847 = vmatpush.msra.mxu0 %v545
        %1848 = vmatpush.msra.mxu0 %v541
        %1849 = vmatmul.f32.gmra.mxu0 %v325
        %v1850 = vpop.f32.mrf.mxu0
        %v1851 = vadd.f32 %v1801, %v1850
        %1852 = vmatmul.f32.gmra.mxu0 %v333
        %v1853 = vpop.f32.mrf.mxu0
        %v1854 = vadd.f32 %v1804, %v1853
        %1855 = vmatmul.f32.gmra.mxu0 %v341
        %v1856 = vpop.f32.mrf.mxu0
        %v1857 = vadd.f32 %v1807, %v1856
        %1858 = vmatmul.f32.gmra.mxu0 %v349
        %v1859 = vpop.f32.mrf.mxu0
        %v1860 = vadd.f32 %v1810, %v1859
        %1861 = vmatmul.f32.gmra.mxu0 %v357
        %v1862 = vpop.f32.mrf.mxu0
        %v1863 = vadd.f32 %v1813, %v1862
        %1864 = vmatmul.f32.gmra.mxu0 %v365
        %v1865 = vpop.f32.mrf.mxu0
        %v1866 = vadd.f32 %v1816, %v1865
        %1867 = vmatmul.f32.gmra.mxu0 %v373
        %v1868 = vpop.f32.mrf.mxu0
        %v1869 = vadd.f32 %v1819, %v1868
        %1870 = vmatmul.f32.gmra.mxu0 %v381
        %v1871 = vpop.f32.mrf.mxu0
        %v1872 = vadd.f32 %v1822, %v1871
        %1873 = vmatmul.f32.gmra.mxu0 %v389
        %v1874 = vpop.f32.mrf.mxu0
        %v1875 = vadd.f32 %v1825, %v1874
        %1876 = vmatmul.f32.gmra.mxu0 %v397
        %v1877 = vpop.f32.mrf.mxu0
        %v1878 = vadd.f32 %v1828, %v1877
        %1879 = vmatmul.f32.gmra.mxu0 %v405
        %v1880 = vpop.f32.mrf.mxu0
        %v1881 = vadd.f32 %v1831, %v1880
        %1882 = vdwg.mxu0
        %1883 = vmatpush.msra.mxu0 %v665
        %1884 = vmatpush.msra.mxu0 %v661
        %1885 = vmatpush.msra.mxu0 %v657
        %1886 = vmatpush.msra.mxu0 %v653
        %1887 = vmatpush.msra.mxu0 %v649
        %1888 = vmatpush.msra.mxu0 %v645
        %1889 = vmatpush.msra.mxu0 %v641
        %1890 = vmatpush.msra.mxu0 %v637
        %1891 = vmatpush.msra.mxu0 %v633
        %1892 = vmatpush.msra.mxu0 %v629
        %1893 = vmatpush.msra.mxu0 %v625
        %1894 = vmatpush.msra.mxu0 %v621
        %1895 = vmatpush.msra.mxu0 %v617
        %1896 = vmatpush.msra.mxu0 %v613
        %1897 = vmatpush.msra.mxu0 %v609
        %1898 = vmatpush.msra.mxu0 %v605
        %1899 = vmatmul.f32.gmra.mxu0 %v326
        %v1900 = vpop.f32.mrf.mxu0
        %v1901 = vadd.f32 %v1851, %v1900
        %1902 = vmatmul.f32.gmra.mxu0 %v334
        %v1903 = vpop.f32.mrf.mxu0
        %v1904 = vadd.f32 %v1854, %v1903
        %1905 = vmatmul.f32.gmra.mxu0 %v342
        %v1906 = vpop.f32.mrf.mxu0
        %v1907 = vadd.f32 %v1857, %v1906
        %1908 = vmatmul.f32.gmra.mxu0 %v350
        %v1909 = vpop.f32.mrf.mxu0
        %v1910 = vadd.f32 %v1860, %v1909
        %1911 = vmatmul.f32.gmra.mxu0 %v358
        %v1912 = vpop.f32.mrf.mxu0
        %v1913 = vadd.f32 %v1863, %v1912
        %1914 = vmatmul.f32.gmra.mxu0 %v366
        %v1915 = vpop.f32.mrf.mxu0
        %v1916 = vadd.f32 %v1866, %v1915
        %1917 = vmatmul.f32.gmra.mxu0 %v374
        %v1918 = vpop.f32.mrf.mxu0
        %v1919 = vadd.f32 %v1869, %v1918
        %1920 = vmatmul.f32.gmra.mxu0 %v382
        %v1921 = vpop.f32.mrf.mxu0
        %v1922 = vadd.f32 %v1872, %v1921
        %1923 = vmatmul.f32.gmra.mxu0 %v390
        %v1924 = vpop.f32.mrf.mxu0
        %v1925 = vadd.f32 %v1875, %v1924
        %1926 = vmatmul.f32.gmra.mxu0 %v398
        %v1927 = vpop.f32.mrf.mxu0
        %v1928 = vadd.f32 %v1878, %v1927
        %1929 = vmatmul.f32.gmra.mxu0 %v406
        %v1930 = vpop.f32.mrf.mxu0
        %v1931 = vadd.f32 %v1881, %v1930
        %1932 = vdwg.mxu0
        %1933 = vmatpush.msra.mxu0 %v729
        %1934 = vmatpush.msra.mxu0 %v725
        %1935 = vmatpush.msra.mxu0 %v721
        %1936 = vmatpush.msra.mxu0 %v717
        %1937 = vmatpush.msra.mxu0 %v713
        %1938 = vmatpush.msra.mxu0 %v709
        %1939 = vmatpush.msra.mxu0 %v705
        %1940 = vmatpush.msra.mxu0 %v701
        %1941 = vmatpush.msra.mxu0 %v697
        %1942 = vmatpush.msra.mxu0 %v693
        %1943 = vmatpush.msra.mxu0 %v689
        %1944 = vmatpush.msra.mxu0 %v685
        %1945 = vmatpush.msra.mxu0 %v681
        %1946 = vmatpush.msra.mxu0 %v677
        %1947 = vmatpush.msra.mxu0 %v673
        %1948 = vmatpush.msra.mxu0 %v669
        %1949 = vmatmul.f32.gmra.mxu0 %v327
        %v1950 = vpop.f32.mrf.mxu0
        %v1951 = vadd.f32 %v1901, %v1950
        %1952 = vmatmul.f32.gmra.mxu0 %v335
        %v1953 = vpop.f32.mrf.mxu0
        %v1954 = vadd.f32 %v1904, %v1953
        %1955 = vmatmul.f32.gmra.mxu0 %v343
        %v1956 = vpop.f32.mrf.mxu0
        %v1957 = vadd.f32 %v1907, %v1956
        %1958 = vmatmul.f32.gmra.mxu0 %v351
        %v1959 = vpop.f32.mrf.mxu0
        %v1960 = vadd.f32 %v1910, %v1959
        %1961 = vmatmul.f32.gmra.mxu0 %v359
        %v1962 = vpop.f32.mrf.mxu0
        %v1963 = vadd.f32 %v1913, %v1962
        %1964 = vmatmul.f32.gmra.mxu0 %v367
        %v1965 = vpop.f32.mrf.mxu0
        %v1966 = vadd.f32 %v1916, %v1965
        %1967 = vmatmul.f32.gmra.mxu0 %v375
        %v1968 = vpop.f32.mrf.mxu0
        %v1969 = vadd.f32 %v1919, %v1968
        %1970 = vmatmul.f32.gmra.mxu0 %v383
        %v1971 = vpop.f32.mrf.mxu0
        %v1972 = vadd.f32 %v1922, %v1971
        %1973 = vmatmul.f32.gmra.mxu0 %v391
        %v1974 = vpop.f32.mrf.mxu0
        %v1975 = vadd.f32 %v1925, %v1974
        %1976 = vmatmul.f32.gmra.mxu0 %v399
        %v1977 = vpop.f32.mrf.mxu0
        %v1978 = vadd.f32 %v1928, %v1977
        %1979 = vmatmul.f32.gmra.mxu0 %v407
        %v1980 = vpop.f32.mrf.mxu0
        %v1981 = vadd.f32 %v1931, %v1980
        %1982 = vdwg.mxu0
        %1983 = vmatpush.msra.mxu0 %v793
        %1984 = vmatpush.msra.mxu0 %v789
        %1985 = vmatpush.msra.mxu0 %v785
        %1986 = vmatpush.msra.mxu0 %v781
        %1987 = vmatpush.msra.mxu0 %v777
        %1988 = vmatpush.msra.mxu0 %v773
        %1989 = vmatpush.msra.mxu0 %v769
        %1990 = vmatpush.msra.mxu0 %v765
        %1991 = vmatpush.msra.mxu0 %v761
        %1992 = vmatpush.msra.mxu0 %v757
        %1993 = vmatpush.msra.mxu0 %v753
        %1994 = vmatpush.msra.mxu0 %v749
        %1995 = vmatpush.msra.mxu0 %v745
        %1996 = vmatpush.msra.mxu0 %v741
        %1997 = vmatpush.msra.mxu0 %v737
        %1998 = vmatpush.msra.mxu0 %v733
        %1999 = vmatmul.f32.gmra.mxu0 %v328
        %v2000 = vpop.f32.mrf.mxu0
        %v2001 = vadd.f32 %v1951, %v2000
        %2002 = vmatmul.f32.gmra.mxu0 %v336
        %v2003 = vpop.f32.mrf.mxu0
        %v2004 = vadd.f32 %v1954, %v2003
        %2005 = vmatmul.f32.gmra.mxu0 %v344
        %v2006 = vpop.f32.mrf.mxu0
        %v2007 = vadd.f32 %v1957, %v2006
        %2008 = vmatmul.f32.gmra.mxu0 %v352
        %v2009 = vpop.f32.mrf.mxu0
        %v2010 = vadd.f32 %v1960, %v2009
        %2011 = vmatmul.f32.gmra.mxu0 %v360
        %v2012 = vpop.f32.mrf.mxu0
        %v2013 = vadd.f32 %v1963, %v2012
        %2014 = vmatmul.f32.gmra.mxu0 %v368
        %v2015 = vpop.f32.mrf.mxu0
        %v2016 = vadd.f32 %v1966, %v2015
        %2017 = vmatmul.f32.gmra.mxu0 %v376
        %v2018 = vpop.f32.mrf.mxu0
        %v2019 = vadd.f32 %v1969, %v2018
        %2020 = vmatmul.f32.gmra.mxu0 %v384
        %v2021 = vpop.f32.mrf.mxu0
        %v2022 = vadd.f32 %v1972, %v2021
        %2023 = vmatmul.f32.gmra.mxu0 %v392
        %v2024 = vpop.f32.mrf.mxu0
        %v2025 = vadd.f32 %v1975, %v2024
        %2026 = vmatmul.f32.gmra.mxu0 %v400
        %v2027 = vpop.f32.mrf.mxu0
        %v2028 = vadd.f32 %v1978, %v2027
        %2029 = vmatmul.f32.gmra.mxu0 %v408
        %v2030 = vpop.f32.mrf.mxu0
        %v2031 = vadd.f32 %v1981, %v2030
        %2032 = vdwg.mxu0
        %2033 = vmatpush.msra.mxu0 %v857
        %2034 = vmatpush.msra.mxu0 %v853
        %2035 = vmatpush.msra.mxu0 %v849
        %2036 = vmatpush.msra.mxu0 %v845
        %2037 = vmatpush.msra.mxu0 %v841
        %2038 = vmatpush.msra.mxu0 %v837
        %2039 = vmatpush.msra.mxu0 %v833
        %2040 = vmatpush.msra.mxu0 %v829
        %2041 = vmatpush.msra.mxu0 %v825
        %2042 = vmatpush.msra.mxu0 %v821
        %2043 = vmatpush.msra.mxu0 %v817
        %2044 = vmatpush.msra.mxu0 %v813
        %2045 = vmatpush.msra.mxu0 %v809
        %2046 = vmatpush.msra.mxu0 %v805
        %2047 = vmatpush.msra.mxu0 %v801
        %2048 = vmatpush.msra.mxu0 %v797
        %2049 = vmatmul.f32.gmra.mxu0 %v329
        %v2050 = vpop.f32.mrf.mxu0
        %v2051 = vadd.f32 %v2001, %v2050
        %2052 = vmatmul.f32.gmra.mxu0 %v337
        %v2053 = vpop.f32.mrf.mxu0
        %v2054 = vadd.f32 %v2004, %v2053
        %2055 = vmatmul.f32.gmra.mxu0 %v345
        %v2056 = vpop.f32.mrf.mxu0
        %v2057 = vadd.f32 %v2007, %v2056
        %2058 = vmatmul.f32.gmra.mxu0 %v353
        %v2059 = vpop.f32.mrf.mxu0
        %v2060 = vadd.f32 %v2010, %v2059
        %2061 = vmatmul.f32.gmra.mxu0 %v361
        %v2062 = vpop.f32.mrf.mxu0
        %v2063 = vadd.f32 %v2013, %v2062
        %2064 = vmatmul.f32.gmra.mxu0 %v369
        %v2065 = vpop.f32.mrf.mxu0
        %v2066 = vadd.f32 %v2016, %v2065
        %2067 = vmatmul.f32.gmra.mxu0 %v377
        %v2068 = vpop.f32.mrf.mxu0
        %v2069 = vadd.f32 %v2019, %v2068
        %2070 = vmatmul.f32.gmra.mxu0 %v385
        %v2071 = vpop.f32.mrf.mxu0
        %v2072 = vadd.f32 %v2022, %v2071
        %2073 = vmatmul.f32.gmra.mxu0 %v393
        %v2074 = vpop.f32.mrf.mxu0
        %v2075 = vadd.f32 %v2025, %v2074
        %2076 = vmatmul.f32.gmra.mxu0 %v401
        %v2077 = vpop.f32.mrf.mxu0
        %v2078 = vadd.f32 %v2028, %v2077
        %2079 = vmatmul.f32.gmra.mxu0 %v409
        %v2080 = vpop.f32.mrf.mxu0
        %v2081 = vadd.f32 %v2031, %v2080
        %2082 = vdwg.mxu0
        %2083 = vmatpush.msra.mxu0 %v921
        %2084 = vmatpush.msra.mxu0 %v917
        %2085 = vmatpush.msra.mxu0 %v913
        %2086 = vmatpush.msra.mxu0 %v909
        %2087 = vmatpush.msra.mxu0 %v905
        %2088 = vmatpush.msra.mxu0 %v901
        %2089 = vmatpush.msra.mxu0 %v897
        %2090 = vmatpush.msra.mxu0 %v893
        %2091 = vmatpush.msra.mxu0 %v889
        %2092 = vmatpush.msra.mxu0 %v885
        %2093 = vmatpush.msra.mxu0 %v881
        %2094 = vmatpush.msra.mxu0 %v877
        %2095 = vmatpush.msra.mxu0 %v873
        %2096 = vmatpush.msra.mxu0 %v869
        %2097 = vmatpush.msra.mxu0 %v865
        %2098 = vmatpush.msra.mxu0 %v861
        %2099 = vmatmul.f32.gmra.mxu0 %v330
        %v2100 = vpop.f32.mrf.mxu0
        %v2101 = vadd.f32 %v2051, %v2100
        %2102 = vmatmul.f32.gmra.mxu0 %v338
        %v2103 = vpop.f32.mrf.mxu0
        %v2104 = vadd.f32 %v2054, %v2103
        %2105 = vmatmul.f32.gmra.mxu0 %v346
        %v2106 = vpop.f32.mrf.mxu0
        %v2107 = vadd.f32 %v2057, %v2106
        %2108 = vmatmul.f32.gmra.mxu0 %v354
        %v2109 = vpop.f32.mrf.mxu0
        %v2110 = vadd.f32 %v2060, %v2109
        %2111 = vmatmul.f32.gmra.mxu0 %v362
        %v2112 = vpop.f32.mrf.mxu0
        %v2113 = vadd.f32 %v2063, %v2112
        %2114 = vmatmul.f32.gmra.mxu0 %v370
        %v2115 = vpop.f32.mrf.mxu0
        %v2116 = vadd.f32 %v2066, %v2115
        %2117 = vmatmul.f32.gmra.mxu0 %v378
        %v2118 = vpop.f32.mrf.mxu0
        %v2119 = vadd.f32 %v2069, %v2118
        %2120 = vmatmul.f32.gmra.mxu0 %v386
        %v2121 = vpop.f32.mrf.mxu0
        %v2122 = vadd.f32 %v2072, %v2121
        %2123 = vmatmul.f32.gmra.mxu0 %v394
        %v2124 = vpop.f32.mrf.mxu0
        %v2125 = vadd.f32 %v2075, %v2124
        %2126 = vmatmul.f32.gmra.mxu0 %v402
        %v2127 = vpop.f32.mrf.mxu0
        %v2128 = vadd.f32 %v2078, %v2127
        %2129 = vmatmul.f32.gmra.mxu0 %v410
        %v2130 = vpop.f32.mrf.mxu0
        %v2131 = vadd.f32 %v2081, %v2130
        %2132 = vdwg.mxu0
        %2133 = vmatpush.msra.mxu0 %v474
        %2134 = vmatpush.msra.mxu0 %v470
        %2135 = vmatpush.msra.mxu0 %v466
        %2136 = vmatpush.msra.mxu0 %v462
        %2137 = vmatpush.msra.mxu0 %v458
        %2138 = vmatpush.msra.mxu0 %v454
        %2139 = vmatpush.msra.mxu0 %v450
        %2140 = vmatpush.msra.mxu0 %v446
        %2141 = vmatpush.msra.mxu0 %v442
        %2142 = vmatpush.msra.mxu0 %v438
        %2143 = vmatpush.msra.mxu0 %v434
        %2144 = vmatpush.msra.mxu0 %v430
        %2145 = vmatpush.msra.mxu0 %v426
        %2146 = vmatpush.msra.mxu0 %v422
        %2147 = vmatpush.msra.mxu0 %v418
        %2148 = vmatpush.msra.mxu0 %v414
        %2149 = vmatmul.f32.gmra.mxu0 %v323
        %v2150 = vpop.f32.mrf.mxu0
        %v2151 = vadd.f32 %v928, %v2150
        %2152 = vmatmul.f32.gmra.mxu0 %v331
        %v2153 = vpop.f32.mrf.mxu0
        %v2154 = vadd.f32 %v928, %v2153
        %2155 = vmatmul.f32.gmra.mxu0 %v339
        %v2156 = vpop.f32.mrf.mxu0
        %v2157 = vadd.f32 %v928, %v2156
        %2158 = vmatmul.f32.gmra.mxu0 %v347
        %v2159 = vpop.f32.mrf.mxu0
        %v2160 = vadd.f32 %v928, %v2159
        %2161 = vmatmul.f32.gmra.mxu0 %v355
        %v2162 = vpop.f32.mrf.mxu0
        %v2163 = vadd.f32 %v928, %v2162
        %2164 = vmatmul.f32.gmra.mxu0 %v363
        %v2165 = vpop.f32.mrf.mxu0
        %v2166 = vadd.f32 %v928, %v2165
        %2167 = vmatmul.f32.gmra.mxu0 %v371
        %v2168 = vpop.f32.mrf.mxu0
        %v2169 = vadd.f32 %v928, %v2168
        %2170 = vmatmul.f32.gmra.mxu0 %v379
        %v2171 = vpop.f32.mrf.mxu0
        %v2172 = vadd.f32 %v928, %v2171
        %2173 = vmatmul.f32.gmra.mxu0 %v387
        %v2174 = vpop.f32.mrf.mxu0
        %v2175 = vadd.f32 %v928, %v2174
        %2176 = vmatmul.f32.gmra.mxu0 %v395
        %v2177 = vpop.f32.mrf.mxu0
        %v2178 = vadd.f32 %v928, %v2177
        %2179 = vmatmul.f32.gmra.mxu0 %v403
        %v2180 = vpop.f32.mrf.mxu0
        %v2181 = vadd.f32 %v928, %v2180
        %2182 = vdwg.mxu0
        %2183 = vmatpush.msra.mxu0 %v538
        %2184 = vmatpush.msra.mxu0 %v534
        %2185 = vmatpush.msra.mxu0 %v530
        %2186 = vmatpush.msra.mxu0 %v526
        %2187 = vmatpush.msra.mxu0 %v522
        %2188 = vmatpush.msra.mxu0 %v518
        %2189 = vmatpush.msra.mxu0 %v514
        %2190 = vmatpush.msra.mxu0 %v510
        %2191 = vmatpush.msra.mxu0 %v506
        %2192 = vmatpush.msra.mxu0 %v502
        %2193 = vmatpush.msra.mxu0 %v498
        %2194 = vmatpush.msra.mxu0 %v494
        %2195 = vmatpush.msra.mxu0 %v490
        %2196 = vmatpush.msra.mxu0 %v486
        %2197 = vmatpush.msra.mxu0 %v482
        %2198 = vmatpush.msra.mxu0 %v478
        %2199 = vmatmul.f32.gmra.mxu0 %v324
        %v2200 = vpop.f32.mrf.mxu0
        %v2201 = vadd.f32 %v2151, %v2200
        %2202 = vmatmul.f32.gmra.mxu0 %v332
        %v2203 = vpop.f32.mrf.mxu0
        %v2204 = vadd.f32 %v2154, %v2203
        %2205 = vmatmul.f32.gmra.mxu0 %v340
        %v2206 = vpop.f32.mrf.mxu0
        %v2207 = vadd.f32 %v2157, %v2206
        %2208 = vmatmul.f32.gmra.mxu0 %v348
        %v2209 = vpop.f32.mrf.mxu0
        %v2210 = vadd.f32 %v2160, %v2209
        %2211 = vmatmul.f32.gmra.mxu0 %v356
        %v2212 = vpop.f32.mrf.mxu0
        %v2213 = vadd.f32 %v2163, %v2212
        %2214 = vmatmul.f32.gmra.mxu0 %v364
        %v2215 = vpop.f32.mrf.mxu0
        %v2216 = vadd.f32 %v2166, %v2215
        %2217 = vmatmul.f32.gmra.mxu0 %v372
        %v2218 = vpop.f32.mrf.mxu0
        %v2219 = vadd.f32 %v2169, %v2218
        %2220 = vmatmul.f32.gmra.mxu0 %v380
        %v2221 = vpop.f32.mrf.mxu0
        %v2222 = vadd.f32 %v2172, %v2221
        %2223 = vmatmul.f32.gmra.mxu0 %v388
        %v2224 = vpop.f32.mrf.mxu0
        %v2225 = vadd.f32 %v2175, %v2224
        %2226 = vmatmul.f32.gmra.mxu0 %v396
        %v2227 = vpop.f32.mrf.mxu0
        %v2228 = vadd.f32 %v2178, %v2227
        %2229 = vmatmul.f32.gmra.mxu0 %v404
        %v2230 = vpop.f32.mrf.mxu0
        %v2231 = vadd.f32 %v2181, %v2230
        %2232 = vdwg.mxu0
        %2233 = vmatpush.msra.mxu0 %v602
        %2234 = vmatpush.msra.mxu0 %v598
        %2235 = vmatpush.msra.mxu0 %v594
        %2236 = vmatpush.msra.mxu0 %v590
        %2237 = vmatpush.msra.mxu0 %v586
        %2238 = vmatpush.msra.mxu0 %v582
        %2239 = vmatpush.msra.mxu0 %v578
        %2240 = vmatpush.msra.mxu0 %v574
        %2241 = vmatpush.msra.mxu0 %v570
        %2242 = vmatpush.msra.mxu0 %v566
        %2243 = vmatpush.msra.mxu0 %v562
        %2244 = vmatpush.msra.mxu0 %v558
        %2245 = vmatpush.msra.mxu0 %v554
        %2246 = vmatpush.msra.mxu0 %v550
        %2247 = vmatpush.msra.mxu0 %v546
        %2248 = vmatpush.msra.mxu0 %v542
        %2249 = vmatmul.f32.gmra.mxu0 %v325
        %v2250 = vpop.f32.mrf.mxu0
        %v2251 = vadd.f32 %v2201, %v2250
        %2252 = vmatmul.f32.gmra.mxu0 %v333
        %v2253 = vpop.f32.mrf.mxu0
        %v2254 = vadd.f32 %v2204, %v2253
        %2255 = vmatmul.f32.gmra.mxu0 %v341
        %v2256 = vpop.f32.mrf.mxu0
        %v2257 = vadd.f32 %v2207, %v2256
        %2258 = vmatmul.f32.gmra.mxu0 %v349
        %v2259 = vpop.f32.mrf.mxu0
        %v2260 = vadd.f32 %v2210, %v2259
        %2261 = vmatmul.f32.gmra.mxu0 %v357
        %v2262 = vpop.f32.mrf.mxu0
        %v2263 = vadd.f32 %v2213, %v2262
        %2264 = vmatmul.f32.gmra.mxu0 %v365
        %v2265 = vpop.f32.mrf.mxu0
        %v2266 = vadd.f32 %v2216, %v2265
        %2267 = vmatmul.f32.gmra.mxu0 %v373
        %v2268 = vpop.f32.mrf.mxu0
        %v2269 = vadd.f32 %v2219, %v2268
        %2270 = vmatmul.f32.gmra.mxu0 %v381
        %v2271 = vpop.f32.mrf.mxu0
        %v2272 = vadd.f32 %v2222, %v2271
        %2273 = vmatmul.f32.gmra.mxu0 %v389
        %v2274 = vpop.f32.mrf.mxu0
        %v2275 = vadd.f32 %v2225, %v2274
        %2276 = vmatmul.f32.gmra.mxu0 %v397
        %v2277 = vpop.f32.mrf.mxu0
        %v2278 = vadd.f32 %v2228, %v2277
        %2279 = vmatmul.f32.gmra.mxu0 %v405
        %v2280 = vpop.f32.mrf.mxu0
        %v2281 = vadd.f32 %v2231, %v2280
        %2282 = vdwg.mxu0
        %2283 = vmatpush.msra.mxu0 %v666
        %2284 = vmatpush.msra.mxu0 %v662
        %2285 = vmatpush.msra.mxu0 %v658
        %2286 = vmatpush.msra.mxu0 %v654
        %2287 = vmatpush.msra.mxu0 %v650
        %2288 = vmatpush.msra.mxu0 %v646
        %2289 = vmatpush.msra.mxu0 %v642
        %2290 = vmatpush.msra.mxu0 %v638
        %2291 = vmatpush.msra.mxu0 %v634
        %2292 = vmatpush.msra.mxu0 %v630
        %2293 = vmatpush.msra.mxu0 %v626
        %2294 = vmatpush.msra.mxu0 %v622
        %2295 = vmatpush.msra.mxu0 %v618
        %2296 = vmatpush.msra.mxu0 %v614
        %2297 = vmatpush.msra.mxu0 %v610
        %2298 = vmatpush.msra.mxu0 %v606
        %2299 = vmatmul.f32.gmra.mxu0 %v326
        %v2300 = vpop.f32.mrf.mxu0
        %v2301 = vadd.f32 %v2251, %v2300
        %2302 = vmatmul.f32.gmra.mxu0 %v334
        %v2303 = vpop.f32.mrf.mxu0
        %v2304 = vadd.f32 %v2254, %v2303
        %2305 = vmatmul.f32.gmra.mxu0 %v342
        %v2306 = vpop.f32.mrf.mxu0
        %v2307 = vadd.f32 %v2257, %v2306
        %2308 = vmatmul.f32.gmra.mxu0 %v350
        %v2309 = vpop.f32.mrf.mxu0
        %v2310 = vadd.f32 %v2260, %v2309
        %2311 = vmatmul.f32.gmra.mxu0 %v358
        %v2312 = vpop.f32.mrf.mxu0
        %v2313 = vadd.f32 %v2263, %v2312
        %2314 = vmatmul.f32.gmra.mxu0 %v366
        %v2315 = vpop.f32.mrf.mxu0
        %v2316 = vadd.f32 %v2266, %v2315
        %2317 = vmatmul.f32.gmra.mxu0 %v374
        %v2318 = vpop.f32.mrf.mxu0
        %v2319 = vadd.f32 %v2269, %v2318
        %2320 = vmatmul.f32.gmra.mxu0 %v382
        %v2321 = vpop.f32.mrf.mxu0
        %v2322 = vadd.f32 %v2272, %v2321
        %2323 = vmatmul.f32.gmra.mxu0 %v390
        %v2324 = vpop.f32.mrf.mxu0
        %v2325 = vadd.f32 %v2275, %v2324
        %2326 = vmatmul.f32.gmra.mxu0 %v398
        %v2327 = vpop.f32.mrf.mxu0
        %v2328 = vadd.f32 %v2278, %v2327
        %2329 = vmatmul.f32.gmra.mxu0 %v406
        %v2330 = vpop.f32.mrf.mxu0
        %v2331 = vadd.f32 %v2281, %v2330
        %2332 = vdwg.mxu0
        %2333 = vmatpush.msra.mxu0 %v730
        %2334 = vmatpush.msra.mxu0 %v726
        %2335 = vmatpush.msra.mxu0 %v722
        %2336 = vmatpush.msra.mxu0 %v718
        %2337 = vmatpush.msra.mxu0 %v714
        %2338 = vmatpush.msra.mxu0 %v710
        %2339 = vmatpush.msra.mxu0 %v706
        %2340 = vmatpush.msra.mxu0 %v702
        %2341 = vmatpush.msra.mxu0 %v698
        %2342 = vmatpush.msra.mxu0 %v694
        %2343 = vmatpush.msra.mxu0 %v690
        %2344 = vmatpush.msra.mxu0 %v686
        %2345 = vmatpush.msra.mxu0 %v682
        %2346 = vmatpush.msra.mxu0 %v678
        %2347 = vmatpush.msra.mxu0 %v674
        %2348 = vmatpush.msra.mxu0 %v670
        %2349 = vmatmul.f32.gmra.mxu0 %v327
        %v2350 = vpop.f32.mrf.mxu0
        %v2351 = vadd.f32 %v2301, %v2350
        %2352 = vmatmul.f32.gmra.mxu0 %v335
        %v2353 = vpop.f32.mrf.mxu0
        %v2354 = vadd.f32 %v2304, %v2353
        %2355 = vmatmul.f32.gmra.mxu0 %v343
        %v2356 = vpop.f32.mrf.mxu0
        %v2357 = vadd.f32 %v2307, %v2356
        %2358 = vmatmul.f32.gmra.mxu0 %v351
        %v2359 = vpop.f32.mrf.mxu0
        %v2360 = vadd.f32 %v2310, %v2359
        %2361 = vmatmul.f32.gmra.mxu0 %v359
        %v2362 = vpop.f32.mrf.mxu0
        %v2363 = vadd.f32 %v2313, %v2362
        %2364 = vmatmul.f32.gmra.mxu0 %v367
        %v2365 = vpop.f32.mrf.mxu0
        %v2366 = vadd.f32 %v2316, %v2365
        %2367 = vmatmul.f32.gmra.mxu0 %v375
        %v2368 = vpop.f32.mrf.mxu0
        %v2369 = vadd.f32 %v2319, %v2368
        %2370 = vmatmul.f32.gmra.mxu0 %v383
        %v2371 = vpop.f32.mrf.mxu0
        %v2372 = vadd.f32 %v2322, %v2371
        %2373 = vmatmul.f32.gmra.mxu0 %v391
        %v2374 = vpop.f32.mrf.mxu0
        %v2375 = vadd.f32 %v2325, %v2374
        %2376 = vmatmul.f32.gmra.mxu0 %v399
        %v2377 = vpop.f32.mrf.mxu0
        %v2378 = vadd.f32 %v2328, %v2377
        %2379 = vmatmul.f32.gmra.mxu0 %v407
        %v2380 = vpop.f32.mrf.mxu0
        %v2381 = vadd.f32 %v2331, %v2380
        %2382 = vdwg.mxu0
        %2383 = vmatpush.msra.mxu0 %v794
        %2384 = vmatpush.msra.mxu0 %v790
        %2385 = vmatpush.msra.mxu0 %v786
        %2386 = vmatpush.msra.mxu0 %v782
        %2387 = vmatpush.msra.mxu0 %v778
        %2388 = vmatpush.msra.mxu0 %v774
        %2389 = vmatpush.msra.mxu0 %v770
        %2390 = vmatpush.msra.mxu0 %v766
        %2391 = vmatpush.msra.mxu0 %v762
        %2392 = vmatpush.msra.mxu0 %v758
        %2393 = vmatpush.msra.mxu0 %v754
        %2394 = vmatpush.msra.mxu0 %v750
        %2395 = vmatpush.msra.mxu0 %v746
        %2396 = vmatpush.msra.mxu0 %v742
        %2397 = vmatpush.msra.mxu0 %v738
        %2398 = vmatpush.msra.mxu0 %v734
        %2399 = vmatmul.f32.gmra.mxu0 %v328
        %v2400 = vpop.f32.mrf.mxu0
        %v2401 = vadd.f32 %v2351, %v2400
        %2402 = vmatmul.f32.gmra.mxu0 %v336
        %v2403 = vpop.f32.mrf.mxu0
        %v2404 = vadd.f32 %v2354, %v2403
        %2405 = vmatmul.f32.gmra.mxu0 %v344
        %v2406 = vpop.f32.mrf.mxu0
        %v2407 = vadd.f32 %v2357, %v2406
        %2408 = vmatmul.f32.gmra.mxu0 %v352
        %v2409 = vpop.f32.mrf.mxu0
        %v2410 = vadd.f32 %v2360, %v2409
        %2411 = vmatmul.f32.gmra.mxu0 %v360
        %v2412 = vpop.f32.mrf.mxu0
        %v2413 = vadd.f32 %v2363, %v2412
        %2414 = vmatmul.f32.gmra.mxu0 %v368
        %v2415 = vpop.f32.mrf.mxu0
        %v2416 = vadd.f32 %v2366, %v2415
        %2417 = vmatmul.f32.gmra.mxu0 %v376
        %v2418 = vpop.f32.mrf.mxu0
        %v2419 = vadd.f32 %v2369, %v2418
        %2420 = vmatmul.f32.gmra.mxu0 %v384
        %v2421 = vpop.f32.mrf.mxu0
        %v2422 = vadd.f32 %v2372, %v2421
        %2423 = vmatmul.f32.gmra.mxu0 %v392
        %v2424 = vpop.f32.mrf.mxu0
        %v2425 = vadd.f32 %v2375, %v2424
        %2426 = vmatmul.f32.gmra.mxu0 %v400
        %v2427 = vpop.f32.mrf.mxu0
        %v2428 = vadd.f32 %v2378, %v2427
        %2429 = vmatmul.f32.gmra.mxu0 %v408
        %v2430 = vpop.f32.mrf.mxu0
        %v2431 = vadd.f32 %v2381, %v2430
        %2432 = vdwg.mxu0
        %2433 = vmatpush.msra.mxu0 %v858
        %2434 = vmatpush.msra.mxu0 %v854
        %2435 = vmatpush.msra.mxu0 %v850
        %2436 = vmatpush.msra.mxu0 %v846
        %2437 = vmatpush.msra.mxu0 %v842
        %2438 = vmatpush.msra.mxu0 %v838
        %2439 = vmatpush.msra.mxu0 %v834
        %2440 = vmatpush.msra.mxu0 %v830
        %2441 = vmatpush.msra.mxu0 %v826
        %2442 = vmatpush.msra.mxu0 %v822
        %2443 = vmatpush.msra.mxu0 %v818
        %2444 = vmatpush.msra.mxu0 %v814
        %2445 = vmatpush.msra.mxu0 %v810
        %2446 = vmatpush.msra.mxu0 %v806
        %2447 = vmatpush.msra.mxu0 %v802
        %2448 = vmatpush.msra.mxu0 %v798
        %2449 = vmatmul.f32.gmra.mxu0 %v329
        %v2450 = vpop.f32.mrf.mxu0
        %v2451 = vadd.f32 %v2401, %v2450
        %2452 = vmatmul.f32.gmra.mxu0 %v337
        %v2453 = vpop.f32.mrf.mxu0
        %v2454 = vadd.f32 %v2404, %v2453
        %2455 = vmatmul.f32.gmra.mxu0 %v345
        %v2456 = vpop.f32.mrf.mxu0
        %v2457 = vadd.f32 %v2407, %v2456
        %2458 = vmatmul.f32.gmra.mxu0 %v353
        %v2459 = vpop.f32.mrf.mxu0
        %v2460 = vadd.f32 %v2410, %v2459
        %2461 = vmatmul.f32.gmra.mxu0 %v361
        %v2462 = vpop.f32.mrf.mxu0
        %v2463 = vadd.f32 %v2413, %v2462
        %2464 = vmatmul.f32.gmra.mxu0 %v369
        %v2465 = vpop.f32.mrf.mxu0
        %v2466 = vadd.f32 %v2416, %v2465
        %2467 = vmatmul.f32.gmra.mxu0 %v377
        %v2468 = vpop.f32.mrf.mxu0
        %v2469 = vadd.f32 %v2419, %v2468
        %2470 = vmatmul.f32.gmra.mxu0 %v385
        %v2471 = vpop.f32.mrf.mxu0
        %v2472 = vadd.f32 %v2422, %v2471
        %2473 = vmatmul.f32.gmra.mxu0 %v393
        %v2474 = vpop.f32.mrf.mxu0
        %v2475 = vadd.f32 %v2425, %v2474
        %2476 = vmatmul.f32.gmra.mxu0 %v401
        %v2477 = vpop.f32.mrf.mxu0
        %v2478 = vadd.f32 %v2428, %v2477
        %2479 = vmatmul.f32.gmra.mxu0 %v409
        %v2480 = vpop.f32.mrf.mxu0
        %v2481 = vadd.f32 %v2431, %v2480
        %2482 = vdwg.mxu0
        %2483 = vmatpush.msra.mxu0 %v922
        %2484 = vmatpush.msra.mxu0 %v918
        %2485 = vmatpush.msra.mxu0 %v914
        %2486 = vmatpush.msra.mxu0 %v910
        %2487 = vmatpush.msra.mxu0 %v906
        %2488 = vmatpush.msra.mxu0 %v902
        %2489 = vmatpush.msra.mxu0 %v898
        %2490 = vmatpush.msra.mxu0 %v894
        %2491 = vmatpush.msra.mxu0 %v890
        %2492 = vmatpush.msra.mxu0 %v886
        %2493 = vmatpush.msra.mxu0 %v882
        %2494 = vmatpush.msra.mxu0 %v878
        %2495 = vmatpush.msra.mxu0 %v874
        %2496 = vmatpush.msra.mxu0 %v870
        %2497 = vmatpush.msra.mxu0 %v866
        %2498 = vmatpush.msra.mxu0 %v862
        %2499 = vmatmul.f32.gmra.mxu0 %v330
        %v2500 = vpop.f32.mrf.mxu0
        %v2501 = vadd.f32 %v2451, %v2500
        %2502 = vmatmul.f32.gmra.mxu0 %v338
        %v2503 = vpop.f32.mrf.mxu0
        %v2504 = vadd.f32 %v2454, %v2503
        %2505 = vmatmul.f32.gmra.mxu0 %v346
        %v2506 = vpop.f32.mrf.mxu0
        %v2507 = vadd.f32 %v2457, %v2506
        %2508 = vmatmul.f32.gmra.mxu0 %v354
        %v2509 = vpop.f32.mrf.mxu0
        %v2510 = vadd.f32 %v2460, %v2509
        %2511 = vmatmul.f32.gmra.mxu0 %v362
        %v2512 = vpop.f32.mrf.mxu0
        %v2513 = vadd.f32 %v2463, %v2512
        %2514 = vmatmul.f32.gmra.mxu0 %v370
        %v2515 = vpop.f32.mrf.mxu0
        %v2516 = vadd.f32 %v2466, %v2515
        %2517 = vmatmul.f32.gmra.mxu0 %v378
        %v2518 = vpop.f32.mrf.mxu0
        %v2519 = vadd.f32 %v2469, %v2518
        %2520 = vmatmul.f32.gmra.mxu0 %v386
        %v2521 = vpop.f32.mrf.mxu0
        %v2522 = vadd.f32 %v2472, %v2521
        %2523 = vmatmul.f32.gmra.mxu0 %v394
        %v2524 = vpop.f32.mrf.mxu0
        %v2525 = vadd.f32 %v2475, %v2524
        %2526 = vmatmul.f32.gmra.mxu0 %v402
        %v2527 = vpop.f32.mrf.mxu0
        %v2528 = vadd.f32 %v2478, %v2527
        %2529 = vmatmul.f32.gmra.mxu0 %v410
        %v2530 = vpop.f32.mrf.mxu0
        %v2531 = vadd.f32 %v2481, %v2530
        %2532 = vdwg.mxu0
        %v2533 = vtanh.pop %v1301
        %v2534 = vtanh.pop %v1701
        %v2535 = vtanh.pop %v1304
        %v2536 = vtanh.pop %v1704
        %v2537 = vtanh.pop %v1307
        %v2538 = vtanh.pop %v1707
        %v2539 = vtanh.pop %v1310
        %v2540 = vtanh.pop %v1710
        %v2541 = vtanh.pop %v1313
        %v2542 = vtanh.pop %v1713
        %v2543 = vtanh.pop %v1316
        %v2544 = vtanh.pop %v1716
        %v2545 = vtanh.pop %v1319
        %v2546 = vtanh.pop %v1719
        %v2547 = vtanh.pop %v1322
        %v2548 = vtanh.pop %v1722
        %v2549 = vtanh.pop %v1325
        %v2550 = vtanh.pop %v1725
        %v2551 = vtanh.pop %v1328
        %v2552 = vtanh.pop %v1728
        %v2553 = vtanh.pop %v1331
        %v2554 = vtanh.pop %v1731
        %v2555 = vxor.u32 %v2101, 2147483648
        %v2556 = vxor.u32 %v2501, 2147483648
        %v2557 = vxor.u32 %v2104, 2147483648
        %v2558 = vxor.u32 %v2504, 2147483648
        %v2559 = vxor.u32 %v2107, 2147483648
        %v2560 = vxor.u32 %v2507, 2147483648
        %v2561 = vxor.u32 %v2110, 2147483648
        %v2562 = vxor.u32 %v2510, 2147483648
        %v2563 = vxor.u32 %v2113, 2147483648
        %v2564 = vxor.u32 %v2513, 2147483648
        %v2565 = vxor.u32 %v2116, 2147483648
        %v2566 = vxor.u32 %v2516, 2147483648
        %v2567 = vxor.u32 %v2119, 2147483648
        %v2568 = vxor.u32 %v2519, 2147483648
        %v2569 = vxor.u32 %v2122, 2147483648
        %v2570 = vxor.u32 %v2522, 2147483648
        %v2571 = vxor.u32 %v2125, 2147483648
        %v2572 = vxor.u32 %v2525, 2147483648
        %v2573 = vxor.u32 %v2128, 2147483648
        %v2574 = vxor.u32 %v2528, 2147483648
        %v2575 = vxor.u32 %v2131, 2147483648
        %v2576 = vxor.u32 %v2531, 2147483648
        %v2577 = vmul.f32 %v2555, 1.442695
        %v2578 = vpow.pop %v2577
        %v2579 = vmul.f32 %v2556, 1.442695
        %v2580 = vpow.pop %v2579
        %v2581 = vmul.f32 %v2557, 1.442695
        %v2582 = vpow.pop %v2581
        %v2583 = vmul.f32 %v2558, 1.442695
        %v2584 = vpow.pop %v2583
        %v2585 = vmul.f32 %v2559, 1.442695
        %v2586 = vpow.pop %v2585
        %v2587 = vmul.f32 %v2560, 1.442695
        %v2588 = vpow.pop %v2587
        %v2589 = vmul.f32 %v2561, 1.442695
        %v2590 = vpow.pop %v2589
        %v2591 = vmul.f32 %v2562, 1.442695
        %v2592 = vpow.pop %v2591
        %v2593 = vmul.f32 %v2563, 1.442695
        %v2594 = vpow.pop %v2593
        %v2595 = vmul.f32 %v2564, 1.442695
        %v2596 = vpow.pop %v2595
        %v2597 = vmul.f32 %v2565, 1.442695
        %v2598 = vpow.pop %v2597
        %v2599 = vmul.f32 %v2566, 1.442695
        %v2600 = vpow.pop %v2599
        %v2601 = vmul.f32 %v2567, 1.442695
        %v2602 = vpow.pop %v2601
        %v2603 = vmul.f32 %v2568, 1.442695
        %v2604 = vpow.pop %v2603
        %v2605 = vmul.f32 %v2569, 1.442695
        %v2606 = vpow.pop %v2605
        %v2607 = vmul.f32 %v2570, 1.442695
        %v2608 = vpow.pop %v2607
        %v2609 = vmul.f32 %v2571, 1.442695
        %v2610 = vpow.pop %v2609
        %v2611 = vmul.f32 %v2572, 1.442695
        %v2612 = vpow.pop %v2611
        %v2613 = vmul.f32 %v2573, 1.442695
        %v2614 = vpow.pop %v2613
        %v2615 = vmul.f32 %v2574, 1.442695
        %v2616 = vpow.pop %v2615
        %v2617 = vmul.f32 %v2575, 1.442695
        %v2618 = vpow.pop %v2617
        %v2619 = vmul.f32 %v2576, 1.442695
        %v2620 = vpow.pop %v2619
        %v2621 = vadd.f32 %v2578, 1.0
        %v2622 = vadd.f32 %v2580, 1.0
        %v2623 = vadd.f32 %v2582, 1.0
        %v2624 = vadd.f32 %v2584, 1.0
        %v2625 = vadd.f32 %v2586, 1.0
        %v2626 = vadd.f32 %v2588, 1.0
        %v2627 = vadd.f32 %v2590, 1.0
        %v2628 = vadd.f32 %v2592, 1.0
        %v2629 = vadd.f32 %v2594, 1.0
        %v2630 = vadd.f32 %v2596, 1.0
        %v2631 = vadd.f32 %v2598, 1.0
        %v2632 = vadd.f32 %v2600, 1.0
        %v2633 = vadd.f32 %v2602, 1.0
        %v2634 = vadd.f32 %v2604, 1.0
        %v2635 = vadd.f32 %v2606, 1.0
        %v2636 = vadd.f32 %v2608, 1.0
        %v2637 = vadd.f32 %v2610, 1.0
        %v2638 = vadd.f32 %v2612, 1.0
        %v2639 = vadd.f32 %v2614, 1.0
        %v2640 = vadd.f32 %v2616, 1.0
        %v2641 = vadd.f32 %v2618, 1.0
        %v2642 = vadd.f32 %v2620, 1.0
        %v2643 = vrcp.pop %v2621
        %v2644 = vmul.f32 %v2621, %v2643
        %v2645 = vsub.f32 1.0, %v2644
        %v2646 = vmul.f32 %v2643, %v2645
        %v2647 = vadd.f32 %v2643, %v2646
        %vm2648 = vweird.f32 %v2621
        %vm2649 = vweird.f32 %v2643
        %vm2650 = vmor %vm2648, %vm2649
        %v2651 = vsel %vm2650, %v2643, %v2647
        %v2652 = vand.u32 2147483647, %v2621
        %vm2653 = vcmp.eq.f32.partialorder %v2652, 8.507059e+37
        %v2654 = vand.u32 %v2621, 2147483648
        %v2655 = vor.u32 1.1754944e-38, %v2654
        %v2656 = vsel %vm2653, %v2655, %v2651
        %v2657 = vmul.f32 1.0, %v2656
        %v2658 = vrcp.pop %v2622
        %v2659 = vmul.f32 %v2622, %v2658
        %v2660 = vsub.f32 1.0, %v2659
        %v2661 = vmul.f32 %v2658, %v2660
        %v2662 = vadd.f32 %v2658, %v2661
        %vm2663 = vweird.f32 %v2622
        %vm2664 = vweird.f32 %v2658
        %vm2665 = vmor %vm2663, %vm2664
        %v2666 = vsel %vm2665, %v2658, %v2662
        %v2667 = vand.u32 2147483647, %v2622
        %vm2668 = vcmp.eq.f32.partialorder %v2667, 8.507059e+37
        %v2669 = vand.u32 %v2622, 2147483648
        %v2670 = vor.u32 1.1754944e-38, %v2669
        %v2671 = vsel %vm2668, %v2670, %v2666
        %v2672 = vmul.f32 1.0, %v2671
        %v2673 = vrcp.pop %v2623
        %v2674 = vmul.f32 %v2623, %v2673
        %v2675 = vsub.f32 1.0, %v2674
        %v2676 = vmul.f32 %v2673, %v2675
        %v2677 = vadd.f32 %v2673, %v2676
        %vm2678 = vweird.f32 %v2623
        %vm2679 = vweird.f32 %v2673
        %vm2680 = vmor %vm2678, %vm2679
        %v2681 = vsel %vm2680, %v2673, %v2677
        %v2682 = vand.u32 2147483647, %v2623
        %vm2683 = vcmp.eq.f32.partialorder %v2682, 8.507059e+37
        %v2684 = vand.u32 %v2623, 2147483648
        %v2685 = vor.u32 1.1754944e-38, %v2684
        %v2686 = vsel %vm2683, %v2685, %v2681
        %v2687 = vmul.f32 1.0, %v2686
        %v2688 = vrcp.pop %v2624
        %v2689 = vmul.f32 %v2624, %v2688
        %v2690 = vsub.f32 1.0, %v2689
        %v2691 = vmul.f32 %v2688, %v2690
        %v2692 = vadd.f32 %v2688, %v2691
        %vm2693 = vweird.f32 %v2624
        %vm2694 = vweird.f32 %v2688
        %vm2695 = vmor %vm2693, %vm2694
        %v2696 = vsel %vm2695, %v2688, %v2692
        %v2697 = vand.u32 2147483647, %v2624
        %vm2698 = vcmp.eq.f32.partialorder %v2697, 8.507059e+37
        %v2699 = vand.u32 %v2624, 2147483648
        %v2700 = vor.u32 1.1754944e-38, %v2699
        %v2701 = vsel %vm2698, %v2700, %v2696
        %v2702 = vmul.f32 1.0, %v2701
        %v2703 = vrcp.pop %v2625
        %v2704 = vmul.f32 %v2625, %v2703
        %v2705 = vsub.f32 1.0, %v2704
        %v2706 = vmul.f32 %v2703, %v2705
        %v2707 = vadd.f32 %v2703, %v2706
        %vm2708 = vweird.f32 %v2625
        %vm2709 = vweird.f32 %v2703
        %vm2710 = vmor %vm2708, %vm2709
        %v2711 = vsel %vm2710, %v2703, %v2707
        %v2712 = vand.u32 2147483647, %v2625
        %vm2713 = vcmp.eq.f32.partialorder %v2712, 8.507059e+37
        %v2714 = vand.u32 %v2625, 2147483648
        %v2715 = vor.u32 1.1754944e-38, %v2714
        %v2716 = vsel %vm2713, %v2715, %v2711
        %v2717 = vmul.f32 1.0, %v2716
        %v2718 = vrcp.pop %v2626
        %v2719 = vmul.f32 %v2626, %v2718
        %v2720 = vsub.f32 1.0, %v2719
        %v2721 = vmul.f32 %v2718, %v2720
        %v2722 = vadd.f32 %v2718, %v2721
        %vm2723 = vweird.f32 %v2626
        %vm2724 = vweird.f32 %v2718
        %vm2725 = vmor %vm2723, %vm2724
        %v2726 = vsel %vm2725, %v2718, %v2722
        %v2727 = vand.u32 2147483647, %v2626
        %vm2728 = vcmp.eq.f32.partialorder %v2727, 8.507059e+37
        %v2729 = vand.u32 %v2626, 2147483648
        %v2730 = vor.u32 1.1754944e-38, %v2729
        %v2731 = vsel %vm2728, %v2730, %v2726
        %v2732 = vmul.f32 1.0, %v2731
        %v2733 = vrcp.pop %v2627
        %v2734 = vmul.f32 %v2627, %v2733
        %v2735 = vsub.f32 1.0, %v2734
        %v2736 = vmul.f32 %v2733, %v2735
        %v2737 = vadd.f32 %v2733, %v2736
        %vm2738 = vweird.f32 %v2627
        %vm2739 = vweird.f32 %v2733
        %vm2740 = vmor %vm2738, %vm2739
        %v2741 = vsel %vm2740, %v2733, %v2737
        %v2742 = vand.u32 2147483647, %v2627
        %vm2743 = vcmp.eq.f32.partialorder %v2742, 8.507059e+37
        %v2744 = vand.u32 %v2627, 2147483648
        %v2745 = vor.u32 1.1754944e-38, %v2744
        %v2746 = vsel %vm2743, %v2745, %v2741
        %v2747 = vmul.f32 1.0, %v2746
        %v2748 = vrcp.pop %v2628
        %v2749 = vmul.f32 %v2628, %v2748
        %v2750 = vsub.f32 1.0, %v2749
        %v2751 = vmul.f32 %v2748, %v2750
        %v2752 = vadd.f32 %v2748, %v2751
        %vm2753 = vweird.f32 %v2628
        %vm2754 = vweird.f32 %v2748
        %vm2755 = vmor %vm2753, %vm2754
        %v2756 = vsel %vm2755, %v2748, %v2752
        %v2757 = vand.u32 2147483647, %v2628
        %vm2758 = vcmp.eq.f32.partialorder %v2757, 8.507059e+37
        %v2759 = vand.u32 %v2628, 2147483648
        %v2760 = vor.u32 1.1754944e-38, %v2759
        %v2761 = vsel %vm2758, %v2760, %v2756
        %v2762 = vmul.f32 1.0, %v2761
        %v2763 = vrcp.pop %v2629
        %v2764 = vmul.f32 %v2629, %v2763
        %v2765 = vsub.f32 1.0, %v2764
        %v2766 = vmul.f32 %v2763, %v2765
        %v2767 = vadd.f32 %v2763, %v2766
        %vm2768 = vweird.f32 %v2629
        %vm2769 = vweird.f32 %v2763
        %vm2770 = vmor %vm2768, %vm2769
        %v2771 = vsel %vm2770, %v2763, %v2767
        %v2772 = vand.u32 2147483647, %v2629
        %vm2773 = vcmp.eq.f32.partialorder %v2772, 8.507059e+37
        %v2774 = vand.u32 %v2629, 2147483648
        %v2775 = vor.u32 1.1754944e-38, %v2774
        %v2776 = vsel %vm2773, %v2775, %v2771
        %v2777 = vmul.f32 1.0, %v2776
        %v2778 = vrcp.pop %v2630
        %v2779 = vmul.f32 %v2630, %v2778
        %v2780 = vsub.f32 1.0, %v2779
        %v2781 = vmul.f32 %v2778, %v2780
        %v2782 = vadd.f32 %v2778, %v2781
        %vm2783 = vweird.f32 %v2630
        %vm2784 = vweird.f32 %v2778
        %vm2785 = vmor %vm2783, %vm2784
        %v2786 = vsel %vm2785, %v2778, %v2782
        %v2787 = vand.u32 2147483647, %v2630
        %vm2788 = vcmp.eq.f32.partialorder %v2787, 8.507059e+37
        %v2789 = vand.u32 %v2630, 2147483648
        %v2790 = vor.u32 1.1754944e-38, %v2789
        %v2791 = vsel %vm2788, %v2790, %v2786
        %v2792 = vmul.f32 1.0, %v2791
        %v2793 = vrcp.pop %v2631
        %v2794 = vmul.f32 %v2631, %v2793
        %v2795 = vsub.f32 1.0, %v2794
        %v2796 = vmul.f32 %v2793, %v2795
        %v2797 = vadd.f32 %v2793, %v2796
        %vm2798 = vweird.f32 %v2631
        %vm2799 = vweird.f32 %v2793
        %vm2800 = vmor %vm2798, %vm2799
        %v2801 = vsel %vm2800, %v2793, %v2797
        %v2802 = vand.u32 2147483647, %v2631
        %vm2803 = vcmp.eq.f32.partialorder %v2802, 8.507059e+37
        %v2804 = vand.u32 %v2631, 2147483648
        %v2805 = vor.u32 1.1754944e-38, %v2804
        %v2806 = vsel %vm2803, %v2805, %v2801
        %v2807 = vmul.f32 1.0, %v2806
        %v2808 = vrcp.pop %v2632
        %v2809 = vmul.f32 %v2632, %v2808
        %v2810 = vsub.f32 1.0, %v2809
        %v2811 = vmul.f32 %v2808, %v2810
        %v2812 = vadd.f32 %v2808, %v2811
        %vm2813 = vweird.f32 %v2632
        %vm2814 = vweird.f32 %v2808
        %vm2815 = vmor %vm2813, %vm2814
        %v2816 = vsel %vm2815, %v2808, %v2812
        %v2817 = vand.u32 2147483647, %v2632
        %vm2818 = vcmp.eq.f32.partialorder %v2817, 8.507059e+37
        %v2819 = vand.u32 %v2632, 2147483648
        %v2820 = vor.u32 1.1754944e-38, %v2819
        %v2821 = vsel %vm2818, %v2820, %v2816
        %v2822 = vmul.f32 1.0, %v2821
        %v2823 = vrcp.pop %v2633
        %v2824 = vmul.f32 %v2633, %v2823
        %v2825 = vsub.f32 1.0, %v2824
        %v2826 = vmul.f32 %v2823, %v2825
        %v2827 = vadd.f32 %v2823, %v2826
        %vm2828 = vweird.f32 %v2633
        %vm2829 = vweird.f32 %v2823
        %vm2830 = vmor %vm2828, %vm2829
        %v2831 = vsel %vm2830, %v2823, %v2827
        %v2832 = vand.u32 2147483647, %v2633
        %vm2833 = vcmp.eq.f32.partialorder %v2832, 8.507059e+37
        %v2834 = vand.u32 %v2633, 2147483648
        %v2835 = vor.u32 1.1754944e-38, %v2834
        %v2836 = vsel %vm2833, %v2835, %v2831
        %v2837 = vmul.f32 1.0, %v2836
        %v2838 = vrcp.pop %v2634
        %v2839 = vmul.f32 %v2634, %v2838
        %v2840 = vsub.f32 1.0, %v2839
        %v2841 = vmul.f32 %v2838, %v2840
        %v2842 = vadd.f32 %v2838, %v2841
        %vm2843 = vweird.f32 %v2634
        %vm2844 = vweird.f32 %v2838
        %vm2845 = vmor %vm2843, %vm2844
        %v2846 = vsel %vm2845, %v2838, %v2842
        %v2847 = vand.u32 2147483647, %v2634
        %vm2848 = vcmp.eq.f32.partialorder %v2847, 8.507059e+37
        %v2849 = vand.u32 %v2634, 2147483648
        %v2850 = vor.u32 1.1754944e-38, %v2849
        %v2851 = vsel %vm2848, %v2850, %v2846
        %v2852 = vmul.f32 1.0, %v2851
        %v2853 = vrcp.pop %v2635
        %v2854 = vmul.f32 %v2635, %v2853
        %v2855 = vsub.f32 1.0, %v2854
        %v2856 = vmul.f32 %v2853, %v2855
        %v2857 = vadd.f32 %v2853, %v2856
        %vm2858 = vweird.f32 %v2635
        %vm2859 = vweird.f32 %v2853
        %vm2860 = vmor %vm2858, %vm2859
        %v2861 = vsel %vm2860, %v2853, %v2857
        %v2862 = vand.u32 2147483647, %v2635
        %vm2863 = vcmp.eq.f32.partialorder %v2862, 8.507059e+37
        %v2864 = vand.u32 %v2635, 2147483648
        %v2865 = vor.u32 1.1754944e-38, %v2864
        %v2866 = vsel %vm2863, %v2865, %v2861
        %v2867 = vmul.f32 1.0, %v2866
        %v2868 = vrcp.pop %v2636
        %v2869 = vmul.f32 %v2636, %v2868
        %v2870 = vsub.f32 1.0, %v2869
        %v2871 = vmul.f32 %v2868, %v2870
        %v2872 = vadd.f32 %v2868, %v2871
        %vm2873 = vweird.f32 %v2636
        %vm2874 = vweird.f32 %v2868
        %vm2875 = vmor %vm2873, %vm2874
        %v2876 = vsel %vm2875, %v2868, %v2872
        %v2877 = vand.u32 2147483647, %v2636
        %vm2878 = vcmp.eq.f32.partialorder %v2877, 8.507059e+37
        %v2879 = vand.u32 %v2636, 2147483648
        %v2880 = vor.u32 1.1754944e-38, %v2879
        %v2881 = vsel %vm2878, %v2880, %v2876
        %v2882 = vmul.f32 1.0, %v2881
        %v2883 = vrcp.pop %v2637
        %v2884 = vmul.f32 %v2637, %v2883
        %v2885 = vsub.f32 1.0, %v2884
        %v2886 = vmul.f32 %v2883, %v2885
        %v2887 = vadd.f32 %v2883, %v2886
        %vm2888 = vweird.f32 %v2637
        %vm2889 = vweird.f32 %v2883
        %vm2890 = vmor %vm2888, %vm2889
        %v2891 = vsel %vm2890, %v2883, %v2887
        %v2892 = vand.u32 2147483647, %v2637
        %vm2893 = vcmp.eq.f32.partialorder %v2892, 8.507059e+37
        %v2894 = vand.u32 %v2637, 2147483648
        %v2895 = vor.u32 1.1754944e-38, %v2894
        %v2896 = vsel %vm2893, %v2895, %v2891
        %v2897 = vmul.f32 1.0, %v2896
        %v2898 = vrcp.pop %v2638
        %v2899 = vmul.f32 %v2638, %v2898
        %v2900 = vsub.f32 1.0, %v2899
        %v2901 = vmul.f32 %v2898, %v2900
        %v2902 = vadd.f32 %v2898, %v2901
        %vm2903 = vweird.f32 %v2638
        %vm2904 = vweird.f32 %v2898
        %vm2905 = vmor %vm2903, %vm2904
        %v2906 = vsel %vm2905, %v2898, %v2902
        %v2907 = vand.u32 2147483647, %v2638
        %vm2908 = vcmp.eq.f32.partialorder %v2907, 8.507059e+37
        %v2909 = vand.u32 %v2638, 2147483648
        %v2910 = vor.u32 1.1754944e-38, %v2909
        %v2911 = vsel %vm2908, %v2910, %v2906
        %v2912 = vmul.f32 1.0, %v2911
        %v2913 = vrcp.pop %v2639
        %v2914 = vmul.f32 %v2639, %v2913
        %v2915 = vsub.f32 1.0, %v2914
        %v2916 = vmul.f32 %v2913, %v2915
        %v2917 = vadd.f32 %v2913, %v2916
        %vm2918 = vweird.f32 %v2639
        %vm2919 = vweird.f32 %v2913
        %vm2920 = vmor %vm2918, %vm2919
        %v2921 = vsel %vm2920, %v2913, %v2917
        %v2922 = vand.u32 2147483647, %v2639
        %vm2923 = vcmp.eq.f32.partialorder %v2922, 8.507059e+37
        %v2924 = vand.u32 %v2639, 2147483648
        %v2925 = vor.u32 1.1754944e-38, %v2924
        %v2926 = vsel %vm2923, %v2925, %v2921
        %v2927 = vmul.f32 1.0, %v2926
        %v2928 = vrcp.pop %v2640
        %v2929 = vmul.f32 %v2640, %v2928
        %v2930 = vsub.f32 1.0, %v2929
        %v2931 = vmul.f32 %v2928, %v2930
        %v2932 = vadd.f32 %v2928, %v2931
        %vm2933 = vweird.f32 %v2640
        %vm2934 = vweird.f32 %v2928
        %vm2935 = vmor %vm2933, %vm2934
        %v2936 = vsel %vm2935, %v2928, %v2932
        %v2937 = vand.u32 2147483647, %v2640
        %vm2938 = vcmp.eq.f32.partialorder %v2937, 8.507059e+37
        %v2939 = vand.u32 %v2640, 2147483648
        %v2940 = vor.u32 1.1754944e-38, %v2939
        %v2941 = vsel %vm2938, %v2940, %v2936
        %v2942 = vmul.f32 1.0, %v2941
        %v2943 = vrcp.pop %v2641
        %v2944 = vmul.f32 %v2641, %v2943
        %v2945 = vsub.f32 1.0, %v2944
        %v2946 = vmul.f32 %v2943, %v2945
        %v2947 = vadd.f32 %v2943, %v2946
        %vm2948 = vweird.f32 %v2641
        %vm2949 = vweird.f32 %v2943
        %vm2950 = vmor %vm2948, %vm2949
        %v2951 = vsel %vm2950, %v2943, %v2947
        %v2952 = vand.u32 2147483647, %v2641
        %vm2953 = vcmp.eq.f32.partialorder %v2952, 8.507059e+37
        %v2954 = vand.u32 %v2641, 2147483648
        %v2955 = vor.u32 1.1754944e-38, %v2954
        %v2956 = vsel %vm2953, %v2955, %v2951
        %v2957 = vmul.f32 1.0, %v2956
        %v2958 = vrcp.pop %v2642
        %v2959 = vmul.f32 %v2642, %v2958
        %v2960 = vsub.f32 1.0, %v2959
        %v2961 = vmul.f32 %v2958, %v2960
        %v2962 = vadd.f32 %v2958, %v2961
        %vm2963 = vweird.f32 %v2642
        %vm2964 = vweird.f32 %v2958
        %vm2965 = vmor %vm2963, %vm2964
        %v2966 = vsel %vm2965, %v2958, %v2962
        %v2967 = vand.u32 2147483647, %v2642
        %vm2968 = vcmp.eq.f32.partialorder %v2967, 8.507059e+37
        %v2969 = vand.u32 %v2642, 2147483648
        %v2970 = vor.u32 1.1754944e-38, %v2969
        %v2971 = vsel %vm2968, %v2970, %v2966
        %v2972 = vmul.f32 1.0, %v2971
        %v2973 = vmul.f32 %v2533, %v2657
        %v2974 = vmul.f32 %v2534, %v2672
        %v2975 = vmul.f32 %v2535, %v2687
        %v2976 = vmul.f32 %v2536, %v2702
        %v2977 = vmul.f32 %v2537, %v2717
        %v2978 = vmul.f32 %v2538, %v2732
        %v2979 = vmul.f32 %v2539, %v2747
        %v2980 = vmul.f32 %v2540, %v2762
        %v2981 = vmul.f32 %v2541, %v2777
        %v2982 = vmul.f32 %v2542, %v2792
        %v2983 = vmul.f32 %v2543, %v2807
        %v2984 = vmul.f32 %v2544, %v2822
        %v2985 = vmul.f32 %v2545, %v2837
        %v2986 = vmul.f32 %v2546, %v2852
        %v2987 = vmul.f32 %v2547, %v2867
        %v2988 = vmul.f32 %v2548, %v2882
        %v2989 = vmul.f32 %v2549, %v2897
        %v2990 = vmul.f32 %v2550, %v2912
        %v2991 = vmul.f32 %v2551, %v2927
        %v2992 = vmul.f32 %v2552, %v2942
        %v2993 = vmul.f32 %v2553, %v2957
        %v2994 = vmul.f32 %v2554, %v2972
        %v2995 = vld [vmem:[#allocation7] sm:$0xff]
        %v2996 = vld [vmem:[#allocation7 + $0x8] sm:$0xff]
        %v2997 = vld [vmem:[#allocation7 + $0x10] sm:$0xff]
        %v2998 = vld [vmem:[#allocation7 + $0x18] sm:$0xff]
        %v2999 = vld [vmem:[#allocation7 + $0x20] sm:$0xff]
        %v3000 = vld [vmem:[#allocation7 + $0x28] sm:$0xff]
        %v3001 = vld [vmem:[#allocation7 + $0x30] sm:$0xff]
        %v3002 = vld [vmem:[#allocation7 + $0x38] sm:$0xff]
        %v3003 = vld [vmem:[#allocation7 + $0x40] sm:$0xff]
        %v3004 = vld [vmem:[#allocation7 + $0x48] sm:$0xff]
        %v3005 = vld [vmem:[#allocation7 + $0x50] sm:$0xff]
        %v3006 = vld [vmem:[#allocation7 + $0x58] sm:$0xff]
        %v3007 = vld [vmem:[#allocation7 + $0x60] sm:$0xff]
        %v3008 = vld [vmem:[#allocation7 + $0x68] sm:$0xff]
        %v3009 = vld [vmem:[#allocation7 + $0x70] sm:$0xff]
        %v3010 = vld [vmem:[#allocation7 + $0x78] sm:$0xff]
        %v3011 = vld [vmem:[#allocation7 + $0x80] sm:$0xff]
        %v3012 = vld [vmem:[#allocation7 + $0x88] sm:$0xff]
        %v3013 = vld [vmem:[#allocation7 + $0x90] sm:$0xff]
        %v3014 = vld [vmem:[#allocation7 + $0x98] sm:$0xff]
        %v3015 = vld [vmem:[#allocation7 + $0xa0] sm:$0xff]
        %v3016 = vld [vmem:[#allocation7 + $0xa8] sm:$0xff]
        %v3017 = vld [vmem:[#allocation7 + $0xb0] sm:$0xff]
        %v3018 = vld [vmem:[#allocation7 + $0xb8] sm:$0xff]
        %v3019 = vld [vmem:[#allocation7 + $0xc0] sm:$0xff]
        %v3020 = vld [vmem:[#allocation7 + $0xc8] sm:$0xff]
        %v3021 = vld [vmem:[#allocation7 + $0xd0] sm:$0xff]
        %v3022 = vld [vmem:[#allocation7 + $0xd8] sm:$0xff]
        %v3023 = vld [vmem:[#allocation7 + $0xe0] sm:$0xff]
        %v3024 = vld [vmem:[#allocation7 + $0xe8] sm:$0xff]
        %v3025 = vld [vmem:[#allocation7 + $0xf0] sm:$0xff]
        %v3026 = vld [vmem:[#allocation7 + $0xf8] sm:$0xff]
        %v3027 = vld [vmem:[#allocation9] sm:$0x1]
        %v3029 = vperm.slane %v3027, 0
        %3031 = vmatpush.msra.mxu0 %v3010
        %3032 = vmatpush.msra.mxu0 %v3009
        %3033 = vmatpush.msra.mxu0 %v3008
        %3034 = vmatpush.msra.mxu0 %v3007
        %3035 = vmatpush.msra.mxu0 %v3006
        %3036 = vmatpush.msra.mxu0 %v3005
        %3037 = vmatpush.msra.mxu0 %v3004
        %3038 = vmatpush.msra.mxu0 %v3003
        %3039 = vmatpush.msra.mxu0 %v3002
        %3040 = vmatpush.msra.mxu0 %v3001
        %3041 = vmatpush.msra.mxu0 %v3000
        %3042 = vmatpush.msra.mxu0 %v2999
        %3043 = vmatpush.msra.mxu0 %v2998
        %3044 = vmatpush.msra.mxu0 %v2997
        %3045 = vmatpush.msra.mxu0 %v2996
        %3046 = vmatpush.msra.mxu0 %v2995
        %3047 = vmatmul.f32.gmra.mxu0 %v2973
        %v3048 = vpop.f32.mrf.mxu0
        %v3049 = vadd.f32 %v3029, %v3048
        %3050 = vmatmul.f32.gmra.mxu0 %v2975
        %v3051 = vpop.f32.mrf.mxu0
        %v3052 = vadd.f32 %v3029, %v3051
        %3053 = vmatmul.f32.gmra.mxu0 %v2977
        %v3054 = vpop.f32.mrf.mxu0
        %v3055 = vadd.f32 %v3029, %v3054
        %3056 = vmatmul.f32.gmra.mxu0 %v2979
        %v3057 = vpop.f32.mrf.mxu0
        %v3058 = vadd.f32 %v3029, %v3057
        %3059 = vmatmul.f32.gmra.mxu0 %v2981
        %v3060 = vpop.f32.mrf.mxu0
        %v3061 = vadd.f32 %v3029, %v3060
        %3062 = vmatmul.f32.gmra.mxu0 %v2983
        %v3063 = vpop.f32.mrf.mxu0
        %v3064 = vadd.f32 %v3029, %v3063
        %3065 = vmatmul.f32.gmra.mxu0 %v2985
        %v3066 = vpop.f32.mrf.mxu0
        %v3067 = vadd.f32 %v3029, %v3066
        %3068 = vmatmul.f32.gmra.mxu0 %v2987
        %v3069 = vpop.f32.mrf.mxu0
        %v3070 = vadd.f32 %v3029, %v3069
        %3071 = vmatmul.f32.gmra.mxu0 %v2989
        %v3072 = vpop.f32.mrf.mxu0
        %v3073 = vadd.f32 %v3029, %v3072
        %3074 = vmatmul.f32.gmra.mxu0 %v2991
        %v3075 = vpop.f32.mrf.mxu0
        %v3076 = vadd.f32 %v3029, %v3075
        %3077 = vmatmul.f32.gmra.mxu0 %v2993
        %v3078 = vpop.f32.mrf.mxu0
        %v3079 = vadd.f32 %v3029, %v3078
        %3080 = vdwg.mxu0
        %3081 = vmatpush.msra.mxu0 %v3026
        %3082 = vmatpush.msra.mxu0 %v3025
        %3083 = vmatpush.msra.mxu0 %v3024
        %3084 = vmatpush.msra.mxu0 %v3023
        %3085 = vmatpush.msra.mxu0 %v3022
        %3086 = vmatpush.msra.mxu0 %v3021
        %3087 = vmatpush.msra.mxu0 %v3020
        %3088 = vmatpush.msra.mxu0 %v3019
        %3089 = vmatpush.msra.mxu0 %v3018
        %3090 = vmatpush.msra.mxu0 %v3017
        %3091 = vmatpush.msra.mxu0 %v3016
        %3092 = vmatpush.msra.mxu0 %v3015
        %3093 = vmatpush.msra.mxu0 %v3014
        %3094 = vmatpush.msra.mxu0 %v3013
        %3095 = vmatpush.msra.mxu0 %v3012
        %3096 = vmatpush.msra.mxu0 %v3011
        %3097 = vmatmul.f32.gmra.mxu0 %v2974
        %v3098 = vpop.f32.mrf.mxu0
        %v3099 = vadd.f32 %v3049, %v3098
        %3100 = vmatmul.f32.gmra.mxu0 %v2976
        %v3101 = vpop.f32.mrf.mxu0
        %v3102 = vadd.f32 %v3052, %v3101
        %3103 = vmatmul.f32.gmra.mxu0 %v2978
        %v3104 = vpop.f32.mrf.mxu0
        %v3105 = vadd.f32 %v3055, %v3104
        %3106 = vmatmul.f32.gmra.mxu0 %v2980
        %v3107 = vpop.f32.mrf.mxu0
        %v3108 = vadd.f32 %v3058, %v3107
        %3109 = vmatmul.f32.gmra.mxu0 %v2982
        %v3110 = vpop.f32.mrf.mxu0
        %v3111 = vadd.f32 %v3061, %v3110
        %3112 = vmatmul.f32.gmra.mxu0 %v2984
        %v3113 = vpop.f32.mrf.mxu0
        %v3114 = vadd.f32 %v3064, %v3113
        %3115 = vmatmul.f32.gmra.mxu0 %v2986
        %v3116 = vpop.f32.mrf.mxu0
        %v3117 = vadd.f32 %v3067, %v3116
        %3118 = vmatmul.f32.gmra.mxu0 %v2988
        %v3119 = vpop.f32.mrf.mxu0
        %v3120 = vadd.f32 %v3070, %v3119
        %3121 = vmatmul.f32.gmra.mxu0 %v2990
        %v3122 = vpop.f32.mrf.mxu0
        %v3123 = vadd.f32 %v3073, %v3122
        %3124 = vmatmul.f32.gmra.mxu0 %v2992
        %v3125 = vpop.f32.mrf.mxu0
        %v3126 = vadd.f32 %v3076, %v3125
        %3127 = vmatmul.f32.gmra.mxu0 %v2994
        %v3128 = vpop.f32.mrf.mxu0
        %v3129 = vadd.f32 %v3079, %v3128
        %3130 = vdwg.mxu0
        %vm3131 = vcmask 7168
        %3132 = vst.msk [vmem:[%s311] sm:$0xff] %vm3131, %v3099
        %3133 = vst.msk [vmem:[%s311 + $0x8] sm:$0xff] %vm3131, %v3102
        %3134 = vst.msk [vmem:[%s311 + $0x10] sm:$0xff] %vm3131, %v3105
        %3135 = vst.msk [vmem:[%s311 + $0x18] sm:$0xff] %vm3131, %v3108
        %3136 = vst.msk [vmem:[%s311 + $0x20] sm:$0xff] %vm3131, %v3111
        %3137 = vst.msk [vmem:[%s311 + $0x28] sm:$0xff] %vm3131, %v3114
        %3138 = vst.msk [vmem:[%s311 + $0x30] sm:$0xff] %vm3131, %v3117
        %3139 = vst.msk [vmem:[%s311 + $0x38] sm:$0xff] %vm3131, %v3120
        %3140 = vst.msk [vmem:[%s311 + $0x40] sm:$0xff] %vm3131, %v3123
        %3141 = vst.msk [vmem:[%s311 + $0x48] sm:$0xff] %vm3131, %v3126
        %3142 = vst.msk [vmem:[%s311 + $0x50] sm:$0xff] %vm3131, %v3129
        %s3143 = sand.u32 %s139, 1
        %s3144 = sand.u32 %s139, 1
        %s3145 = smul.addr %s3144, 88
        %s3146 = scalar_lea.vmem [#allocation10], %s3145
        // Predicated region
        $region61: #{tpu_custom_call.1} parent=39 // pred_check
          %p3147 = pneg %p149
        $region62: #{tpu_custom_call.1} parent=39 // pred_check_branch
          %3149 = sbr.rel (%p3147) target = $region64
        $region63: #{tpu_custom_call.1} parent=39 // pred_region
          %s3150 = smul.u32 11, %s21
          %s3151 = ssub.s32 42, %s3150
          %p3152 = scmp.lt.s32.totalorder %s3151, 11
          %s3153 = scalar_select %p3152, %s3151, 11
          %s3154 = smul.u32 8, %s3153
          %p3155 = scmp.ne.s32.totalorder 0, %s3154
          %s3156 = smul.addr %s3150, 8
          %s3157 = scalar_lea.vmem %s5, %s3156
          // Predicated region
          $region65: #{tpu_custom_call.1} parent=63 // pred_check
            %p3158 = pneg %p3155
          $region66: #{tpu_custom_call.1} parent=63 // pred_check_branch
            %3160 = sbr.rel (%p3158) target = $region68
          $region67: #{tpu_custom_call.1} parent=63 // pred_region
            // Predicated region
            $region69: #{tpu_custom_call.1} parent=67 // pred_check
              _
            $region70: #{tpu_custom_call.1} parent=67 // pred_check_branch
              %3162 = sbr.rel (0) target = $region72
            $region71: #{tpu_custom_call.1} parent=67 // pred_region
              // Predicated region
              $region91: #{tpu_custom_call.1} parent=71 // pred_check
                _
              $region92: #{tpu_custom_call.1} parent=71 // pred_check_branch
                %3233 = sbr.rel (0) target = $region94
              $region93: #{tpu_custom_call.1} parent=71 // pred_region
                %s3234 = sdiv.u32.pop %s3153, 11
                %s3235 = srem.u32.pop %s3153, 11
                // While loop
                $region95: #{tpu_custom_call.1} parent=93 // loop_pre_header
                  _
                $region96: #{tpu_custom_call.1} parent=93 // loop_header
                  %s3237 = sphi 0, %s3239
                  %p3238 = scmp.ge.s32.totalorder %s3237, %s3234
                  %s3242 = sphi 0, %s3269
                  %s3243 = sphi %s3146, %s3272
                  %s3244 = sphi %s3157, %s3273
                $region97: #{tpu_custom_call.1} parent=93 // loop_header_branch
                  %3241 = sbr.rel (%p3238) target = $region101
                $region98: #{tpu_custom_call.1} parent=93 // loop_body
                  %v3245 = vld [vmem:[%s3243] sm:$0xff]
                  %3246 = vst [vmem:[%s3244] sm:$0xff] %v3245
                  %v3247 = vld [vmem:[%s3243 + $0x8] sm:$0xff]
                  %3248 = vst [vmem:[%s3244 + $0x8] sm:$0xff] %v3247
                  %v3249 = vld [vmem:[%s3243 + $0x10] sm:$0xff]
                  %3250 = vst [vmem:[%s3244 + $0x10] sm:$0xff] %v3249
                  %v3251 = vld [vmem:[%s3243 + $0x18] sm:$0xff]
                  %3252 = vst [vmem:[%s3244 + $0x18] sm:$0xff] %v3251
                  %v3253 = vld [vmem:[%s3243 + $0x20] sm:$0xff]
                  %3254 = vst [vmem:[%s3244 + $0x20] sm:$0xff] %v3253
                  %v3255 = vld [vmem:[%s3243 + $0x28] sm:$0xff]
                  %3256 = vst [vmem:[%s3244 + $0x28] sm:$0xff] %v3255
                  %v3257 = vld [vmem:[%s3243 + $0x30] sm:$0xff]
                  %3258 = vst [vmem:[%s3244 + $0x30] sm:$0xff] %v3257
                  %v3259 = vld [vmem:[%s3243 + $0x38] sm:$0xff]
                  %3260 = vst [vmem:[%s3244 + $0x38] sm:$0xff] %v3259
                  %v3261 = vld [vmem:[%s3243 + $0x40] sm:$0xff]
                  %3262 = vst [vmem:[%s3244 + $0x40] sm:$0xff] %v3261
                  %v3263 = vld [vmem:[%s3243 + $0x48] sm:$0xff]
                  %3264 = vst [vmem:[%s3244 + $0x48] sm:$0xff] %v3263
                  %v3265 = vld [vmem:[%s3243 + $0x50] sm:$0xff]
                  %3266 = vst [vmem:[%s3244 + $0x50] sm:$0xff] %v3265
                  %s3267 = sadd.s32 1, %s3242
                  %p3268 = scmp.ge.s32.totalorder %s3267, %s3234
                  %s3269 = scalar_select %p3268, 0, %s3267
                  %s3270 = smul.u32 %s3269, 88
                  %s3271 = smul.u32 %s3269, 88
                  %s3272 = scalar_lea.vmem %s3146, %s3270 [#allocation10]
                  %s3273 = scalar_lea.vmem %s3157, %s3271
                $region99: #{tpu_custom_call.1} parent=93 // loop_footer
                  %s3239 = sadd.s32 %s3237, 1
                $region100: #{tpu_custom_call.1} parent=93 // loop_footer_branch
                  %3236 = sbr.rel target = $region96
                $region101: #{tpu_custom_call.1} parent=93 // loop_exit
                  _
                %s3274 = sdiv.u32.pop %s3153, 11
                %s3275 = srem.u32.pop %s3153, 11
                %s3276 = smul.u32 %s3274, 11
                %s3277 = smul.u32 8, %s3276
                %s3278 = scalar_lea.vmem %s3146, %s3277 [#allocation10]
                %s3279 = smul.u32 8, %s3276
                %s3280 = scalar_lea.vmem %s3157, %s3279
                // While loop
                $region102: #{tpu_custom_call.1} parent=93 // loop_pre_header
                  _
                $region103: #{tpu_custom_call.1} parent=93 // loop_header
                  %s3282 = sphi 0, %s3284
                  %p3283 = scmp.ge.s32.totalorder %s3282, %s3275
                  %s3287 = sphi 0, %s3294
                  %s3288 = sphi %s3278, %s3297
                  %s3289 = sphi %s3280, %s3298
                $region104: #{tpu_custom_call.1} parent=93 // loop_header_branch
                  %3286 = sbr.rel (%p3283) target = $region108
                $region105: #{tpu_custom_call.1} parent=93 // loop_body
                  %v3290 = vld [vmem:[%s3288] sm:$0xff]
                  %3291 = vst [vmem:[%s3289] sm:$0xff] %v3290
                  %s3292 = sadd.s32 1, %s3287
                  %p3293 = scmp.ge.s32.totalorder %s3292, %s3275
                  %s3294 = scalar_select %p3293, 0, %s3292
                  %s3295 = smul.u32 %s3294, 8
                  %s3296 = smul.u32 %s3294, 8
                  %s3297 = scalar_lea.vmem %s3278, %s3295 [#allocation10]
                  %s3298 = scalar_lea.vmem %s3280, %s3296
                $region106: #{tpu_custom_call.1} parent=93 // loop_footer
                  %s3284 = sadd.s32 %s3282, 1
                $region107: #{tpu_custom_call.1} parent=93 // loop_footer_branch
                  %3281 = sbr.rel target = $region103
                $region108: #{tpu_custom_call.1} parent=93 // loop_exit
                  _
              $region94: #{tpu_custom_call.1} parent=71 // pred_fallthru
                _
              // Predicated region
              $region109: #{tpu_custom_call.1} parent=71 // pred_check
                _
              $region110: #{tpu_custom_call.1} parent=71 // pred_check_branch
                %3300 = sbr.rel target = $region112
              $region111: #{tpu_custom_call.1} parent=71 // pred_region
                _
              $region112: #{tpu_custom_call.1} parent=71 // pred_fallthru
                _
            $region72: #{tpu_custom_call.1} parent=67 // pred_fallthru
              _
            // Predicated region
            $region73: #{tpu_custom_call.1} parent=67 // pred_check
              _
            $region74: #{tpu_custom_call.1} parent=67 // pred_check_branch
              %3164 = sbr.rel target = $region76
            $region75: #{tpu_custom_call.1} parent=67 // pred_region
              %s3166 = ssub.s32 256, 1
              %s3167 = sdiv.u32.pop %s3153, 11
              %s3168 = srem.u32.pop %s3153, 11
              // While loop
              $region77: #{tpu_custom_call.1} parent=75 // loop_pre_header
                _
              $region78: #{tpu_custom_call.1} parent=75 // loop_header
                %s3170 = sphi 0, %s3172
                %p3171 = scmp.ge.s32.totalorder %s3170, %s3167
                %s3175 = sphi 0, %s3202
                %s3176 = sphi %s3146, %s3205
                %s3177 = sphi %s3157, %s3206
              $region79: #{tpu_custom_call.1} parent=75 // loop_header_branch
                %3174 = sbr.rel (%p3171) target = $region83
              $region80: #{tpu_custom_call.1} parent=75 // loop_body
                %v3178 = vld [vmem:[%s3176] sm:%s3166]
                %3179 = vst [vmem:[%s3177] sm:%s3166] %v3178
                %v3180 = vld [vmem:[%s3176 + $0x8] sm:%s3166]
                %3181 = vst [vmem:[%s3177 + $0x8] sm:%s3166] %v3180
                %v3182 = vld [vmem:[%s3176 + $0x10] sm:%s3166]
                %3183 = vst [vmem:[%s3177 + $0x10] sm:%s3166] %v3182
                %v3184 = vld [vmem:[%s3176 + $0x18] sm:%s3166]
                %3185 = vst [vmem:[%s3177 + $0x18] sm:%s3166] %v3184
                %v3186 = vld [vmem:[%s3176 + $0x20] sm:%s3166]
                %3187 = vst [vmem:[%s3177 + $0x20] sm:%s3166] %v3186
                %v3188 = vld [vmem:[%s3176 + $0x28] sm:%s3166]
                %3189 = vst [vmem:[%s3177 + $0x28] sm:%s3166] %v3188
                %v3190 = vld [vmem:[%s3176 + $0x30] sm:%s3166]
                %3191 = vst [vmem:[%s3177 + $0x30] sm:%s3166] %v3190
                %v3192 = vld [vmem:[%s3176 + $0x38] sm:%s3166]
                %3193 = vst [vmem:[%s3177 + $0x38] sm:%s3166] %v3192
                %v3194 = vld [vmem:[%s3176 + $0x40] sm:%s3166]
                %3195 = vst [vmem:[%s3177 + $0x40] sm:%s3166] %v3194
                %v3196 = vld [vmem:[%s3176 + $0x48] sm:%s3166]
                %3197 = vst [vmem:[%s3177 + $0x48] sm:%s3166] %v3196
                %v3198 = vld [vmem:[%s3176 + $0x50] sm:%s3166]
                %3199 = vst [vmem:[%s3177 + $0x50] sm:%s3166] %v3198
                %s3200 = sadd.s32 1, %s3175
                %p3201 = scmp.ge.s32.totalorder %s3200, %s3167
                %s3202 = scalar_select %p3201, 0, %s3200
                %s3203 = smul.u32 %s3202, 88
                %s3204 = smul.u32 %s3202, 88
                %s3205 = scalar_lea.vmem %s3146, %s3203 [#allocation10]
                %s3206 = scalar_lea.vmem %s3157, %s3204
              $region81: #{tpu_custom_call.1} parent=75 // loop_footer
                %s3172 = sadd.s32 %s3170, 1
              $region82: #{tpu_custom_call.1} parent=75 // loop_footer_branch
                %3169 = sbr.rel target = $region78
              $region83: #{tpu_custom_call.1} parent=75 // loop_exit
                _
              %s3207 = sdiv.u32.pop %s3153, 11
              %s3208 = srem.u32.pop %s3153, 11
              %s3209 = smul.u32 %s3207, 11
              %s3210 = smul.u32 8, %s3209
              %s3211 = scalar_lea.vmem %s3146, %s3210 [#allocation10]
              %s3212 = smul.u32 8, %s3209
              %s3213 = scalar_lea.vmem %s3157, %s3212
              // While loop
              $region84: #{tpu_custom_call.1} parent=75 // loop_pre_header
                _
              $region85: #{tpu_custom_call.1} parent=75 // loop_header
                %s3215 = sphi 0, %s3217
                %p3216 = scmp.ge.s32.totalorder %s3215, %s3208
                %s3220 = sphi 0, %s3227
                %s3221 = sphi %s3211, %s3230
                %s3222 = sphi %s3213, %s3231
              $region86: #{tpu_custom_call.1} parent=75 // loop_header_branch
                %3219 = sbr.rel (%p3216) target = $region90
              $region87: #{tpu_custom_call.1} parent=75 // loop_body
                %v3223 = vld [vmem:[%s3221] sm:%s3166]
                %3224 = vst [vmem:[%s3222] sm:%s3166] %v3223
                %s3225 = sadd.s32 1, %s3220
                %p3226 = scmp.ge.s32.totalorder %s3225, %s3208
                %s3227 = scalar_select %p3226, 0, %s3225
                %s3228 = smul.u32 %s3227, 8
                %s3229 = smul.u32 %s3227, 8
                %s3230 = scalar_lea.vmem %s3211, %s3228 [#allocation10]
                %s3231 = scalar_lea.vmem %s3213, %s3229
              $region88: #{tpu_custom_call.1} parent=75 // loop_footer
                %s3217 = sadd.s32 %s3215, 1
              $region89: #{tpu_custom_call.1} parent=75 // loop_footer_branch
                %3214 = sbr.rel target = $region85
              $region90: #{tpu_custom_call.1} parent=75 // loop_exit
                _
            $region76: #{tpu_custom_call.1} parent=67 // pred_fallthru
              _
          $region68: #{tpu_custom_call.1} parent=63 // pred_fallthru
            _
          %3301 = vnop
        $region64: #{tpu_custom_call.1} parent=39 // pred_fallthru
          _
      $region40: #{tpu_custom_call.1} parent=5 // pred_fallthru
        _
      %p3302 = scmp.le.s32.totalorder 2, %s16
      // Predicated region
      $region113: #{tpu_custom_call.1} parent=5 // pred_check
        %p3303 = pneg %p3302
      $region114: #{tpu_custom_call.1} parent=5 // pred_check_branch
        %3305 = sbr.rel (%p3303) target = $region116
      $region115: #{tpu_custom_call.1} parent=5 // pred_region
        %s3306 = ssub.s32 %s16, 2
        // Predicated region
        $region117: #{tpu_custom_call.1} parent=115 // pred_check
          %p3307 = pneg %p155
        $region118: #{tpu_custom_call.1} parent=115 // pred_check_branch
          %3309 = sbr.rel (%p3307) target = $region120
        $region119: #{tpu_custom_call.1} parent=115 // pred_region
          %s3310 = sand.u32 %s140, 1
          %s3311 = sand.u32 %s140, 1
          %s3312 = smul.addr %s3311, 88
          %s3313 = scalar_lea.vmem [#allocation10], %s3312
        $region120: #{tpu_custom_call.1} parent=115 // pred_fallthru
          _
      $region116: #{tpu_custom_call.1} parent=5 // pred_fallthru
        _
    $region6: #{tpu_custom_call.1} parent=1 // loop_footer
      %s20 = sadd.s32 1, %s16
    $region7: #{tpu_custom_call.1} parent=1 // loop_footer_branch
      %15 = sbr.rel target = $region3
    $region8: #{tpu_custom_call.1} parent=1 // loop_exit
      _
    %3314 = vsyncpa [#allocation3], 1
    %s3315 = scalar_lea.sflag [#allocation3], 1
    %3316 = vsyncpa %s3315, 1
    %3317 = vsyncpa [#allocation5], 1
    %3318 = vsyncpa [#allocation8], 1

</llo_original>
